<compile_context>
chip_gen: v7x
topology: tpu7x:2x2x1
jax: 0.10.0
libtpu: 0.0.40
codegen_flags: <defaults>
</compile_context>

<pallas_src>
import jax
import jax.numpy as jnp
from jax.experimental import pallas as pl
from jax.experimental.pallas import tpu as pltpu


def _round_up(n: int, m: int) -> int:
    return ((n + m - 1) // m) * m


# ----------------------------------------------------------------------------
# Fused ProtoNet kernel
#   grid = (K_tiles,)   -- reduction over the flattened-input dim of matmul #1
#   On the last grid step: bias+ReLU, fc matmul, prototype means, Gram-matrix
#   squared distances, log-softmax and label lookup, all on VMEM-resident data.
# ----------------------------------------------------------------------------
def _protonet_fused_kernel(x_ref, w1_ref, b1_ref, w2_ref, b2_ref,
                           classes_ref, sup_t_ref, qry_t_ref,
                           preds_ref, labels_ref,
                           h_acc):
    k = pl.program_id(0)

    @pl.when(k == 0)
    def _():
        h_acc[...] = jnp.zeros_like(h_acc)

    # K-tiled trunk matmul on the MXU: bf16 inputs, f32 accumulation.
    h_acc[...] += jnp.dot(x_ref[...].astype(jnp.bfloat16), w1_ref[...],
                          preferred_element_type=jnp.float32)

    @pl.when(k == pl.num_programs(0) - 1)
    def _():
        # --- feature extractor tail: bias + ReLU + fc Linear(H, P) ---
        h = jnp.maximum(h_acc[...] + b1_ref[...], 0.0)                    # (B, Hp) f32
        feats = jnp.dot(h.astype(jnp.bfloat16), w2_ref[...],
                        preferred_element_type=jnp.float32) + b2_ref[...]  # (B, Pp) f32

        ns = sup_t_ref.shape[1]                 # static: size of the support half
        support = feats[:ns, :]                 # (Ns, Pp)
        query = feats[ns:, :]                   # (Q,  Pp)

        # --- calculate_prototypes: per-class mean via one-hot matmul (MXU) ---
        onehot = (classes_ref[...] == sup_t_ref[...]).astype(jnp.float32)  # (C, Ns)
        counts = jnp.maximum(jnp.sum(onehot, axis=1, keepdims=True), 1.0)  # (C, 1)
        protos = jnp.dot(onehot, support,
                         preferred_element_type=jnp.float32) / counts      # (C, Pp)

        # --- classify_feats: dist = ||q||^2 + ||p||^2 - 2 q.p  (Gram on MXU) ---
        gram = jax.lax.dot_general(query, protos, (((1,), (1,)), ((), ())),
                                   preferred_element_type=jnp.float32)     # (Q, C)
        qn = jnp.sum(query * query, axis=1, keepdims=True)                 # (Q, 1)
        # ||p||^2 directly in row (1, C) orientation via a tiny ones-matmul
        # (avoids an in-kernel transpose of a sub-tile array).
        pn = jax.lax.dot_general(jnp.ones((1, protos.shape[1]), jnp.float32),
                                 protos * protos, (((1,), (1,)), ((), ())),
                                 preferred_element_type=jnp.float32)       # (1, C)
        dist = qn + pn - 2.0 * gram                                        # (Q, C)

        neg = -dist
        m = jnp.max(neg, axis=1, keepdims=True)
        lse = m + jnp.log(jnp.sum(jnp.exp(neg - m), axis=1, keepdims=True))
        preds_ref[...] = neg - lse                                         # log_softmax(-dist)

        # labels = index of each query target within `classes` (classes unique,
        # so the masked index-sum equals argmax; 0 when there is no match).
        lmask = classes_ref[...] == qry_t_ref[...]                         # (C, Q)
        cidx = jax.lax.broadcasted_iota(jnp.int32, lmask.shape, 0)
        labels_ref[...] = jnp.sum(jnp.where(lmask, cidx, 0),
                                  axis=0, keepdims=True)                   # (1, Q)


def _protonet_pallas(x, w1p, b1p, w2p, b2p, classes, sup_t, qry_t, *, tk):
    B, Dp = x.shape
    Hp = w1p.shape[1]
    Pp = w2p.shape[1]
    C = classes.shape[0]
    Ns = sup_t.shape[0]
    Q = qry_t.shape[0]
    kt = Dp // tk

    preds, labels = pl.pallas_call(
        _protonet_fused_kernel,
        out_shape=(jax.ShapeDtypeStruct((Q, C), jnp.float32),
                   jax.ShapeDtypeStruct((1, Q), jnp.int32)),
        grid_spec=pltpu.PrefetchScalarGridSpec(
            num_scalar_prefetch=0,
            grid=(kt,),
            in_specs=[
                pl.BlockSpec((B, tk), lambda k: (0, k)),      # x         (f32)
                pl.BlockSpec((tk, Hp), lambda k: (k, 0)),     # w1        (bf16)
                pl.BlockSpec((1, Hp), lambda k: (0, 0)),      # b1        (f32)
                pl.BlockSpec((Hp, Pp), lambda k: (0, 0)),     # w2        (bf16)
                pl.BlockSpec((1, Pp), lambda k: (0, 0)),      # b2        (f32)
                pl.BlockSpec((C, 1), lambda k: (0, 0)),       # classes   (i32)
                pl.BlockSpec((1, Ns), lambda k: (0, 0)),      # support targets
                pl.BlockSpec((1, Q), lambda k: (0, 0)),       # query targets
            ],
            out_specs=(
                pl.BlockSpec((Q, C), lambda k: (0, 0)),       # preds
                pl.BlockSpec((1, Q), lambda k: (0, 0)),       # labels
            ),
            scratch_shapes=[pltpu.VMEM((B, Hp), jnp.float32)],  # hidden accumulator
        ),
        compiler_params=pltpu.CompilerParams(
            # Single grid axis is the K reduction -> "arbitrary".
            dimension_semantics=("arbitrary",)),
    )(x, w1p, b1p, w2p, b2p,
      classes.reshape(C, 1).astype(jnp.int32),
      sup_t.reshape(1, Ns).astype(jnp.int32),
      qry_t.reshape(1, Q).astype(jnp.int32))
    return preds, labels.reshape(Q)


# ----------------------------------------------------------------------------
# Full ProtoNet.forward
# ----------------------------------------------------------------------------
def protonet_forward(imgs, targets, params, num_classes, *, tk=512):
    w1, b1, w2, b2 = params                    # logical (unpadded, f32) params
    B = imgs.shape[0]
    half = B // 2
    Din, HID = w1.shape
    PROTO = w2.shape[1]

    x = imgs.reshape(B, -1).astype(jnp.float32)

    # Zero-pad to lane-dense / tile-aligned shapes (done here for clarity; in a
    # real model the padded bf16 weights would be prepared once at init).
    Hp = _round_up(HID, 128)
    Pp = _round_up(PROTO, 128)
    Dp = _round_up(Din, tk)
    x = jnp.pad(x, ((0, 0), (0, Dp - Din)))
    w1p = jnp.pad(w1, ((0, Dp - Din), (0, Hp - HID))).astype(jnp.bfloat16)
    b1p = jnp.pad(b1.reshape(1, -1), ((0, 0), (0, Hp - HID))).astype(jnp.float32)
    w2p = jnp.pad(w2, ((0, Hp - HID), (0, Pp - PROTO))).astype(jnp.bfloat16)
    b2p = jnp.pad(b2.reshape(1, -1), ((0, 0), (0, Pp - PROTO))).astype(jnp.float32)

    # split_batch: first half = support, second half = query (torch .chunk(2, 0)).
    # Only the tiny int target vectors are split host-side; the feature tensor
    # is split inside the kernel while resident in VMEM.
    support_targets = targets[:half].astype(jnp.int32)
    query_targets = targets[half:].astype(jnp.int32)

    # torch.unique(support_targets).sort(); fixed-size unique (N-way support).
    classes = jnp.sort(jnp.unique(support_targets, size=num_classes))

    preds, labels = _protonet_pallas(x, w1p, b1p, w2p, b2p,
                                     classes, support_targets, query_targets,
                                     tk=tk)
    return preds, labels


# ----------------------------------------------------------------------------
# Pure-JAX references (for self-check)
# ----------------------------------------------------------------------------
def protonet_reference(imgs, targets, params, num_classes, *, match_kernel_precision):
    w1, b1, w2, b2 = params
    B = imgs.shape[0]
    x = imgs.reshape(B, -1).astype(jnp.float32)
    if match_kernel_precision:
        # Same precision recipe as the kernel: bf16 MXU inputs, f32 accumulate.
        h = jnp.dot(x.astype(jnp.bfloat16), w1.astype(jnp.bfloat16),
                    preferred_element_type=jnp.float32) + b1
        h = jnp.maximum(h, 0.0)
        feats = jnp.dot(h.astype(jnp.bfloat16), w2.astype(jnp.bfloat16),
                        preferred_element_type=jnp.float32) + b2
    else:
        # Full-f32 PyTorch-style math.
        hi = jax.lax.Precision.HIGHEST
        h = jnp.maximum(jnp.dot(x, w1, precision=hi) + b1, 0.0)
        feats = jnp.dot(h, w2, precision=hi) + b2
    half = B // 2
    sf, qf = feats[:half], feats[half:]
    st, qt = targets[:half], targets[half:]
    classes = jnp.sort(jnp.unique(st, size=num_classes))
    onehot = (classes[:, None] == st[None, :]).astype(jnp.float32)
    counts = jnp.maximum(jnp.sum(onehot, axis=1, keepdims=True), 1.0)
    protos = (onehot @ sf) / counts
    dist = jnp.sum((protos[None, :, :] - qf[:, None, :]) ** 2, axis=2)
    preds = jax.nn.log_softmax(-dist, axis=1)
    labels = jnp.argmax(classes[None, :] == qt[:, None], axis=-1).astype(jnp.int32)
    return preds, labels


if __name__ == "__main__":
    key = jax.random.PRNGKey(0)
    k_img, k_w1, k_w2 = jax.random.split(key, 3)

    # Small shapes consistent with the module: NCHW images, proto_dim=100,
    # replaced fc = Linear(1000, proto_dim).
    B, Cimg, Himg, Wimg = 8, 4, 16, 16
    Din = Cimg * Himg * Wimg           # 1024
    HID = 1000                         # in-features of the module's fc layer
    PROTO_DIM = 100
    NUM_CLASSES = 2

    imgs = jax.random.normal(k_img, (B, Cimg, Himg, Wimg), dtype=jnp.float32)
    targets = jnp.array([0, 1, 0, 1, 0, 1, 1, 0], dtype=jnp.int32)

    # Deterministic parameter init (fan-in scaled normal).
    w1 = jax.random.normal(k_w1, (Din, HID), dtype=jnp.float32) / jnp.sqrt(Din)
    b1 = jnp.zeros((HID,), dtype=jnp.float32)
    w2 = jax.random.normal(k_w2, (HID, PROTO_DIM), dtype=jnp.float32) / jnp.sqrt(HID)
    b2 = jnp.zeros((PROTO_DIM,), dtype=jnp.float32)
    params = (w1, b1, w2, b2)

    preds, labels = protonet_forward(imgs, targets, params, NUM_CLASSES)
    preds = jax.block_until_ready(preds)
    labels = jax.block_until_ready(labels)

    # 1) Tight check against a reference using the same bf16-trunk / f32-accum
    #    precision recipe as the kernel.
    ref_preds, ref_labels = protonet_reference(imgs, targets, params, NUM_CLASSES,
                                               match_kernel_precision=True)
    # 2) Loose check against full-f32 (PyTorch-style) math; labels are exact.
    f32_preds, f32_labels = protonet_reference(imgs, targets, params, NUM_CLASSES,
                                               match_kernel_precision=False)

    assert preds.shape == (B // 2, NUM_CLASSES) and labels.shape == (B // 2,)
    assert jnp.allclose(preds, ref_preds, rtol=2e-3, atol=2e-3), "preds mismatch (matched precision)"
    assert jnp.array_equal(labels, ref_labels), "labels mismatch"
    assert jnp.allclose(preds, f32_preds, rtol=5e-2, atol=5e-1), "preds drift vs f32 reference"
    assert jnp.array_equal(labels, f32_labels), "labels mismatch vs f32 reference"

    print("KERNEL_OK")
</pallas_src>

<mosaic_0001>
module attributes {stable_mosaic.version = 11 : i64} {
  func.func @_protonet_fused_kernel(%arg0: i32, %arg1: memref<8x512xf32, #tpu.memory_space<vmem>>, %arg2: memref<512x1024xbf16, #tpu.memory_space<vmem>>, %arg3: memref<1x1024xf32, #tpu.memory_space<vmem>>, %arg4: memref<1024x128xbf16, #tpu.memory_space<vmem>>, %arg5: memref<1x128xf32, #tpu.memory_space<vmem>>, %arg6: memref<2x1xi32, #tpu.memory_space<vmem>>, %arg7: memref<1x4xi32, #tpu.memory_space<vmem>>, %arg8: memref<1x4xi32, #tpu.memory_space<vmem>>, %arg9: memref<4x2xf32, #tpu.memory_space<vmem>>, %arg10: memref<1x4xi32, #tpu.memory_space<vmem>>, %arg11: memref<8x1024xf32, #tpu.memory_space<vmem>>) attributes {dimension_semantics = [#tpu.dimension_semantics<arbitrary>], iteration_bounds = array<i64: 2>, scalar_prefetch = 0 : i64, scratch_operands = 1 : i64, tpu.core_type = #tpu.core_type<tc>, window_params = [{transform_indices = @transform_0, window_bounds = array<i64: 8, 512>}, {transform_indices = @transform_1, window_bounds = array<i64: 512, 1024>}, {pipeline_mode = #tpu.pipeline_mode<synchronous>, transform_indices = @transform_2, window_bounds = array<i64: 1, 1024>}, {pipeline_mode = #tpu.pipeline_mode<synchronous>, transform_indices = @transform_3, window_bounds = array<i64: 1024, 128>}, {pipeline_mode = #tpu.pipeline_mode<synchronous>, transform_indices = @transform_4, window_bounds = array<i64: 1, 128>}, {pipeline_mode = #tpu.pipeline_mode<synchronous>, transform_indices = @transform_5, window_bounds = array<i64: 2, 1>}, {pipeline_mode = #tpu.pipeline_mode<synchronous>, transform_indices = @transform_6, window_bounds = array<i64: 1, 4>}, {pipeline_mode = #tpu.pipeline_mode<synchronous>, transform_indices = @transform_7, window_bounds = array<i64: 1, 4>}, {pipeline_mode = #tpu.pipeline_mode<synchronous>, transform_indices = @transform_8, window_bounds = array<i64: 4, 2>}, {pipeline_mode = #tpu.pipeline_mode<synchronous>, transform_indices = @transform_9, window_bounds = array<i64: 1, 4>}]} {
    %c0_i32 = arith.constant 0 : i32
    %0 = arith.cmpi eq, %arg0, %c0_i32 : i32
    %1 = arith.extui %0 : i1 to i32
    %c0_i32_0 = arith.constant 0 : i32
    %2 = arith.cmpi ne, %1, %c0_i32_0 : i32
    scf.if %2 {
      %cst_9 = arith.constant 0.000000e+00 : f32
      %13 = vector.broadcast %cst_9 : f32 to vector<8x1024xf32>
      %c0_10 = arith.constant 0 : index
      %c0_11 = arith.constant 0 : index
      %14 = vector.load %arg11[%c0_10, %c0_11] : memref<8x1024xf32, #tpu.memory_space<vmem>>, vector<8x1024xf32>
      tpu.vector_store %arg11[%c0_10, %c0_11], %13 {strides = array<i32>} : memref<8x1024xf32, #tpu.memory_space<vmem>>, vector<8x1024xf32>,
    } else {
    }
    %c0 = arith.constant 0 : index
    %c0_1 = arith.constant 0 : index
    %3 = vector.load %arg11[%c0, %c0_1] : memref<8x1024xf32, #tpu.memory_space<vmem>>, vector<8x1024xf32>
    %c0_2 = arith.constant 0 : index
    %c0_3 = arith.constant 0 : index
    %4 = vector.load %arg1[%c0_2, %c0_3] : memref<8x512xf32, #tpu.memory_space<vmem>>, vector<8x512xf32>
    %5 = arith.truncf %4 : vector<8x512xf32> to vector<8x512xbf16>
    %c0_4 = arith.constant 0 : index
    %c0_5 = arith.constant 0 : index
    %6 = vector.load %arg2[%c0_4, %c0_5] : memref<512x1024xbf16, #tpu.memory_space<vmem>>, vector<512x1024xbf16>
    %cst = arith.constant dense<0.000000e+00> : vector<8x1024xf32>
    %7 = tpu.matmul %5, %6, %cst {dimension_numbers = #tpu.dot_dimension_numbers<[1], [0], [0], [1], [0, 0, 1, 1], [], []>} : vector<8x512xbf16>, vector<512x1024xbf16>, vector<8x1024xf32> -> vector<8x1024xf32>
    %8 = arith.addf %3, %7 : vector<8x1024xf32>
    %c0_6 = arith.constant 0 : index
    %c0_7 = arith.constant 0 : index
    %9 = vector.load %arg11[%c0_6, %c0_7] : memref<8x1024xf32, #tpu.memory_space<vmem>>, vector<8x1024xf32>
    tpu.vector_store %arg11[%c0_6, %c0_7], %8 {strides = array<i32>} : memref<8x1024xf32, #tpu.memory_space<vmem>>, vector<8x1024xf32>,
    %c1_i32 = arith.constant 1 : i32
    %10 = arith.cmpi eq, %arg0, %c1_i32 : i32
    %11 = arith.extui %10 : i1 to i32
    %c0_i32_8 = arith.constant 0 : i32
    %12 = arith.cmpi ne, %11, %c0_i32_8 : i32
    scf.if %12 {
      %c0_9 = arith.constant 0 : index
      %c0_10 = arith.constant 0 : index
      %13 = vector.load %arg11[%c0_9, %c0_10] : memref<8x1024xf32, #tpu.memory_space<vmem>>, vector<8x1024xf32>
      %c0_11 = arith.constant 0 : index
      %c0_12 = arith.constant 0 : index
      %14 = vector.load %arg3[%c0_11, %c0_12] : memref<1x1024xf32, #tpu.memory_space<vmem>>, vector<1x1024xf32>
      %15 = vector.broadcast %14 : vector<1x1024xf32> to vector<8x1024xf32>
      %16 = arith.addf %13, %15 : vector<8x1024xf32>
      %cst_13 = arith.constant 0.000000e+00 : f32
      %17 = vector.broadcast %cst_13 : f32 to vector<8x1024xf32>
      %18 = arith.maximumf %16, %17 : vector<8x1024xf32>
      %19 = arith.truncf %18 : vector<8x1024xf32> to vector<8x1024xbf16>
      %c0_14 = arith.constant 0 : index
      %c0_15 = arith.constant 0 : index
      %20 = vector.load %arg4[%c0_14, %c0_15] : memref<1024x128xbf16, #tpu.memory_space<vmem>>, vector<1024x128xbf16>
      %cst_16 = arith.constant dense<0.000000e+00> : vector<8x128xf32>
      %21 = tpu.matmul %19, %20, %cst_16 {dimension_numbers = #tpu.dot_dimension_numbers<[1], [0], [0], [1], [0, 0, 1, 1], [], []>} : vector<8x1024xbf16>, vector<1024x128xbf16>, vector<8x128xf32> -> vector<8x128xf32>
      %c0_17 = arith.constant 0 : index
      %c0_18 = arith.constant 0 : index
      %22 = vector.load %arg5[%c0_17, %c0_18] : memref<1x128xf32, #tpu.memory_space<vmem>>, vector<1x128xf32>
      %23 = vector.broadcast %22 : vector<1x128xf32> to vector<8x128xf32>
      %24 = arith.addf %21, %23 : vector<8x128xf32>
      %25 = vector.extract_strided_slice %24 {offsets = [0, 0], sizes = [4, 128], strides = [1, 1]} : vector<8x128xf32> to vector<4x128xf32>
      %26 = vector.extract_strided_slice %24 {offsets = [4, 0], sizes = [4, 128], strides = [1, 1]} : vector<8x128xf32> to vector<4x128xf32>
      %c0_19 = arith.constant 0 : index
      %c0_20 = arith.constant 0 : index
      %27 = vector.load %arg6[%c0_19, %c0_20] : memref<2x1xi32, #tpu.memory_space<vmem>>, vector<2x1xi32>
      %c0_21 = arith.constant 0 : index
      %c0_22 = arith.constant 0 : index
      %28 = vector.load %arg7[%c0_21, %c0_22] : memref<1x4xi32, #tpu.memory_space<vmem>>, vector<1x4xi32>
      %29 = vector.broadcast %27 : vector<2x1xi32> to vector<2x4xi32>
      %30 = vector.broadcast %28 : vector<1x4xi32> to vector<2x4xi32>
      %31 = arith.cmpi eq, %29, %30 : vector<2x4xi32>
      %32 = arith.extui %31 : vector<2x4xi1> to vector<2x4xi32>
      %33 = arith.sitofp %32 : vector<2x4xi32> to vector<2x4xf32>
      %cst_23 = arith.constant dense<0.000000e+00> : vector<2xf32>
      %34 = vector.multi_reduction <add>, %33, %cst_23 [1] : vector<2x4xf32> to vector<2xf32>
      %35 = vector.shape_cast %34 : vector<2xf32> to vector<2x1xf32>
      %cst_24 = arith.constant 1.000000e+00 : f32
      %36 = vector.broadcast %cst_24 : f32 to vector<2x1xf32>
      %37 = arith.maximumf %35, %36 : vector<2x1xf32>
      %cst_25 = arith.constant dense<0.000000e+00> : vector<2x128xf32>
      %38 = tpu.matmul %33, %25, %cst_25 {dimension_numbers = #tpu.dot_dimension_numbers<[1], [0], [0], [1], [0, 0, 1, 1], [], []>} : vector<2x4xf32>, vector<4x128xf32>, vector<2x128xf32> -> vector<2x128xf32>
      %39 = vector.broadcast %37 : vector<2x1xf32> to vector<2x128xf32>
      %40 = arith.divf %38, %39 : vector<2x128xf32>
      %cst_26 = arith.constant dense<0.000000e+00> : vector<4x2xf32>
      %41 = tpu.matmul %26, %40, %cst_26 {dimension_numbers = #tpu.dot_dimension_numbers<[1], [1], [0], [0], [0, 0, 1, 0], [], []>} : vector<4x128xf32>, vector<2x128xf32>, vector<4x2xf32> -> vector<4x2xf32>
      %42 = arith.mulf %26, %26 : vector<4x128xf32>
      %cst_27 = arith.constant dense<0.000000e+00> : vector<4xf32>
      %43 = vector.multi_reduction <add>, %42, %cst_27 [1] : vector<4x128xf32> to vector<4xf32>
      %44 = vector.shape_cast %43 : vector<4xf32> to vector<4x1xf32>
      %cst_28 = arith.constant 1.000000e+00 : f32
      %45 = vector.broadcast %cst_28 : f32 to vector<1x128xf32>
      %46 = arith.mulf %40, %40 : vector<2x128xf32>
      %cst_29 = arith.constant dense<0.000000e+00> : vector<1x2xf32>
      %47 = tpu.matmul %45, %46, %cst_29 {dimension_numbers = #tpu.dot_dimension_numbers<[1], [1], [0], [0], [0, 0, 1, 0], [], []>} : vector<1x128xf32>, vector<2x128xf32>, vector<1x2xf32> -> vector<1x2xf32>
      %48 = vector.broadcast %44 : vector<4x1xf32> to vector<4x2xf32>
      %49 = vector.broadcast %47 : vector<1x2xf32> to vector<4x2xf32>
      %50 = arith.addf %48, %49 : vector<4x2xf32>
      %cst_30 = arith.constant 2.000000e+00 : f32
      %51 = vector.broadcast %cst_30 : f32 to vector<4x2xf32>
      %52 = arith.mulf %51, %41 : vector<4x2xf32>
      %53 = arith.subf %50, %52 : vector<4x2xf32>
      %cst_31 = arith.constant 0.000000e+00 : f32
      %54 = vector.broadcast %cst_31 : f32 to vector<4x2xf32>
      %55 = arith.subf %54, %53 : vector<4x2xf32>
      %cst_32 = arith.constant dense<0xFF800000> : vector<4xf32>
      %56 = vector.multi_reduction <maximumf>, %55, %cst_32 [1] : vector<4x2xf32> to vector<4xf32>
      %57 = vector.shape_cast %56 : vector<4xf32> to vector<4x1xf32>
      %58 = vector.broadcast %57 : vector<4x1xf32> to vector<4x2xf32>
      %59 = arith.subf %55, %58 : vector<4x2xf32>
      %60 = math.exp %59 : vector<4x2xf32>
      %cst_33 = arith.constant dense<0.000000e+00> : vector<4xf32>
      %61 = vector.multi_reduction <add>, %60, %cst_33 [1] : vector<4x2xf32> to vector<4xf32>
      %62 = vector.shape_cast %61 : vector<4xf32> to vector<4x1xf32>
      %63 = math.log %62 : vector<4x1xf32>
      %64 = arith.addf %57, %63 : vector<4x1xf32>
      %65 = vector.broadcast %64 : vector<4x1xf32> to vector<4x2xf32>
      %66 = arith.subf %55, %65 : vector<4x2xf32>
      %c0_34 = arith.constant 0 : index
      %c0_35 = arith.constant 0 : index
      %67 = vector.load %arg9[%c0_34, %c0_35] : memref<4x2xf32, #tpu.memory_space<vmem>>, vector<4x2xf32>
      tpu.vector_store %arg9[%c0_34, %c0_35], %66 {strides = array<i32>} : memref<4x2xf32, #tpu.memory_space<vmem>>, vector<4x2xf32>,
      %c0_36 = arith.constant 0 : index
      %c0_37 = arith.constant 0 : index
      %68 = vector.load %arg6[%c0_36, %c0_37] : memref<2x1xi32, #tpu.memory_space<vmem>>, vector<2x1xi32>
      %c0_38 = arith.constant 0 : index
      %c0_39 = arith.constant 0 : index
      %69 = vector.load %arg8[%c0_38, %c0_39] : memref<1x4xi32, #tpu.memory_space<vmem>>, vector<1x4xi32>
      %70 = vector.broadcast %68 : vector<2x1xi32> to vector<2x4xi32>
      %71 = vector.broadcast %69 : vector<1x4xi32> to vector<2x4xi32>
      %72 = arith.cmpi eq, %70, %71 : vector<2x4xi32>
      %73 = tpu.iota {dimensions = array<i32: 0>} : vector<2x4xi32>
      %c0_i32_40 = arith.constant 0 : i32
      %74 = vector.broadcast %c0_i32_40 : i32 to vector<2x4xi32>
      %75 = arith.select %72, %73, %74 : vector<2x4xi1>, vector<2x4xi32>
      %cst_41 = arith.constant dense<0> : vector<4xi32>
      %76 = vector.multi_reduction <add>, %75, %cst_41 [0] : vector<2x4xi32> to vector<4xi32>
      %77 = vector.shape_cast %76 : vector<4xi32> to vector<1x4xi32>
      %c0_42 = arith.constant 0 : index
      %c0_43 = arith.constant 0 : index
      %78 = vector.load %arg10[%c0_42, %c0_43] : memref<1x4xi32, #tpu.memory_space<vmem>>, vector<1x4xi32>
      tpu.vector_store %arg10[%c0_42, %c0_43], %77 {strides = array<i32>} : memref<1x4xi32, #tpu.memory_space<vmem>>, vector<1x4xi32>,
    } else {
    }
    return
  }
  func.func @transform_0(%arg0: i32) -> (i32, i32) {
    %c0_i32 = arith.constant 0 : i32
    %c0_i32_0 = arith.constant 0 : i32
    return %c0_i32, %arg0 : i32, i32
  }
  func.func @transform_1(%arg0: i32) -> (i32, i32) {
    %c0_i32 = arith.constant 0 : i32
    %c0_i32_0 = arith.constant 0 : i32
    return %arg0, %c0_i32 : i32, i32
  }
  func.func @transform_2(%arg0: i32) -> (i32, i32) {
    %c0_i32 = arith.constant 0 : i32
    %c0_i32_0 = arith.constant 0 : i32
    %c0_i32_1 = arith.constant 0 : i32
    return %c0_i32, %c0_i32_0 : i32, i32
  }
  func.func @transform_3(%arg0: i32) -> (i32, i32) {
    %c0_i32 = arith.constant 0 : i32
    %c0_i32_0 = arith.constant 0 : i32
    %c0_i32_1 = arith.constant 0 : i32
    return %c0_i32, %c0_i32_0 : i32, i32
  }
  func.func @transform_4(%arg0: i32) -> (i32, i32) {
    %c0_i32 = arith.constant 0 : i32
    %c0_i32_0 = arith.constant 0 : i32
    %c0_i32_1 = arith.constant 0 : i32
    return %c0_i32, %c0_i32_0 : i32, i32
  }
  func.func @transform_5(%arg0: i32) -> (i32, i32) {
    %c0_i32 = arith.constant 0 : i32
    %c0_i32_0 = arith.constant 0 : i32
    %c0_i32_1 = arith.constant 0 : i32
    return %c0_i32, %c0_i32_0 : i32, i32
  }
  func.func @transform_6(%arg0: i32) -> (i32, i32) {
    %c0_i32 = arith.constant 0 : i32
    %c0_i32_0 = arith.constant 0 : i32
    %c0_i32_1 = arith.constant 0 : i32
    return %c0_i32, %c0_i32_0 : i32, i32
  }
  func.func @transform_7(%arg0: i32) -> (i32, i32) {
    %c0_i32 = arith.constant 0 : i32
    %c0_i32_0 = arith.constant 0 : i32
    %c0_i32_1 = arith.constant 0 : i32
    return %c0_i32, %c0_i32_0 : i32, i32
  }
  func.func @transform_8(%arg0: i32) -> (i32, i32) {
    %c0_i32 = arith.constant 0 : i32
    %c0_i32_0 = arith.constant 0 : i32
    %c0_i32_1 = arith.constant 0 : i32
    return %c0_i32, %c0_i32_0 : i32, i32
  }
  func.func @transform_9(%arg0: i32) -> (i32, i32) {
    %c0_i32 = arith.constant 0 : i32
    %c0_i32_0 = arith.constant 0 : i32
    %c0_i32_1 = arith.constant 0 : i32
    return %c0_i32, %c0_i32_0 : i32, i32
  }
}

</mosaic_0001>

<llo_original>
// kernel: tpu_custom_call.1
$region0: #{tpu_custom_call.1}
  #allocation0 [shape = 'u32[]', space=smem, size = 0x4, offset = 0x4, fixed_abs, tag = 'smem constant byte address 0x4 - core index']
  #allocation1 [shape = 'u32[144,128]{1,0:T(1,128)}', space=vmem, size = 0x12000, scoped, tag = 'internal scratch']
  #allocation2 [shape = 'f32[8,1024]{1,0:T(8,128)}', space=vmem, size = 0x8000, scoped, tag = 'scratch operand']
  %s0 = inlined_call_operand.hbm [shape: f32[8,1024], index: 0, kind: input, shape index: {}]
  %s1 = inlined_call_operand.hbm [shape: bf16[1024,1024], index: 1, kind: input, shape index: {}]
  %s2 = inlined_call_operand.hbm [shape: f32[1,1024], index: 2, kind: input, shape index: {}]
  %s3 = inlined_call_operand.hbm [shape: bf16[1024,128], index: 3, kind: input, shape index: {}]
  %s4 = inlined_call_operand.hbm [shape: f32[1,128], index: 4, kind: input, shape index: {}]
  %s5 = inlined_call_operand.vmem [shape: s32[2,1], index: 5, kind: input, shape index: {}]
  %s6 = inlined_call_operand.hbm [shape: s32[1,4], index: 6, kind: input, shape index: {}]
  %s7 = inlined_call_operand.hbm [shape: s32[1,4], index: 7, kind: input, shape index: {}]
  %s8 = inlined_call_operand.vmem [shape: f32[4,2], index: 8, kind: output, shape index: {0}]
  %s9 = inlined_call_operand.hbm [shape: s32[1,4], index: 9, kind: output, shape index: {1}]
  %10 = xla_tuple %s8, %s9
  %s11 = sld [smem:[#allocation0]]
  $region109: #{tpu_custom_call.1} parent=0
    _
  %s13 = ssub.s32 1, %s11
  %s14 = scalar_select 0, %s13, %s11
  $region1: #{tpu_custom_call.1} parent=0
    #allocation3 [shape = 'u8[32768]{0}', space=vmem, size = 0x8000, scoped, tag = 'input window, operand 0']
    #allocation4 [shape = 's32[2]{0}', space=sflag, size = 0x8, scoped, tag = 'scoped memory for tpu_custom_call.1']
    #allocation5 [shape = 's32[2]{0}', space=sflag, size = 0x8, scoped, tag = 'scoped memory for tpu_custom_call.1']
    #allocation6 [shape = 'u8[2097152]{0}', space=vmem, size = 0x200000, scoped, tag = 'input window, operand 1']
    #allocation7 [shape = 's32[2]{0}', space=sflag, size = 0x8, scoped, tag = 'scoped memory for tpu_custom_call.1']
    #allocation8 [shape = 'u8[4096]{0}', space=vmem, size = 0x1000, scoped, tag = 'input window, operand 2, single buffered']
    #allocation9 [shape = 'u8[262144]{0}', space=vmem, size = 0x40000, scoped, tag = 'input window, operand 3, single buffered']
    #allocation10 [shape = 's32[1]{0}', space=sflag, size = 0x4, scoped, tag = 'scoped memory for tpu_custom_call.1']
    #allocation11 [shape = 'u8[512]{0}', space=vmem, size = 0x400, scoped, tag = 'input window, operand 4, single buffered']
    #allocation12 [shape = 'u8[512]{0}', space=vmem, size = 0x400, scoped, tag = 'input window, operand 6, single buffered']
    #allocation13 [shape = 's32[1]{0}', space=sflag, size = 0x4, scoped, tag = 'scoped memory for tpu_custom_call.1']
    #allocation14 [shape = 'u8[512]{0}', space=vmem, size = 0x400, scoped, tag = 'input window, operand 7, single buffered']
    #allocation15 [shape = 'u8[512]{0}', space=vmem, size = 0x400, scoped, tag = 'output window, operand 1, single buffered']
    %15 = vsyncpa [#allocation4], 0
    %s16 = scalar_lea.sflag [#allocation4], 1
    %17 = vsyncpa %s16, 0
    %18 = vsyncpa [#allocation7], 0
    %s19 = scalar_lea.sflag [#allocation7], 1
    %20 = vsyncpa %s19, 0
    %21 = vsyncpa [#allocation10], 0
    %22 = vsyncpa [#allocation13], 0
    %23 = vsyncpa [#allocation5], 0
    loop: start=0, step=1, limit=4
    $region2: #{tpu_custom_call.1} parent=1 // loop_pre_header
      _
    $region3: #{tpu_custom_call.1} parent=1 // loop_header
      %s25 = sphi 0, %s29
      %p26 = scmp.ge.s32.totalorder %s25, 4
      %s35 = sphi 0, %s37
      %s38 = sphi 0, %s35
      %s39 = sphi 0, %s38
      %s55 = sphi 0, %s39
      %s61 = sphi 0, %s63
      %s64 = sphi 0, %s61
      %s65 = sphi 0, %s64
      %s81 = sphi 0, %s65
      %s85 = sphi 0, %s85
      %s87 = sphi 0, %s85
      %s88 = sphi 0, %s87
      %s102 = sphi 0, %s88
      %s106 = sphi 0, %s106
      %s108 = sphi 0, %s106
      %s109 = sphi 0, %s108
      %s123 = sphi 0, %s109
      %s127 = sphi 0, %s127
      %s129 = sphi 0, %s127
      %s130 = sphi 0, %s129
      %s144 = sphi 0, %s130
      %s148 = sphi 0, %s148
      %s150 = sphi 0, %s148
      %s151 = sphi 0, %s150
      %s165 = sphi 0, %s151
      %s169 = sphi 0, %s169
      %s171 = sphi 0, %s169
      %s172 = sphi 0, %s171
      %s186 = sphi 0, %s172
      %s190 = sphi 0, %s190
      %s192 = sphi 0, %s190
      %s193 = sphi 0, %s192
      %s207 = sphi 0, %s193
      %s211 = sphi 0, %s211
      %s213 = sphi 0, %s211
      %s214 = sphi 0, %s213
      %s228 = sphi 0, %s214
      %s232 = sphi 0, %s232
      %s234 = sphi 0, %s232
      %s235 = sphi 0, %s234
      %s249 = sphi 0, %s235
    $region4: #{tpu_custom_call.1} parent=1 // loop_header_branch
      %28 = sbr.rel (%p26) target = $region8
    $region5: #{tpu_custom_call.1} parent=1 // loop_body
      %s30 = ssub.s32 %s25, 1
      %s31 = ssub.s32 %s25, 2
      %s32 = sadd.s32 %s25, 1
      %s33 = ssub.s32 %s25, %s32
      %p34 = scmp.eq.s32.totalorder %s33, 0
      %s36 = sadd.s32 %s35, 1
      %s37 = scalar_select %p34, %s35, %s36
      %p40 = pneg %p34
      %p41 = scmp.eq.s32.totalorder %s25, 1
      %p42 = por %p40, %p41
      %p43 = scmp.ne.s32.totalorder %s35, %s38
      %p44 = scmp.eq.s32.totalorder %s25, 0
      %p45 = por %p43, %p44
      %p46 = scmp.ne.s32.totalorder %s35, %s38
      %p47 = scmp.eq.s32.totalorder %s30, 1
      %p48 = por %p46, %p47
      %p49 = scmp.ne.s32.totalorder %s38, %s39
      %p50 = scmp.eq.s32.totalorder %s30, 0
      %p51 = por %p49, %p50
      %p52 = scmp.ne.s32.totalorder %s38, %s39
      %p53 = scmp.eq.s32.totalorder %s31, 1
      %p54 = por %p52, %p53
      %p56 = scmp.ne.s32.totalorder %s39, %s55
      %p57 = scmp.eq.s32.totalorder %s31, 0
      %p58 = por %p56, %p57
      %s59 = ssub.s32 %s25, %s32
      %p60 = scmp.eq.s32.totalorder %s59, 0
      %s62 = sadd.s32 %s61, 1
      %s63 = scalar_select %p60, %s61, %s62
      %p66 = pneg %p60
      %p67 = scmp.eq.s32.totalorder %s25, 1
      %p68 = por %p66, %p67
      %p69 = scmp.ne.s32.totalorder %s61, %s64
      %p70 = scmp.eq.s32.totalorder %s25, 0
      %p71 = por %p69, %p70
      %p72 = scmp.ne.s32.totalorder %s61, %s64
      %p73 = scmp.eq.s32.totalorder %s30, 1
      %p74 = por %p72, %p73
      %p75 = scmp.ne.s32.totalorder %s64, %s65
      %p76 = scmp.eq.s32.totalorder %s30, 0
      %p77 = por %p75, %p76
      %p78 = scmp.ne.s32.totalorder %s64, %s65
      %p79 = scmp.eq.s32.totalorder %s31, 1
      %p80 = por %p78, %p79
      %p82 = scmp.ne.s32.totalorder %s65, %s81
      %p83 = scmp.eq.s32.totalorder %s31, 0
      %p84 = por %p82, %p83
      %s86 = sadd.s32 %s85, 1
      %p89 = scmp.eq.s32.totalorder %s25, 1
      %p90 = scmp.ne.s32.totalorder %s85, %s87
      %p91 = scmp.eq.s32.totalorder %s25, 0
      %p92 = por %p90, %p91
      %p93 = scmp.ne.s32.totalorder %s85, %s87
      %p94 = scmp.eq.s32.totalorder %s30, 1
      %p95 = por %p93, %p94
      %p96 = scmp.ne.s32.totalorder %s87, %s88
      %p97 = scmp.eq.s32.totalorder %s30, 0
      %p98 = por %p96, %p97
      %p99 = scmp.ne.s32.totalorder %s87, %s88
      %p100 = scmp.eq.s32.totalorder %s31, 1
      %p101 = por %p99, %p100
      %p103 = scmp.ne.s32.totalorder %s88, %s102
      %p104 = scmp.eq.s32.totalorder %s31, 0
      %p105 = por %p103, %p104
      %s107 = sadd.s32 %s106, 1
      %p110 = scmp.eq.s32.totalorder %s25, 1
      %p111 = scmp.ne.s32.totalorder %s106, %s108
      %p112 = scmp.eq.s32.totalorder %s25, 0
      %p113 = por %p111, %p112
      %p114 = scmp.ne.s32.totalorder %s106, %s108
      %p115 = scmp.eq.s32.totalorder %s30, 1
      %p116 = por %p114, %p115
      %p117 = scmp.ne.s32.totalorder %s108, %s109
      %p118 = scmp.eq.s32.totalorder %s30, 0
      %p119 = por %p117, %p118
      %p120 = scmp.ne.s32.totalorder %s108, %s109
      %p121 = scmp.eq.s32.totalorder %s31, 1
      %p122 = por %p120, %p121
      %p124 = scmp.ne.s32.totalorder %s109, %s123
      %p125 = scmp.eq.s32.totalorder %s31, 0
      %p126 = por %p124, %p125
      %s128 = sadd.s32 %s127, 1
      %p131 = scmp.eq.s32.totalorder %s25, 1
      %p132 = scmp.ne.s32.totalorder %s127, %s129
      %p133 = scmp.eq.s32.totalorder %s25, 0
      %p134 = por %p132, %p133
      %p135 = scmp.ne.s32.totalorder %s127, %s129
      %p136 = scmp.eq.s32.totalorder %s30, 1
      %p137 = por %p135, %p136
      %p138 = scmp.ne.s32.totalorder %s129, %s130
      %p139 = scmp.eq.s32.totalorder %s30, 0
      %p140 = por %p138, %p139
      %p141 = scmp.ne.s32.totalorder %s129, %s130
      %p142 = scmp.eq.s32.totalorder %s31, 1
      %p143 = por %p141, %p142
      %p145 = scmp.ne.s32.totalorder %s130, %s144
      %p146 = scmp.eq.s32.totalorder %s31, 0
      %p147 = por %p145, %p146
      %s149 = sadd.s32 %s148, 1
      %p152 = scmp.eq.s32.totalorder %s25, 1
      %p153 = scmp.ne.s32.totalorder %s148, %s150
      %p154 = scmp.eq.s32.totalorder %s25, 0
      %p155 = por %p153, %p154
      %p156 = scmp.ne.s32.totalorder %s148, %s150
      %p157 = scmp.eq.s32.totalorder %s30, 1
      %p158 = por %p156, %p157
      %p159 = scmp.ne.s32.totalorder %s150, %s151
      %p160 = scmp.eq.s32.totalorder %s30, 0
      %p161 = por %p159, %p160
      %p162 = scmp.ne.s32.totalorder %s150, %s151
      %p163 = scmp.eq.s32.totalorder %s31, 1
      %p164 = por %p162, %p163
      %p166 = scmp.ne.s32.totalorder %s151, %s165
      %p167 = scmp.eq.s32.totalorder %s31, 0
      %p168 = por %p166, %p167
      %s170 = sadd.s32 %s169, 1
      %p173 = scmp.eq.s32.totalorder %s25, 1
      %p174 = scmp.ne.s32.totalorder %s169, %s171
      %p175 = scmp.eq.s32.totalorder %s25, 0
      %p176 = por %p174, %p175
      %p177 = scmp.ne.s32.totalorder %s169, %s171
      %p178 = scmp.eq.s32.totalorder %s30, 1
      %p179 = por %p177, %p178
      %p180 = scmp.ne.s32.totalorder %s171, %s172
      %p181 = scmp.eq.s32.totalorder %s30, 0
      %p182 = por %p180, %p181
      %p183 = scmp.ne.s32.totalorder %s171, %s172
      %p184 = scmp.eq.s32.totalorder %s31, 1
      %p185 = por %p183, %p184
      %p187 = scmp.ne.s32.totalorder %s172, %s186
      %p188 = scmp.eq.s32.totalorder %s31, 0
      %p189 = por %p187, %p188
      %s191 = sadd.s32 %s190, 1
      %p194 = scmp.eq.s32.totalorder %s25, 1
      %p195 = scmp.ne.s32.totalorder %s190, %s192
      %p196 = scmp.eq.s32.totalorder %s25, 0
      %p197 = por %p195, %p196
      %p198 = scmp.ne.s32.totalorder %s190, %s192
      %p199 = scmp.eq.s32.totalorder %s30, 1
      %p200 = por %p198, %p199
      %p201 = scmp.ne.s32.totalorder %s192, %s193
      %p202 = scmp.eq.s32.totalorder %s30, 0
      %p203 = por %p201, %p202
      %p204 = scmp.ne.s32.totalorder %s192, %s193
      %p205 = scmp.eq.s32.totalorder %s31, 1
      %p206 = por %p204, %p205
      %p208 = scmp.ne.s32.totalorder %s193, %s207
      %p209 = scmp.eq.s32.totalorder %s31, 0
      %p210 = por %p208, %p209
      %s212 = sadd.s32 %s211, 1
      %p215 = scmp.eq.s32.totalorder %s25, 1
      %p216 = scmp.ne.s32.totalorder %s211, %s213
      %p217 = scmp.eq.s32.totalorder %s25, 0
      %p218 = por %p216, %p217
      %p219 = scmp.ne.s32.totalorder %s211, %s213
      %p220 = scmp.eq.s32.totalorder %s30, 1
      %p221 = por %p219, %p220
      %p222 = scmp.ne.s32.totalorder %s213, %s214
      %p223 = scmp.eq.s32.totalorder %s30, 0
      %p224 = por %p222, %p223
      %p225 = scmp.ne.s32.totalorder %s213, %s214
      %p226 = scmp.eq.s32.totalorder %s31, 1
      %p227 = por %p225, %p226
      %p229 = scmp.ne.s32.totalorder %s214, %s228
      %p230 = scmp.eq.s32.totalorder %s31, 0
      %p231 = por %p229, %p230
      %s233 = sadd.s32 %s232, 1
      %p236 = scmp.eq.s32.totalorder %s25, 1
      %p237 = scmp.ne.s32.totalorder %s232, %s234
      %p238 = scmp.eq.s32.totalorder %s25, 0
      %p239 = por %p237, %p238
      %p240 = scmp.ne.s32.totalorder %s232, %s234
      %p241 = scmp.eq.s32.totalorder %s30, 1
      %p242 = por %p240, %p241
      %p243 = scmp.ne.s32.totalorder %s234, %s235
      %p244 = scmp.eq.s32.totalorder %s30, 0
      %p245 = por %p243, %p244
      %p246 = scmp.ne.s32.totalorder %s234, %s235
      %p247 = scmp.eq.s32.totalorder %s31, 1
      %p248 = por %p246, %p247
      %p250 = scmp.ne.s32.totalorder %s235, %s249
      %p251 = scmp.eq.s32.totalorder %s31, 0
      %p252 = por %p250, %p251
      %p253 = scmp.le.s32.totalorder 1, %s25
      %p254 = scmp.lt.s32.totalorder %s25, 3
      %p255 = pnand %p253, %p254
      %p256 = pneg %p255
      // Predicated region
      $region9: #{tpu_custom_call.1} parent=5 // pred_check
        _
      $region10: #{tpu_custom_call.1} parent=5 // pred_check_branch
        %258 = sbr.rel (%p255) target = $region12
      $region11: #{tpu_custom_call.1} parent=5 // pred_region
        %s259 = ssub.s32 %s25, 1
        // Predicated region
        $region13: #{tpu_custom_call.1} parent=11 // pred_check
          %p260 = pneg %p98
        $region14: #{tpu_custom_call.1} parent=11 // pred_check_branch
          %262 = sbr.rel (%p260) target = $region16
        $region15: #{tpu_custom_call.1} parent=11 // pred_region
          %s264 = ssub.s32 128, 128
          %265 = vsyncadd [#allocation7], %s264
          %s267 = sshll.u32 [#allocation8], 4
          %s268 = int_to_ptr.vmem [resolvable:$true] %s267
          %270 = dma.hbm_to_vmem [thread:$0]  %s2, 128, %s268, [#allocation7]
        $region16: #{tpu_custom_call.1} parent=11 // pred_fallthru
          _
        // Predicated region
        $region17: #{tpu_custom_call.1} parent=11 // pred_check
          %p271 = pneg %p119
        $region18: #{tpu_custom_call.1} parent=11 // pred_check_branch
          %273 = sbr.rel (%p271) target = $region20
        $region19: #{tpu_custom_call.1} parent=11 // pred_region
          %s275 = ssub.s32 8192, 8192
          %276 = vsyncadd [#allocation10], %s275
          %s277 = sshll.u32 [#allocation9], 4
          %s278 = int_to_ptr.vmem [resolvable:$true] %s277
          %283 = dma.hbm_to_vmem [thread:$0]  %s3, 8192, %s278, [#allocation10], 64, 64, 4
        $region20: #{tpu_custom_call.1} parent=11 // pred_fallthru
          _
        // Predicated region
        $region21: #{tpu_custom_call.1} parent=11 // pred_check
          %p284 = pneg %p140
        $region22: #{tpu_custom_call.1} parent=11 // pred_check_branch
          %286 = sbr.rel (%p284) target = $region24
        $region23: #{tpu_custom_call.1} parent=11 // pred_region
          %s288 = ssub.s32 16, 16
          %289 = vsyncadd [#allocation10], %s288
          %s291 = sshll.u32 [#allocation11], 4
          %s292 = int_to_ptr.vmem [resolvable:$true] %s291
          %294 = dma.hbm_to_vmem [thread:$0]  %s4, 16, %s292, [#allocation10]
        $region24: #{tpu_custom_call.1} parent=11 // pred_fallthru
          _
        // Predicated region
        $region25: #{tpu_custom_call.1} parent=11 // pred_check
          %p295 = pneg %p161
        $region26: #{tpu_custom_call.1} parent=11 // pred_check_branch
          %297 = sbr.rel (%p295) target = $region28
        $region27: #{tpu_custom_call.1} parent=11 // pred_region
          _
        $region28: #{tpu_custom_call.1} parent=11 // pred_fallthru
          _
        // Predicated region
        $region29: #{tpu_custom_call.1} parent=11 // pred_check
          %p298 = pneg %p182
        $region30: #{tpu_custom_call.1} parent=11 // pred_check_branch
          %300 = sbr.rel (%p298) target = $region32
        $region31: #{tpu_custom_call.1} parent=11 // pred_region
          %s302 = ssub.s32 16, 16
          %303 = vsyncadd [#allocation13], %s302
          %s305 = sshll.u32 [#allocation12], 4
          %s306 = int_to_ptr.vmem [resolvable:$true] %s305
          %308 = dma.hbm_to_vmem [thread:$0]  %s6, 16, %s306, [#allocation13]
        $region32: #{tpu_custom_call.1} parent=11 // pred_fallthru
          _
        // Predicated region
        $region33: #{tpu_custom_call.1} parent=11 // pred_check
          %p309 = pneg %p203
        $region34: #{tpu_custom_call.1} parent=11 // pred_check_branch
          %311 = sbr.rel (%p309) target = $region36
        $region35: #{tpu_custom_call.1} parent=11 // pred_region
          %s313 = ssub.s32 16, 16
          %314 = vsyncadd [#allocation13], %s313
          %s316 = sshll.u32 [#allocation14], 4
          %s317 = int_to_ptr.vmem [resolvable:$true] %s316
          %319 = dma.hbm_to_vmem [thread:$0]  %s7, 16, %s317, [#allocation13]
        $region36: #{tpu_custom_call.1} parent=11 // pred_fallthru
          _
      $region12: #{tpu_custom_call.1} parent=5 // pred_fallthru
        _
      %p320 = scmp.lt.s32.totalorder %s25, 2
      // Predicated region
      $region37: #{tpu_custom_call.1} parent=5 // pred_check
        %p321 = pneg %p320
      $region38: #{tpu_custom_call.1} parent=5 // pred_check_branch
        %323 = sbr.rel (%p321) target = $region40
      $region39: #{tpu_custom_call.1} parent=5 // pred_region
        // Predicated region
        $region41: #{tpu_custom_call.1} parent=39 // pred_check
          %p324 = pneg %p45
        $region42: #{tpu_custom_call.1} parent=39 // pred_check_branch
          %326 = sbr.rel (%p324) target = $region44
        $region43: #{tpu_custom_call.1} parent=39 // pred_region
          %s327 = sand.u32 %s35, 1
          %s328 = scalar_lea.sflag [#allocation4], %s327
          %s329 = sand.u32 %s35, 1
          %s330 = smul.addr %s329, 32
          %s331 = scalar_lea.vmem [#allocation3], %s330
          %s332 = smul.u32 4, %s25
          %s334 = ssub.s32 512, 512
          %335 = vsyncadd %s328, %s334
          %s336 = smul.addr %s332, 128
          %s337 = scalar_lea.hbm %s0, %s336
          %s339 = sshll.u32 %s331, 4
          %s340 = int_to_ptr.vmem [resolvable:$true] %s339
          %342 = dma.hbm_to_vmem [thread:$0]  %s337, 512, %s340, %s328
        $region44: #{tpu_custom_call.1} parent=39 // pred_fallthru
          _
        // Predicated region
        $region45: #{tpu_custom_call.1} parent=39 // pred_check
          %p343 = pneg %p71
        $region46: #{tpu_custom_call.1} parent=39 // pred_check_branch
          %345 = sbr.rel (%p343) target = $region48
        $region47: #{tpu_custom_call.1} parent=39 // pred_region
          %s346 = sand.u32 %s25, 1
          %s347 = scalar_lea.sflag [#allocation7], %s346
          %s348 = sand.u32 %s61, 1
          %s349 = smul.addr %s348, 2048
          %s350 = scalar_lea.vmem [#allocation6], %s349
          %s351 = smul.u32 64, %s25
          %s353 = ssub.s32 32768, 32768
          %354 = vsyncadd %s347, %s353
          %s355 = smul.addr %s351, 8
          %s356 = smul.addr %s355, 64
          %s357 = scalar_lea.hbm %s1, %s356
          %s358 = sshll.u32 %s350, 4
          %s359 = int_to_ptr.vmem [resolvable:$true] %s358
          %364 = dma.hbm_to_vmem [thread:$0]  %s357, 32768, %s359, %s347, 512, 512, 32
        $region48: #{tpu_custom_call.1} parent=39 // pred_fallthru
          _
      $region40: #{tpu_custom_call.1} parent=5 // pred_fallthru
        _
      %p365 = scmp.le.s32.totalorder 1, %s25
      %p366 = scmp.lt.s32.totalorder %s25, 3
      %p367 = pnand %p365, %p366
      %p368 = pneg %p367
      // Predicated region
      $region49: #{tpu_custom_call.1} parent=5 // pred_check
        _
      $region50: #{tpu_custom_call.1} parent=5 // pred_check_branch
        %370 = sbr.rel (%p367) target = $region52
      $region51: #{tpu_custom_call.1} parent=5 // pred_region
        %s371 = ssub.s32 %s25, 1
        %s372 = sand.u32 %s38, 1
        %s373 = scalar_lea.sflag [#allocation4], %s372
        %s374 = sand.u32 %s38, 1
        %s375 = smul.addr %s374, 32
        %s376 = scalar_lea.vmem [#allocation3], %s375
        // Predicated region
        $region53: #{tpu_custom_call.1} parent=51 // pred_check
          %p377 = pneg %p51
        $region54: #{tpu_custom_call.1} parent=51 // pred_check_branch
          %379 = sbr.rel (%p377) target = $region56
        $region55: #{tpu_custom_call.1} parent=51 // pred_region
          %380 = dma.done %s373, 512
        $region56: #{tpu_custom_call.1} parent=51 // pred_fallthru
          _
        %s381 = sand.u32 %s30, 1
        %s382 = scalar_lea.sflag [#allocation7], %s381
        %s383 = sand.u32 %s64, 1
        %s384 = smul.addr %s383, 2048
        %s385 = scalar_lea.vmem [#allocation6], %s384
        // Predicated region
        $region57: #{tpu_custom_call.1} parent=51 // pred_check
          %p386 = pneg %p77
        $region58: #{tpu_custom_call.1} parent=51 // pred_check_branch
          %388 = sbr.rel (%p386) target = $region60
        $region59: #{tpu_custom_call.1} parent=51 // pred_region
          %389 = dma.done %s382, 32768
        $region60: #{tpu_custom_call.1} parent=51 // pred_fallthru
          _
        // Predicated region
        $region61: #{tpu_custom_call.1} parent=51 // pred_check
          %p390 = pneg %p98
        $region62: #{tpu_custom_call.1} parent=51 // pred_check_branch
          %392 = sbr.rel (%p390) target = $region64
        $region63: #{tpu_custom_call.1} parent=51 // pred_region
          %393 = dma.done [#allocation7], 128
        $region64: #{tpu_custom_call.1} parent=51 // pred_fallthru
          _
        // Predicated region
        $region65: #{tpu_custom_call.1} parent=51 // pred_check
          %p394 = pneg %p119
        $region66: #{tpu_custom_call.1} parent=51 // pred_check_branch
          %396 = sbr.rel (%p394) target = $region68
        $region67: #{tpu_custom_call.1} parent=51 // pred_region
          %397 = dma.done [#allocation10], 8192
        $region68: #{tpu_custom_call.1} parent=51 // pred_fallthru
          _
        // Predicated region
        $region69: #{tpu_custom_call.1} parent=51 // pred_check
          %p398 = pneg %p140
        $region70: #{tpu_custom_call.1} parent=51 // pred_check_branch
          %400 = sbr.rel (%p398) target = $region72
        $region71: #{tpu_custom_call.1} parent=51 // pred_region
          %401 = dma.done [#allocation10], 16
        $region72: #{tpu_custom_call.1} parent=51 // pred_fallthru
          _
        // Predicated region
        $region73: #{tpu_custom_call.1} parent=51 // pred_check
          %p402 = pneg %p182
        $region74: #{tpu_custom_call.1} parent=51 // pred_check_branch
          %404 = sbr.rel (%p402) target = $region76
        $region75: #{tpu_custom_call.1} parent=51 // pred_region
          %405 = dma.done [#allocation13], 16
        $region76: #{tpu_custom_call.1} parent=51 // pred_fallthru
          _
        // Predicated region
        $region77: #{tpu_custom_call.1} parent=51 // pred_check
          %p406 = pneg %p203
        $region78: #{tpu_custom_call.1} parent=51 // pred_check_branch
          %408 = sbr.rel (%p406) target = $region80
        $region79: #{tpu_custom_call.1} parent=51 // pred_region
          %409 = dma.done [#allocation13], 16
        $region80: #{tpu_custom_call.1} parent=51 // pred_fallthru
          _
        %s410 = sand.u32 %s38, 1
        %s411 = scalar_lea.sflag [#allocation4], %s410
        %s412 = sand.u32 %s38, 1
        %s413 = smul.addr %s412, 32
        %s414 = scalar_lea.vmem [#allocation3], %s413
        %p415 = pneg %p51
        %p416 = pneg %p48
        %s417 = sand.u32 %s30, 1
        %s418 = scalar_lea.sflag [#allocation7], %s417
        %s419 = sand.u32 %s64, 1
        %s420 = smul.addr %s419, 2048
        %s421 = scalar_lea.vmem [#allocation6], %s420
        %p422 = pneg %p77
        %p423 = pneg %p74
        %p424 = pneg %p98
        %p425 = pneg %p95
        %p426 = pneg %p119
        %p427 = pneg %p116
        %p428 = pneg %p140
        %p429 = pneg %p137
        %p430 = pneg %p161
        %p431 = pneg %p158
        %p432 = pneg %p182
        %p433 = pneg %p179
        %p434 = pneg %p203
        %p435 = pneg %p200
        %p436 = pneg %p224
        %p437 = pneg %p221
        %p438 = pneg %p245
        %p439 = pneg %p242
        %s440 = smul.u32 4, %s30
        %s441 = smul.u32 64, %s30
        %p443 = scmp.eq.s32.totalorder %s30, 0
        // Predicated region
        $region81: #{tpu_custom_call.1} parent=51 // pred_check
          %p444 = pneg %p443
        $region82: #{tpu_custom_call.1} parent=51 // pred_check_branch
          %446 = sbr.rel (%p444) target = $region84
        $region83: #{tpu_custom_call.1} parent=51 // pred_region
          %447 = vst [vmem:[#allocation2] sm:$0xff] 0.0
          %448 = vst [vmem:[#allocation2 + $0x8] sm:$0xff] 0.0
          %449 = vst [vmem:[#allocation2 + $0x10] sm:$0xff] 0.0
          %450 = vst [vmem:[#allocation2 + $0x18] sm:$0xff] 0.0
          %451 = vst [vmem:[#allocation2 + $0x20] sm:$0xff] 0.0
          %452 = vst [vmem:[#allocation2 + $0x28] sm:$0xff] 0.0
          %453 = vst [vmem:[#allocation2 + $0x30] sm:$0xff] 0.0
          %454 = vst [vmem:[#allocation2 + $0x38] sm:$0xff] 0.0
        $region84: #{tpu_custom_call.1} parent=51 // pred_fallthru
          _
        %v455 = vld [vmem:[#allocation2] sm:$0xff]
        %v456 = vld [vmem:[#allocation2 + $0x8] sm:$0xff]
        %v457 = vld [vmem:[#allocation2 + $0x10] sm:$0xff]
        %v458 = vld [vmem:[#allocation2 + $0x18] sm:$0xff]
        %v459 = vld [vmem:[#allocation2 + $0x20] sm:$0xff]
        %v460 = vld [vmem:[#allocation2 + $0x28] sm:$0xff]
        %v461 = vld [vmem:[#allocation2 + $0x30] sm:$0xff]
        %v462 = vld [vmem:[#allocation2 + $0x38] sm:$0xff]
        %v463 = vld [vmem:[%s376] sm:$0xff]
        %v464 = vld [vmem:[%s376 + $0x8] sm:$0xff]
        %v465 = vld [vmem:[%s376 + $0x10] sm:$0xff]
        %v466 = vld [vmem:[%s376 + $0x18] sm:$0xff]
        %v467 = vpack.c.bf16 %v463, %v463
        %v468 = vpack.c.bf16 %v464, %v464
        %v469 = vpack.c.bf16 %v465, %v465
        %v470 = vpack.c.bf16 %v466, %v466
        %v471 = vld [vmem:[%s385] sm:$0xff]
        %v472 = vld [vmem:[%s385 + $0x8] sm:$0xff]
        %v473 = vld [vmem:[%s385 + $0x10] sm:$0xff]
        %v474 = vld [vmem:[%s385 + $0x18] sm:$0xff]
        %v475 = vld [vmem:[%s385 + $0x20] sm:$0xff]
        %v476 = vld [vmem:[%s385 + $0x28] sm:$0xff]
        %v477 = vld [vmem:[%s385 + $0x30] sm:$0xff]
        %v478 = vld [vmem:[%s385 + $0x38] sm:$0xff]
        %v479 = vld [vmem:[%s385 + $0x40] sm:$0xff]
        %v480 = vld [vmem:[%s385 + $0x48] sm:$0xff]
        %v481 = vld [vmem:[%s385 + $0x50] sm:$0xff]
        %v482 = vld [vmem:[%s385 + $0x58] sm:$0xff]
        %v483 = vld [vmem:[%s385 + $0x60] sm:$0xff]
        %v484 = vld [vmem:[%s385 + $0x68] sm:$0xff]
        %v485 = vld [vmem:[%s385 + $0x70] sm:$0xff]
        %v486 = vld [vmem:[%s385 + $0x78] sm:$0xff]
        %v487 = vld [vmem:[%s385 + $0x80] sm:$0xff]
        %v488 = vld [vmem:[%s385 + $0x88] sm:$0xff]
        %v489 = vld [vmem:[%s385 + $0x90] sm:$0xff]
        %v490 = vld [vmem:[%s385 + $0x98] sm:$0xff]
        %v491 = vld [vmem:[%s385 + $0xa0] sm:$0xff]
        %v492 = vld [vmem:[%s385 + $0xa8] sm:$0xff]
        %v493 = vld [vmem:[%s385 + $0xb0] sm:$0xff]
        %v494 = vld [vmem:[%s385 + $0xb8] sm:$0xff]
        %v495 = vld [vmem:[%s385 + $0xc0] sm:$0xff]
        %v496 = vld [vmem:[%s385 + $0xc8] sm:$0xff]
        %v497 = vld [vmem:[%s385 + $0xd0] sm:$0xff]
        %v498 = vld [vmem:[%s385 + $0xd8] sm:$0xff]
        %v499 = vld [vmem:[%s385 + $0xe0] sm:$0xff]
        %v500 = vld [vmem:[%s385 + $0xe8] sm:$0xff]
        %v501 = vld [vmem:[%s385 + $0xf0] sm:$0xff]
        %v502 = vld [vmem:[%s385 + $0xf8] sm:$0xff]
        %v503 = vld [vmem:[%s385 + $0x100] sm:$0xff]
        %v504 = vld [vmem:[%s385 + $0x108] sm:$0xff]
        %v505 = vld [vmem:[%s385 + $0x110] sm:$0xff]
        %v506 = vld [vmem:[%s385 + $0x118] sm:$0xff]
        %v507 = vld [vmem:[%s385 + $0x120] sm:$0xff]
        %v508 = vld [vmem:[%s385 + $0x128] sm:$0xff]
        %v509 = vld [vmem:[%s385 + $0x130] sm:$0xff]
        %v510 = vld [vmem:[%s385 + $0x138] sm:$0xff]
        %v511 = vld [vmem:[%s385 + $0x140] sm:$0xff]
        %v512 = vld [vmem:[%s385 + $0x148] sm:$0xff]
        %v513 = vld [vmem:[%s385 + $0x150] sm:$0xff]
        %v514 = vld [vmem:[%s385 + $0x158] sm:$0xff]
        %v515 = vld [vmem:[%s385 + $0x160] sm:$0xff]
        %v516 = vld [vmem:[%s385 + $0x168] sm:$0xff]
        %v517 = vld [vmem:[%s385 + $0x170] sm:$0xff]
        %v518 = vld [vmem:[%s385 + $0x178] sm:$0xff]
        %v519 = vld [vmem:[%s385 + $0x180] sm:$0xff]
        %v520 = vld [vmem:[%s385 + $0x188] sm:$0xff]
        %v521 = vld [vmem:[%s385 + $0x190] sm:$0xff]
        %v522 = vld [vmem:[%s385 + $0x198] sm:$0xff]
        %v523 = vld [vmem:[%s385 + $0x1a0] sm:$0xff]
        %v524 = vld [vmem:[%s385 + $0x1a8] sm:$0xff]
        %v525 = vld [vmem:[%s385 + $0x1b0] sm:$0xff]
        %v526 = vld [vmem:[%s385 + $0x1b8] sm:$0xff]
        %v527 = vld [vmem:[%s385 + $0x1c0] sm:$0xff]
        %v528 = vld [vmem:[%s385 + $0x1c8] sm:$0xff]
        %v529 = vld [vmem:[%s385 + $0x1d0] sm:$0xff]
        %v530 = vld [vmem:[%s385 + $0x1d8] sm:$0xff]
        %v531 = vld [vmem:[%s385 + $0x1e0] sm:$0xff]
        %v532 = vld [vmem:[%s385 + $0x1e8] sm:$0xff]
        %v533 = vld [vmem:[%s385 + $0x1f0] sm:$0xff]
        %v534 = vld [vmem:[%s385 + $0x1f8] sm:$0xff]
        %v535 = vld [vmem:[%s385 + $0x200] sm:$0xff]
        %v536 = vld [vmem:[%s385 + $0x208] sm:$0xff]
        %v537 = vld [vmem:[%s385 + $0x210] sm:$0xff]
        %v538 = vld [vmem:[%s385 + $0x218] sm:$0xff]
        %v539 = vld [vmem:[%s385 + $0x220] sm:$0xff]
        %v540 = vld [vmem:[%s385 + $0x228] sm:$0xff]
        %v541 = vld [vmem:[%s385 + $0x230] sm:$0xff]
        %v542 = vld [vmem:[%s385 + $0x238] sm:$0xff]
        %v543 = vld [vmem:[%s385 + $0x240] sm:$0xff]
        %v544 = vld [vmem:[%s385 + $0x248] sm:$0xff]
        %v545 = vld [vmem:[%s385 + $0x250] sm:$0xff]
        %v546 = vld [vmem:[%s385 + $0x258] sm:$0xff]
        %v547 = vld [vmem:[%s385 + $0x260] sm:$0xff]
        %v548 = vld [vmem:[%s385 + $0x268] sm:$0xff]
        %v549 = vld [vmem:[%s385 + $0x270] sm:$0xff]
        %v550 = vld [vmem:[%s385 + $0x278] sm:$0xff]
        %v551 = vld [vmem:[%s385 + $0x280] sm:$0xff]
        %v552 = vld [vmem:[%s385 + $0x288] sm:$0xff]
        %v553 = vld [vmem:[%s385 + $0x290] sm:$0xff]
        %v554 = vld [vmem:[%s385 + $0x298] sm:$0xff]
        %v555 = vld [vmem:[%s385 + $0x2a0] sm:$0xff]
        %v556 = vld [vmem:[%s385 + $0x2a8] sm:$0xff]
        %v557 = vld [vmem:[%s385 + $0x2b0] sm:$0xff]
        %v558 = vld [vmem:[%s385 + $0x2b8] sm:$0xff]
        %v559 = vld [vmem:[%s385 + $0x2c0] sm:$0xff]
        %v560 = vld [vmem:[%s385 + $0x2c8] sm:$0xff]
        %v561 = vld [vmem:[%s385 + $0x2d0] sm:$0xff]
        %v562 = vld [vmem:[%s385 + $0x2d8] sm:$0xff]
        %v563 = vld [vmem:[%s385 + $0x2e0] sm:$0xff]
        %v564 = vld [vmem:[%s385 + $0x2e8] sm:$0xff]
        %v565 = vld [vmem:[%s385 + $0x2f0] sm:$0xff]
        %v566 = vld [vmem:[%s385 + $0x2f8] sm:$0xff]
        %v567 = vld [vmem:[%s385 + $0x300] sm:$0xff]
        %v568 = vld [vmem:[%s385 + $0x308] sm:$0xff]
        %v569 = vld [vmem:[%s385 + $0x310] sm:$0xff]
        %v570 = vld [vmem:[%s385 + $0x318] sm:$0xff]
        %v571 = vld [vmem:[%s385 + $0x320] sm:$0xff]
        %v572 = vld [vmem:[%s385 + $0x328] sm:$0xff]
        %v573 = vld [vmem:[%s385 + $0x330] sm:$0xff]
        %v574 = vld [vmem:[%s385 + $0x338] sm:$0xff]
        %v575 = vld [vmem:[%s385 + $0x340] sm:$0xff]
        %v576 = vld [vmem:[%s385 + $0x348] sm:$0xff]
        %v577 = vld [vmem:[%s385 + $0x350] sm:$0xff]
        %v578 = vld [vmem:[%s385 + $0x358] sm:$0xff]
        %v579 = vld [vmem:[%s385 + $0x360] sm:$0xff]
        %v580 = vld [vmem:[%s385 + $0x368] sm:$0xff]
        %v581 = vld [vmem:[%s385 + $0x370] sm:$0xff]
        %v582 = vld [vmem:[%s385 + $0x378] sm:$0xff]
        %v583 = vld [vmem:[%s385 + $0x380] sm:$0xff]
        %v584 = vld [vmem:[%s385 + $0x388] sm:$0xff]
        %v585 = vld [vmem:[%s385 + $0x390] sm:$0xff]
        %v586 = vld [vmem:[%s385 + $0x398] sm:$0xff]
        %v587 = vld [vmem:[%s385 + $0x3a0] sm:$0xff]
        %v588 = vld [vmem:[%s385 + $0x3a8] sm:$0xff]
        %v589 = vld [vmem:[%s385 + $0x3b0] sm:$0xff]
        %v590 = vld [vmem:[%s385 + $0x3b8] sm:$0xff]
        %v591 = vld [vmem:[%s385 + $0x3c0] sm:$0xff]
        %v592 = vld [vmem:[%s385 + $0x3c8] sm:$0xff]
        %v593 = vld [vmem:[%s385 + $0x3d0] sm:$0xff]
        %v594 = vld [vmem:[%s385 + $0x3d8] sm:$0xff]
        %v595 = vld [vmem:[%s385 + $0x3e0] sm:$0xff]
        %v596 = vld [vmem:[%s385 + $0x3e8] sm:$0xff]
        %v597 = vld [vmem:[%s385 + $0x3f0] sm:$0xff]
        %v598 = vld [vmem:[%s385 + $0x3f8] sm:$0xff]
        %v599 = vld [vmem:[%s385 + $0x400] sm:$0xff]
        %v600 = vld [vmem:[%s385 + $0x408] sm:$0xff]
        %v601 = vld [vmem:[%s385 + $0x410] sm:$0xff]
        %v602 = vld [vmem:[%s385 + $0x418] sm:$0xff]
        %v603 = vld [vmem:[%s385 + $0x420] sm:$0xff]
        %v604 = vld [vmem:[%s385 + $0x428] sm:$0xff]
        %v605 = vld [vmem:[%s385 + $0x430] sm:$0xff]
        %v606 = vld [vmem:[%s385 + $0x438] sm:$0xff]
        %v607 = vld [vmem:[%s385 + $0x440] sm:$0xff]
        %v608 = vld [vmem:[%s385 + $0x448] sm:$0xff]
        %v609 = vld [vmem:[%s385 + $0x450] sm:$0xff]
        %v610 = vld [vmem:[%s385 + $0x458] sm:$0xff]
        %v611 = vld [vmem:[%s385 + $0x460] sm:$0xff]
        %v612 = vld [vmem:[%s385 + $0x468] sm:$0xff]
        %v613 = vld [vmem:[%s385 + $0x470] sm:$0xff]
        %v614 = vld [vmem:[%s385 + $0x478] sm:$0xff]
        %v615 = vld [vmem:[%s385 + $0x480] sm:$0xff]
        %v616 = vld [vmem:[%s385 + $0x488] sm:$0xff]
        %v617 = vld [vmem:[%s385 + $0x490] sm:$0xff]
        %v618 = vld [vmem:[%s385 + $0x498] sm:$0xff]
        %v619 = vld [vmem:[%s385 + $0x4a0] sm:$0xff]
        %v620 = vld [vmem:[%s385 + $0x4a8] sm:$0xff]
        %v621 = vld [vmem:[%s385 + $0x4b0] sm:$0xff]
        %v622 = vld [vmem:[%s385 + $0x4b8] sm:$0xff]
        %v623 = vld [vmem:[%s385 + $0x4c0] sm:$0xff]
        %v624 = vld [vmem:[%s385 + $0x4c8] sm:$0xff]
        %v625 = vld [vmem:[%s385 + $0x4d0] sm:$0xff]
        %v626 = vld [vmem:[%s385 + $0x4d8] sm:$0xff]
        %v627 = vld [vmem:[%s385 + $0x4e0] sm:$0xff]
        %v628 = vld [vmem:[%s385 + $0x4e8] sm:$0xff]
        %v629 = vld [vmem:[%s385 + $0x4f0] sm:$0xff]
        %v630 = vld [vmem:[%s385 + $0x4f8] sm:$0xff]
        %v631 = vld [vmem:[%s385 + $0x500] sm:$0xff]
        %v632 = vld [vmem:[%s385 + $0x508] sm:$0xff]
        %v633 = vld [vmem:[%s385 + $0x510] sm:$0xff]
        %v634 = vld [vmem:[%s385 + $0x518] sm:$0xff]
        %v635 = vld [vmem:[%s385 + $0x520] sm:$0xff]
        %v636 = vld [vmem:[%s385 + $0x528] sm:$0xff]
        %v637 = vld [vmem:[%s385 + $0x530] sm:$0xff]
        %v638 = vld [vmem:[%s385 + $0x538] sm:$0xff]
        %v639 = vld [vmem:[%s385 + $0x540] sm:$0xff]
        %v640 = vld [vmem:[%s385 + $0x548] sm:$0xff]
        %v641 = vld [vmem:[%s385 + $0x550] sm:$0xff]
        %v642 = vld [vmem:[%s385 + $0x558] sm:$0xff]
        %v643 = vld [vmem:[%s385 + $0x560] sm:$0xff]
        %v644 = vld [vmem:[%s385 + $0x568] sm:$0xff]
        %v645 = vld [vmem:[%s385 + $0x570] sm:$0xff]
        %v646 = vld [vmem:[%s385 + $0x578] sm:$0xff]
        %v647 = vld [vmem:[%s385 + $0x580] sm:$0xff]
        %v648 = vld [vmem:[%s385 + $0x588] sm:$0xff]
        %v649 = vld [vmem:[%s385 + $0x590] sm:$0xff]
        %v650 = vld [vmem:[%s385 + $0x598] sm:$0xff]
        %v651 = vld [vmem:[%s385 + $0x5a0] sm:$0xff]
        %v652 = vld [vmem:[%s385 + $0x5a8] sm:$0xff]
        %v653 = vld [vmem:[%s385 + $0x5b0] sm:$0xff]
        %v654 = vld [vmem:[%s385 + $0x5b8] sm:$0xff]
        %v655 = vld [vmem:[%s385 + $0x5c0] sm:$0xff]
        %v656 = vld [vmem:[%s385 + $0x5c8] sm:$0xff]
        %v657 = vld [vmem:[%s385 + $0x5d0] sm:$0xff]
        %v658 = vld [vmem:[%s385 + $0x5d8] sm:$0xff]
        %v659 = vld [vmem:[%s385 + $0x5e0] sm:$0xff]
        %v660 = vld [vmem:[%s385 + $0x5e8] sm:$0xff]
        %v661 = vld [vmem:[%s385 + $0x5f0] sm:$0xff]
        %v662 = vld [vmem:[%s385 + $0x5f8] sm:$0xff]
        %v663 = vld [vmem:[%s385 + $0x600] sm:$0xff]
        %v664 = vld [vmem:[%s385 + $0x608] sm:$0xff]
        %v665 = vld [vmem:[%s385 + $0x610] sm:$0xff]
        %v666 = vld [vmem:[%s385 + $0x618] sm:$0xff]
        %v667 = vld [vmem:[%s385 + $0x620] sm:$0xff]
        %v668 = vld [vmem:[%s385 + $0x628] sm:$0xff]
        %v669 = vld [vmem:[%s385 + $0x630] sm:$0xff]
        %v670 = vld [vmem:[%s385 + $0x638] sm:$0xff]
        %v671 = vld [vmem:[%s385 + $0x640] sm:$0xff]
        %v672 = vld [vmem:[%s385 + $0x648] sm:$0xff]
        %v673 = vld [vmem:[%s385 + $0x650] sm:$0xff]
        %v674 = vld [vmem:[%s385 + $0x658] sm:$0xff]
        %v675 = vld [vmem:[%s385 + $0x660] sm:$0xff]
        %v676 = vld [vmem:[%s385 + $0x668] sm:$0xff]
        %v677 = vld [vmem:[%s385 + $0x670] sm:$0xff]
        %v678 = vld [vmem:[%s385 + $0x678] sm:$0xff]
        %v679 = vld [vmem:[%s385 + $0x680] sm:$0xff]
        %v680 = vld [vmem:[%s385 + $0x688] sm:$0xff]
        %v681 = vld [vmem:[%s385 + $0x690] sm:$0xff]
        %v682 = vld [vmem:[%s385 + $0x698] sm:$0xff]
        %v683 = vld [vmem:[%s385 + $0x6a0] sm:$0xff]
        %v684 = vld [vmem:[%s385 + $0x6a8] sm:$0xff]
        %v685 = vld [vmem:[%s385 + $0x6b0] sm:$0xff]
        %v686 = vld [vmem:[%s385 + $0x6b8] sm:$0xff]
        %v687 = vld [vmem:[%s385 + $0x6c0] sm:$0xff]
        %v688 = vld [vmem:[%s385 + $0x6c8] sm:$0xff]
        %v689 = vld [vmem:[%s385 + $0x6d0] sm:$0xff]
        %v690 = vld [vmem:[%s385 + $0x6d8] sm:$0xff]
        %v691 = vld [vmem:[%s385 + $0x6e0] sm:$0xff]
        %v692 = vld [vmem:[%s385 + $0x6e8] sm:$0xff]
        %v693 = vld [vmem:[%s385 + $0x6f0] sm:$0xff]
        %v694 = vld [vmem:[%s385 + $0x6f8] sm:$0xff]
        %v695 = vld [vmem:[%s385 + $0x700] sm:$0xff]
        %v696 = vld [vmem:[%s385 + $0x708] sm:$0xff]
        %v697 = vld [vmem:[%s385 + $0x710] sm:$0xff]
        %v698 = vld [vmem:[%s385 + $0x718] sm:$0xff]
        %v699 = vld [vmem:[%s385 + $0x720] sm:$0xff]
        %v700 = vld [vmem:[%s385 + $0x728] sm:$0xff]
        %v701 = vld [vmem:[%s385 + $0x730] sm:$0xff]
        %v702 = vld [vmem:[%s385 + $0x738] sm:$0xff]
        %v703 = vld [vmem:[%s385 + $0x740] sm:$0xff]
        %v704 = vld [vmem:[%s385 + $0x748] sm:$0xff]
        %v705 = vld [vmem:[%s385 + $0x750] sm:$0xff]
        %v706 = vld [vmem:[%s385 + $0x758] sm:$0xff]
        %v707 = vld [vmem:[%s385 + $0x760] sm:$0xff]
        %v708 = vld [vmem:[%s385 + $0x768] sm:$0xff]
        %v709 = vld [vmem:[%s385 + $0x770] sm:$0xff]
        %v710 = vld [vmem:[%s385 + $0x778] sm:$0xff]
        %v711 = vld [vmem:[%s385 + $0x780] sm:$0xff]
        %v712 = vld [vmem:[%s385 + $0x788] sm:$0xff]
        %v713 = vld [vmem:[%s385 + $0x790] sm:$0xff]
        %v714 = vld [vmem:[%s385 + $0x798] sm:$0xff]
        %v715 = vld [vmem:[%s385 + $0x7a0] sm:$0xff]
        %v716 = vld [vmem:[%s385 + $0x7a8] sm:$0xff]
        %v717 = vld [vmem:[%s385 + $0x7b0] sm:$0xff]
        %v718 = vld [vmem:[%s385 + $0x7b8] sm:$0xff]
        %v719 = vld [vmem:[%s385 + $0x7c0] sm:$0xff]
        %v720 = vld [vmem:[%s385 + $0x7c8] sm:$0xff]
        %v721 = vld [vmem:[%s385 + $0x7d0] sm:$0xff]
        %v722 = vld [vmem:[%s385 + $0x7d8] sm:$0xff]
        %v723 = vld [vmem:[%s385 + $0x7e0] sm:$0xff]
        %v724 = vld [vmem:[%s385 + $0x7e8] sm:$0xff]
        %v725 = vld [vmem:[%s385 + $0x7f0] sm:$0xff]
        %v726 = vld [vmem:[%s385 + $0x7f8] sm:$0xff]
        %v983 = vunpack.c.l.b16 %v471
        %v984 = vunpack.c.h.b16 %v471
        %v985 = vunpack.c.l.b16 %v472
        %v986 = vunpack.c.h.b16 %v472
        %v987 = vunpack.c.l.b16 %v473
        %v988 = vunpack.c.h.b16 %v473
        %v989 = vunpack.c.l.b16 %v474
        %v990 = vunpack.c.h.b16 %v474
        %v991 = vunpack.c.l.b16 %v475
        %v992 = vunpack.c.h.b16 %v475
        %v993 = vunpack.c.l.b16 %v476
        %v994 = vunpack.c.h.b16 %v476
        %v995 = vunpack.c.l.b16 %v477
        %v996 = vunpack.c.h.b16 %v477
        %v997 = vunpack.c.l.b16 %v478
        %v998 = vunpack.c.h.b16 %v478
        %v999 = vunpack.c.l.b16 %v479
        %v1000 = vunpack.c.h.b16 %v479
        %v1001 = vunpack.c.l.b16 %v480
        %v1002 = vunpack.c.h.b16 %v480
        %v1003 = vunpack.c.l.b16 %v481
        %v1004 = vunpack.c.h.b16 %v481
        %v1005 = vunpack.c.l.b16 %v482
        %v1006 = vunpack.c.h.b16 %v482
        %v1007 = vunpack.c.l.b16 %v483
        %v1008 = vunpack.c.h.b16 %v483
        %v1009 = vunpack.c.l.b16 %v484
        %v1010 = vunpack.c.h.b16 %v484
        %v1011 = vunpack.c.l.b16 %v485
        %v1012 = vunpack.c.h.b16 %v485
        %v1013 = vunpack.c.l.b16 %v486
        %v1014 = vunpack.c.h.b16 %v486
        %v1015 = vunpack.c.l.b16 %v487
        %v1016 = vunpack.c.h.b16 %v487
        %v1017 = vunpack.c.l.b16 %v488
        %v1018 = vunpack.c.h.b16 %v488
        %v1019 = vunpack.c.l.b16 %v489
        %v1020 = vunpack.c.h.b16 %v489
        %v1021 = vunpack.c.l.b16 %v490
        %v1022 = vunpack.c.h.b16 %v490
        %v1023 = vunpack.c.l.b16 %v491
        %v1024 = vunpack.c.h.b16 %v491
        %v1025 = vunpack.c.l.b16 %v492
        %v1026 = vunpack.c.h.b16 %v492
        %v1027 = vunpack.c.l.b16 %v493
        %v1028 = vunpack.c.h.b16 %v493
        %v1029 = vunpack.c.l.b16 %v494
        %v1030 = vunpack.c.h.b16 %v494
        %v1031 = vunpack.c.l.b16 %v495
        %v1032 = vunpack.c.h.b16 %v495
        %v1033 = vunpack.c.l.b16 %v496
        %v1034 = vunpack.c.h.b16 %v496
        %v1035 = vunpack.c.l.b16 %v497
        %v1036 = vunpack.c.h.b16 %v497
        %v1037 = vunpack.c.l.b16 %v498
        %v1038 = vunpack.c.h.b16 %v498
        %v1039 = vunpack.c.l.b16 %v499
        %v1040 = vunpack.c.h.b16 %v499
        %v1041 = vunpack.c.l.b16 %v500
        %v1042 = vunpack.c.h.b16 %v500
        %v1043 = vunpack.c.l.b16 %v501
        %v1044 = vunpack.c.h.b16 %v501
        %v1045 = vunpack.c.l.b16 %v502
        %v1046 = vunpack.c.h.b16 %v502
        %v1047 = vunpack.c.l.b16 %v503
        %v1048 = vunpack.c.h.b16 %v503
        %v1049 = vunpack.c.l.b16 %v504
        %v1050 = vunpack.c.h.b16 %v504
        %v1051 = vunpack.c.l.b16 %v505
        %v1052 = vunpack.c.h.b16 %v505
        %v1053 = vunpack.c.l.b16 %v506
        %v1054 = vunpack.c.h.b16 %v506
        %v1055 = vunpack.c.l.b16 %v507
        %v1056 = vunpack.c.h.b16 %v507
        %v1057 = vunpack.c.l.b16 %v508
        %v1058 = vunpack.c.h.b16 %v508
        %v1059 = vunpack.c.l.b16 %v509
        %v1060 = vunpack.c.h.b16 %v509
        %v1061 = vunpack.c.l.b16 %v510
        %v1062 = vunpack.c.h.b16 %v510
        %v1063 = vunpack.c.l.b16 %v511
        %v1064 = vunpack.c.h.b16 %v511
        %v1065 = vunpack.c.l.b16 %v512
        %v1066 = vunpack.c.h.b16 %v512
        %v1067 = vunpack.c.l.b16 %v513
        %v1068 = vunpack.c.h.b16 %v513
        %v1069 = vunpack.c.l.b16 %v514
        %v1070 = vunpack.c.h.b16 %v514
        %v1071 = vunpack.c.l.b16 %v515
        %v1072 = vunpack.c.h.b16 %v515
        %v1073 = vunpack.c.l.b16 %v516
        %v1074 = vunpack.c.h.b16 %v516
        %v1075 = vunpack.c.l.b16 %v517
        %v1076 = vunpack.c.h.b16 %v517
        %v1077 = vunpack.c.l.b16 %v518
        %v1078 = vunpack.c.h.b16 %v518
        %v1079 = vunpack.c.l.b16 %v519
        %v1080 = vunpack.c.h.b16 %v519
        %v1081 = vunpack.c.l.b16 %v520
        %v1082 = vunpack.c.h.b16 %v520
        %v1083 = vunpack.c.l.b16 %v521
        %v1084 = vunpack.c.h.b16 %v521
        %v1085 = vunpack.c.l.b16 %v522
        %v1086 = vunpack.c.h.b16 %v522
        %v1087 = vunpack.c.l.b16 %v523
        %v1088 = vunpack.c.h.b16 %v523
        %v1089 = vunpack.c.l.b16 %v524
        %v1090 = vunpack.c.h.b16 %v524
        %v1091 = vunpack.c.l.b16 %v525
        %v1092 = vunpack.c.h.b16 %v525
        %v1093 = vunpack.c.l.b16 %v526
        %v1094 = vunpack.c.h.b16 %v526
        %v1095 = vunpack.c.l.b16 %v527
        %v1096 = vunpack.c.h.b16 %v527
        %v1097 = vunpack.c.l.b16 %v528
        %v1098 = vunpack.c.h.b16 %v528
        %v1099 = vunpack.c.l.b16 %v529
        %v1100 = vunpack.c.h.b16 %v529
        %v1101 = vunpack.c.l.b16 %v530
        %v1102 = vunpack.c.h.b16 %v530
        %v1103 = vunpack.c.l.b16 %v531
        %v1104 = vunpack.c.h.b16 %v531
        %v1105 = vunpack.c.l.b16 %v532
        %v1106 = vunpack.c.h.b16 %v532
        %v1107 = vunpack.c.l.b16 %v533
        %v1108 = vunpack.c.h.b16 %v533
        %v1109 = vunpack.c.l.b16 %v534
        %v1110 = vunpack.c.h.b16 %v534
        %v1111 = vunpack.c.l.b16 %v535
        %v1112 = vunpack.c.h.b16 %v535
        %v1113 = vunpack.c.l.b16 %v536
        %v1114 = vunpack.c.h.b16 %v536
        %v1115 = vunpack.c.l.b16 %v537
        %v1116 = vunpack.c.h.b16 %v537
        %v1117 = vunpack.c.l.b16 %v538
        %v1118 = vunpack.c.h.b16 %v538
        %v1119 = vunpack.c.l.b16 %v539
        %v1120 = vunpack.c.h.b16 %v539
        %v1121 = vunpack.c.l.b16 %v540
        %v1122 = vunpack.c.h.b16 %v540
        %v1123 = vunpack.c.l.b16 %v541
        %v1124 = vunpack.c.h.b16 %v541
        %v1125 = vunpack.c.l.b16 %v542
        %v1126 = vunpack.c.h.b16 %v542
        %v1127 = vunpack.c.l.b16 %v543
        %v1128 = vunpack.c.h.b16 %v543
        %v1129 = vunpack.c.l.b16 %v544
        %v1130 = vunpack.c.h.b16 %v544
        %v1131 = vunpack.c.l.b16 %v545
        %v1132 = vunpack.c.h.b16 %v545
        %v1133 = vunpack.c.l.b16 %v546
        %v1134 = vunpack.c.h.b16 %v546
        %v1135 = vunpack.c.l.b16 %v547
        %v1136 = vunpack.c.h.b16 %v547
        %v1137 = vunpack.c.l.b16 %v548
        %v1138 = vunpack.c.h.b16 %v548
        %v1139 = vunpack.c.l.b16 %v549
        %v1140 = vunpack.c.h.b16 %v549
        %v1141 = vunpack.c.l.b16 %v550
        %v1142 = vunpack.c.h.b16 %v550
        %v1143 = vunpack.c.l.b16 %v551
        %v1144 = vunpack.c.h.b16 %v551
        %v1145 = vunpack.c.l.b16 %v552
        %v1146 = vunpack.c.h.b16 %v552
        %v1147 = vunpack.c.l.b16 %v553
        %v1148 = vunpack.c.h.b16 %v553
        %v1149 = vunpack.c.l.b16 %v554
        %v1150 = vunpack.c.h.b16 %v554
        %v1151 = vunpack.c.l.b16 %v555
        %v1152 = vunpack.c.h.b16 %v555
        %v1153 = vunpack.c.l.b16 %v556
        %v1154 = vunpack.c.h.b16 %v556
        %v1155 = vunpack.c.l.b16 %v557
        %v1156 = vunpack.c.h.b16 %v557
        %v1157 = vunpack.c.l.b16 %v558
        %v1158 = vunpack.c.h.b16 %v558
        %v1159 = vunpack.c.l.b16 %v559
        %v1160 = vunpack.c.h.b16 %v559
        %v1161 = vunpack.c.l.b16 %v560
        %v1162 = vunpack.c.h.b16 %v560
        %v1163 = vunpack.c.l.b16 %v561
        %v1164 = vunpack.c.h.b16 %v561
        %v1165 = vunpack.c.l.b16 %v562
        %v1166 = vunpack.c.h.b16 %v562
        %v1167 = vunpack.c.l.b16 %v563
        %v1168 = vunpack.c.h.b16 %v563
        %v1169 = vunpack.c.l.b16 %v564
        %v1170 = vunpack.c.h.b16 %v564
        %v1171 = vunpack.c.l.b16 %v565
        %v1172 = vunpack.c.h.b16 %v565
        %v1173 = vunpack.c.l.b16 %v566
        %v1174 = vunpack.c.h.b16 %v566
        %v1175 = vunpack.c.l.b16 %v567
        %v1176 = vunpack.c.h.b16 %v567
        %v1177 = vunpack.c.l.b16 %v568
        %v1178 = vunpack.c.h.b16 %v568
        %v1179 = vunpack.c.l.b16 %v569
        %v1180 = vunpack.c.h.b16 %v569
        %v1181 = vunpack.c.l.b16 %v570
        %v1182 = vunpack.c.h.b16 %v570
        %v1183 = vunpack.c.l.b16 %v571
        %v1184 = vunpack.c.h.b16 %v571
        %v1185 = vunpack.c.l.b16 %v572
        %v1186 = vunpack.c.h.b16 %v572
        %v1187 = vunpack.c.l.b16 %v573
        %v1188 = vunpack.c.h.b16 %v573
        %v1189 = vunpack.c.l.b16 %v574
        %v1190 = vunpack.c.h.b16 %v574
        %v1191 = vunpack.c.l.b16 %v575
        %v1192 = vunpack.c.h.b16 %v575
        %v1193 = vunpack.c.l.b16 %v576
        %v1194 = vunpack.c.h.b16 %v576
        %v1195 = vunpack.c.l.b16 %v577
        %v1196 = vunpack.c.h.b16 %v577
        %v1197 = vunpack.c.l.b16 %v578
        %v1198 = vunpack.c.h.b16 %v578
        %v1199 = vunpack.c.l.b16 %v579
        %v1200 = vunpack.c.h.b16 %v579
        %v1201 = vunpack.c.l.b16 %v580
        %v1202 = vunpack.c.h.b16 %v580
        %v1203 = vunpack.c.l.b16 %v581
        %v1204 = vunpack.c.h.b16 %v581
        %v1205 = vunpack.c.l.b16 %v582
        %v1206 = vunpack.c.h.b16 %v582
        %v1207 = vunpack.c.l.b16 %v583
        %v1208 = vunpack.c.h.b16 %v583
        %v1209 = vunpack.c.l.b16 %v584
        %v1210 = vunpack.c.h.b16 %v584
        %v1211 = vunpack.c.l.b16 %v585
        %v1212 = vunpack.c.h.b16 %v585
        %v1213 = vunpack.c.l.b16 %v586
        %v1214 = vunpack.c.h.b16 %v586
        %v1215 = vunpack.c.l.b16 %v587
        %v1216 = vunpack.c.h.b16 %v587
        %v1217 = vunpack.c.l.b16 %v588
        %v1218 = vunpack.c.h.b16 %v588
        %v1219 = vunpack.c.l.b16 %v589
        %v1220 = vunpack.c.h.b16 %v589
        %v1221 = vunpack.c.l.b16 %v590
        %v1222 = vunpack.c.h.b16 %v590
        %v1223 = vunpack.c.l.b16 %v591
        %v1224 = vunpack.c.h.b16 %v591
        %v1225 = vunpack.c.l.b16 %v592
        %v1226 = vunpack.c.h.b16 %v592
        %v1227 = vunpack.c.l.b16 %v593
        %v1228 = vunpack.c.h.b16 %v593
        %v1229 = vunpack.c.l.b16 %v594
        %v1230 = vunpack.c.h.b16 %v594
        %v1231 = vunpack.c.l.b16 %v595
        %v1232 = vunpack.c.h.b16 %v595
        %v1233 = vunpack.c.l.b16 %v596
        %v1234 = vunpack.c.h.b16 %v596
        %v1235 = vunpack.c.l.b16 %v597
        %v1236 = vunpack.c.h.b16 %v597
        %v1237 = vunpack.c.l.b16 %v598
        %v1238 = vunpack.c.h.b16 %v598
        %v1239 = vunpack.c.l.b16 %v599
        %v1240 = vunpack.c.h.b16 %v599
        %v1241 = vunpack.c.l.b16 %v600
        %v1242 = vunpack.c.h.b16 %v600
        %v1243 = vunpack.c.l.b16 %v601
        %v1244 = vunpack.c.h.b16 %v601
        %v1245 = vunpack.c.l.b16 %v602
        %v1246 = vunpack.c.h.b16 %v602
        %v1247 = vunpack.c.l.b16 %v603
        %v1248 = vunpack.c.h.b16 %v603
        %v1249 = vunpack.c.l.b16 %v604
        %v1250 = vunpack.c.h.b16 %v604
        %v1251 = vunpack.c.l.b16 %v605
        %v1252 = vunpack.c.h.b16 %v605
        %v1253 = vunpack.c.l.b16 %v606
        %v1254 = vunpack.c.h.b16 %v606
        %v1255 = vunpack.c.l.b16 %v607
        %v1256 = vunpack.c.h.b16 %v607
        %v1257 = vunpack.c.l.b16 %v608
        %v1258 = vunpack.c.h.b16 %v608
        %v1259 = vunpack.c.l.b16 %v609
        %v1260 = vunpack.c.h.b16 %v609
        %v1261 = vunpack.c.l.b16 %v610
        %v1262 = vunpack.c.h.b16 %v610
        %v1263 = vunpack.c.l.b16 %v611
        %v1264 = vunpack.c.h.b16 %v611
        %v1265 = vunpack.c.l.b16 %v612
        %v1266 = vunpack.c.h.b16 %v612
        %v1267 = vunpack.c.l.b16 %v613
        %v1268 = vunpack.c.h.b16 %v613
        %v1269 = vunpack.c.l.b16 %v614
        %v1270 = vunpack.c.h.b16 %v614
        %v1271 = vunpack.c.l.b16 %v615
        %v1272 = vunpack.c.h.b16 %v615
        %v1273 = vunpack.c.l.b16 %v616
        %v1274 = vunpack.c.h.b16 %v616
        %v1275 = vunpack.c.l.b16 %v617
        %v1276 = vunpack.c.h.b16 %v617
        %v1277 = vunpack.c.l.b16 %v618
        %v1278 = vunpack.c.h.b16 %v618
        %v1279 = vunpack.c.l.b16 %v619
        %v1280 = vunpack.c.h.b16 %v619
        %v1281 = vunpack.c.l.b16 %v620
        %v1282 = vunpack.c.h.b16 %v620
        %v1283 = vunpack.c.l.b16 %v621
        %v1284 = vunpack.c.h.b16 %v621
        %v1285 = vunpack.c.l.b16 %v622
        %v1286 = vunpack.c.h.b16 %v622
        %v1287 = vunpack.c.l.b16 %v623
        %v1288 = vunpack.c.h.b16 %v623
        %v1289 = vunpack.c.l.b16 %v624
        %v1290 = vunpack.c.h.b16 %v624
        %v1291 = vunpack.c.l.b16 %v625
        %v1292 = vunpack.c.h.b16 %v625
        %v1293 = vunpack.c.l.b16 %v626
        %v1294 = vunpack.c.h.b16 %v626
        %v1295 = vunpack.c.l.b16 %v627
        %v1296 = vunpack.c.h.b16 %v627
        %v1297 = vunpack.c.l.b16 %v628
        %v1298 = vunpack.c.h.b16 %v628
        %v1299 = vunpack.c.l.b16 %v629
        %v1300 = vunpack.c.h.b16 %v629
        %v1301 = vunpack.c.l.b16 %v630
        %v1302 = vunpack.c.h.b16 %v630
        %v1303 = vunpack.c.l.b16 %v631
        %v1304 = vunpack.c.h.b16 %v631
        %v1305 = vunpack.c.l.b16 %v632
        %v1306 = vunpack.c.h.b16 %v632
        %v1307 = vunpack.c.l.b16 %v633
        %v1308 = vunpack.c.h.b16 %v633
        %v1309 = vunpack.c.l.b16 %v634
        %v1310 = vunpack.c.h.b16 %v634
        %v1311 = vunpack.c.l.b16 %v635
        %v1312 = vunpack.c.h.b16 %v635
        %v1313 = vunpack.c.l.b16 %v636
        %v1314 = vunpack.c.h.b16 %v636
        %v1315 = vunpack.c.l.b16 %v637
        %v1316 = vunpack.c.h.b16 %v637
        %v1317 = vunpack.c.l.b16 %v638
        %v1318 = vunpack.c.h.b16 %v638
        %v1319 = vunpack.c.l.b16 %v639
        %v1320 = vunpack.c.h.b16 %v639
        %v1321 = vunpack.c.l.b16 %v640
        %v1322 = vunpack.c.h.b16 %v640
        %v1323 = vunpack.c.l.b16 %v641
        %v1324 = vunpack.c.h.b16 %v641
        %v1325 = vunpack.c.l.b16 %v642
        %v1326 = vunpack.c.h.b16 %v642
        %v1327 = vunpack.c.l.b16 %v643
        %v1328 = vunpack.c.h.b16 %v643
        %v1329 = vunpack.c.l.b16 %v644
        %v1330 = vunpack.c.h.b16 %v644
        %v1331 = vunpack.c.l.b16 %v645
        %v1332 = vunpack.c.h.b16 %v645
        %v1333 = vunpack.c.l.b16 %v646
        %v1334 = vunpack.c.h.b16 %v646
        %v1335 = vunpack.c.l.b16 %v647
        %v1336 = vunpack.c.h.b16 %v647
        %v1337 = vunpack.c.l.b16 %v648
        %v1338 = vunpack.c.h.b16 %v648
        %v1339 = vunpack.c.l.b16 %v649
        %v1340 = vunpack.c.h.b16 %v649
        %v1341 = vunpack.c.l.b16 %v650
        %v1342 = vunpack.c.h.b16 %v650
        %v1343 = vunpack.c.l.b16 %v651
        %v1344 = vunpack.c.h.b16 %v651
        %v1345 = vunpack.c.l.b16 %v652
        %v1346 = vunpack.c.h.b16 %v652
        %v1347 = vunpack.c.l.b16 %v653
        %v1348 = vunpack.c.h.b16 %v653
        %v1349 = vunpack.c.l.b16 %v654
        %v1350 = vunpack.c.h.b16 %v654
        %v1351 = vunpack.c.l.b16 %v655
        %v1352 = vunpack.c.h.b16 %v655
        %v1353 = vunpack.c.l.b16 %v656
        %v1354 = vunpack.c.h.b16 %v656
        %v1355 = vunpack.c.l.b16 %v657
        %v1356 = vunpack.c.h.b16 %v657
        %v1357 = vunpack.c.l.b16 %v658
        %v1358 = vunpack.c.h.b16 %v658
        %v1359 = vunpack.c.l.b16 %v659
        %v1360 = vunpack.c.h.b16 %v659
        %v1361 = vunpack.c.l.b16 %v660
        %v1362 = vunpack.c.h.b16 %v660
        %v1363 = vunpack.c.l.b16 %v661
        %v1364 = vunpack.c.h.b16 %v661
        %v1365 = vunpack.c.l.b16 %v662
        %v1366 = vunpack.c.h.b16 %v662
        %v1367 = vunpack.c.l.b16 %v663
        %v1368 = vunpack.c.h.b16 %v663
        %v1369 = vunpack.c.l.b16 %v664
        %v1370 = vunpack.c.h.b16 %v664
        %v1371 = vunpack.c.l.b16 %v665
        %v1372 = vunpack.c.h.b16 %v665
        %v1373 = vunpack.c.l.b16 %v666
        %v1374 = vunpack.c.h.b16 %v666
        %v1375 = vunpack.c.l.b16 %v667
        %v1376 = vunpack.c.h.b16 %v667
        %v1377 = vunpack.c.l.b16 %v668
        %v1378 = vunpack.c.h.b16 %v668
        %v1379 = vunpack.c.l.b16 %v669
        %v1380 = vunpack.c.h.b16 %v669
        %v1381 = vunpack.c.l.b16 %v670
        %v1382 = vunpack.c.h.b16 %v670
        %v1383 = vunpack.c.l.b16 %v671
        %v1384 = vunpack.c.h.b16 %v671
        %v1385 = vunpack.c.l.b16 %v672
        %v1386 = vunpack.c.h.b16 %v672
        %v1387 = vunpack.c.l.b16 %v673
        %v1388 = vunpack.c.h.b16 %v673
        %v1389 = vunpack.c.l.b16 %v674
        %v1390 = vunpack.c.h.b16 %v674
        %v1391 = vunpack.c.l.b16 %v675
        %v1392 = vunpack.c.h.b16 %v675
        %v1393 = vunpack.c.l.b16 %v676
        %v1394 = vunpack.c.h.b16 %v676
        %v1395 = vunpack.c.l.b16 %v677
        %v1396 = vunpack.c.h.b16 %v677
        %v1397 = vunpack.c.l.b16 %v678
        %v1398 = vunpack.c.h.b16 %v678
        %v1399 = vunpack.c.l.b16 %v679
        %v1400 = vunpack.c.h.b16 %v679
        %v1401 = vunpack.c.l.b16 %v680
        %v1402 = vunpack.c.h.b16 %v680
        %v1403 = vunpack.c.l.b16 %v681
        %v1404 = vunpack.c.h.b16 %v681
        %v1405 = vunpack.c.l.b16 %v682
        %v1406 = vunpack.c.h.b16 %v682
        %v1407 = vunpack.c.l.b16 %v683
        %v1408 = vunpack.c.h.b16 %v683
        %v1409 = vunpack.c.l.b16 %v684
        %v1410 = vunpack.c.h.b16 %v684
        %v1411 = vunpack.c.l.b16 %v685
        %v1412 = vunpack.c.h.b16 %v685
        %v1413 = vunpack.c.l.b16 %v686
        %v1414 = vunpack.c.h.b16 %v686
        %v1415 = vunpack.c.l.b16 %v687
        %v1416 = vunpack.c.h.b16 %v687
        %v1417 = vunpack.c.l.b16 %v688
        %v1418 = vunpack.c.h.b16 %v688
        %v1419 = vunpack.c.l.b16 %v689
        %v1420 = vunpack.c.h.b16 %v689
        %v1421 = vunpack.c.l.b16 %v690
        %v1422 = vunpack.c.h.b16 %v690
        %v1423 = vunpack.c.l.b16 %v691
        %v1424 = vunpack.c.h.b16 %v691
        %v1425 = vunpack.c.l.b16 %v692
        %v1426 = vunpack.c.h.b16 %v692
        %v1427 = vunpack.c.l.b16 %v693
        %v1428 = vunpack.c.h.b16 %v693
        %v1429 = vunpack.c.l.b16 %v694
        %v1430 = vunpack.c.h.b16 %v694
        %v1431 = vunpack.c.l.b16 %v695
        %v1432 = vunpack.c.h.b16 %v695
        %v1433 = vunpack.c.l.b16 %v696
        %v1434 = vunpack.c.h.b16 %v696
        %v1435 = vunpack.c.l.b16 %v697
        %v1436 = vunpack.c.h.b16 %v697
        %v1437 = vunpack.c.l.b16 %v698
        %v1438 = vunpack.c.h.b16 %v698
        %v1439 = vunpack.c.l.b16 %v699
        %v1440 = vunpack.c.h.b16 %v699
        %v1441 = vunpack.c.l.b16 %v700
        %v1442 = vunpack.c.h.b16 %v700
        %v1443 = vunpack.c.l.b16 %v701
        %v1444 = vunpack.c.h.b16 %v701
        %v1445 = vunpack.c.l.b16 %v702
        %v1446 = vunpack.c.h.b16 %v702
        %v1447 = vunpack.c.l.b16 %v703
        %v1448 = vunpack.c.h.b16 %v703
        %v1449 = vunpack.c.l.b16 %v704
        %v1450 = vunpack.c.h.b16 %v704
        %v1451 = vunpack.c.l.b16 %v705
        %v1452 = vunpack.c.h.b16 %v705
        %v1453 = vunpack.c.l.b16 %v706
        %v1454 = vunpack.c.h.b16 %v706
        %v1455 = vunpack.c.l.b16 %v707
        %v1456 = vunpack.c.h.b16 %v707
        %v1457 = vunpack.c.l.b16 %v708
        %v1458 = vunpack.c.h.b16 %v708
        %v1459 = vunpack.c.l.b16 %v709
        %v1460 = vunpack.c.h.b16 %v709
        %v1461 = vunpack.c.l.b16 %v710
        %v1462 = vunpack.c.h.b16 %v710
        %v1463 = vunpack.c.l.b16 %v711
        %v1464 = vunpack.c.h.b16 %v711
        %v1465 = vunpack.c.l.b16 %v712
        %v1466 = vunpack.c.h.b16 %v712
        %v1467 = vunpack.c.l.b16 %v713
        %v1468 = vunpack.c.h.b16 %v713
        %v1469 = vunpack.c.l.b16 %v714
        %v1470 = vunpack.c.h.b16 %v714
        %v1471 = vunpack.c.l.b16 %v715
        %v1472 = vunpack.c.h.b16 %v715
        %v1473 = vunpack.c.l.b16 %v716
        %v1474 = vunpack.c.h.b16 %v716
        %v1475 = vunpack.c.l.b16 %v717
        %v1476 = vunpack.c.h.b16 %v717
        %v1477 = vunpack.c.l.b16 %v718
        %v1478 = vunpack.c.h.b16 %v718
        %v1479 = vunpack.c.l.b16 %v719
        %v1480 = vunpack.c.h.b16 %v719
        %v1481 = vunpack.c.l.b16 %v720
        %v1482 = vunpack.c.h.b16 %v720
        %v1483 = vunpack.c.l.b16 %v721
        %v1484 = vunpack.c.h.b16 %v721
        %v1485 = vunpack.c.l.b16 %v722
        %v1486 = vunpack.c.h.b16 %v722
        %v1487 = vunpack.c.l.b16 %v723
        %v1488 = vunpack.c.h.b16 %v723
        %v1489 = vunpack.c.l.b16 %v724
        %v1490 = vunpack.c.h.b16 %v724
        %v1491 = vunpack.c.l.b16 %v725
        %v1492 = vunpack.c.h.b16 %v725
        %v1493 = vunpack.c.l.b16 %v726
        %v1494 = vunpack.c.h.b16 %v726
        %v1495 = vpack.c.b16 %v991, %v983
        %v1496 = vpack.c.b16 %v992, %v984
        %v1497 = vpack.c.b16 %v993, %v985
        %v1498 = vpack.c.b16 %v994, %v986
        %v1499 = vpack.c.b16 %v995, %v987
        %v1500 = vpack.c.b16 %v996, %v988
        %v1501 = vpack.c.b16 %v997, %v989
        %v1502 = vpack.c.b16 %v998, %v990
        %v1503 = vpack.c.b16 %v1007, %v999
        %v1504 = vpack.c.b16 %v1008, %v1000
        %v1505 = vpack.c.b16 %v1009, %v1001
        %v1506 = vpack.c.b16 %v1010, %v1002
        %v1507 = vpack.c.b16 %v1011, %v1003
        %v1508 = vpack.c.b16 %v1012, %v1004
        %v1509 = vpack.c.b16 %v1013, %v1005
        %v1510 = vpack.c.b16 %v1014, %v1006
        %v1511 = vpack.c.b16 %v1023, %v1015
        %v1512 = vpack.c.b16 %v1024, %v1016
        %v1513 = vpack.c.b16 %v1025, %v1017
        %v1514 = vpack.c.b16 %v1026, %v1018
        %v1515 = vpack.c.b16 %v1027, %v1019
        %v1516 = vpack.c.b16 %v1028, %v1020
        %v1517 = vpack.c.b16 %v1029, %v1021
        %v1518 = vpack.c.b16 %v1030, %v1022
        %v1519 = vpack.c.b16 %v1039, %v1031
        %v1520 = vpack.c.b16 %v1040, %v1032
        %v1521 = vpack.c.b16 %v1041, %v1033
        %v1522 = vpack.c.b16 %v1042, %v1034
        %v1523 = vpack.c.b16 %v1043, %v1035
        %v1524 = vpack.c.b16 %v1044, %v1036
        %v1525 = vpack.c.b16 %v1045, %v1037
        %v1526 = vpack.c.b16 %v1046, %v1038
        %v1527 = vpack.c.b16 %v1055, %v1047
        %v1528 = vpack.c.b16 %v1056, %v1048
        %v1529 = vpack.c.b16 %v1057, %v1049
        %v1530 = vpack.c.b16 %v1058, %v1050
        %v1531 = vpack.c.b16 %v1059, %v1051
        %v1532 = vpack.c.b16 %v1060, %v1052
        %v1533 = vpack.c.b16 %v1061, %v1053
        %v1534 = vpack.c.b16 %v1062, %v1054
        %v1535 = vpack.c.b16 %v1071, %v1063
        %v1536 = vpack.c.b16 %v1072, %v1064
        %v1537 = vpack.c.b16 %v1073, %v1065
        %v1538 = vpack.c.b16 %v1074, %v1066
        %v1539 = vpack.c.b16 %v1075, %v1067
        %v1540 = vpack.c.b16 %v1076, %v1068
        %v1541 = vpack.c.b16 %v1077, %v1069
        %v1542 = vpack.c.b16 %v1078, %v1070
        %v1543 = vpack.c.b16 %v1087, %v1079
        %v1544 = vpack.c.b16 %v1088, %v1080
        %v1545 = vpack.c.b16 %v1089, %v1081
        %v1546 = vpack.c.b16 %v1090, %v1082
        %v1547 = vpack.c.b16 %v1091, %v1083
        %v1548 = vpack.c.b16 %v1092, %v1084
        %v1549 = vpack.c.b16 %v1093, %v1085
        %v1550 = vpack.c.b16 %v1094, %v1086
        %v1551 = vpack.c.b16 %v1103, %v1095
        %v1552 = vpack.c.b16 %v1104, %v1096
        %v1553 = vpack.c.b16 %v1105, %v1097
        %v1554 = vpack.c.b16 %v1106, %v1098
        %v1555 = vpack.c.b16 %v1107, %v1099
        %v1556 = vpack.c.b16 %v1108, %v1100
        %v1557 = vpack.c.b16 %v1109, %v1101
        %v1558 = vpack.c.b16 %v1110, %v1102
        %v1559 = vpack.c.b16 %v1119, %v1111
        %v1560 = vpack.c.b16 %v1120, %v1112
        %v1561 = vpack.c.b16 %v1121, %v1113
        %v1562 = vpack.c.b16 %v1122, %v1114
        %v1563 = vpack.c.b16 %v1123, %v1115
        %v1564 = vpack.c.b16 %v1124, %v1116
        %v1565 = vpack.c.b16 %v1125, %v1117
        %v1566 = vpack.c.b16 %v1126, %v1118
        %v1567 = vpack.c.b16 %v1135, %v1127
        %v1568 = vpack.c.b16 %v1136, %v1128
        %v1569 = vpack.c.b16 %v1137, %v1129
        %v1570 = vpack.c.b16 %v1138, %v1130
        %v1571 = vpack.c.b16 %v1139, %v1131
        %v1572 = vpack.c.b16 %v1140, %v1132
        %v1573 = vpack.c.b16 %v1141, %v1133
        %v1574 = vpack.c.b16 %v1142, %v1134
        %v1575 = vpack.c.b16 %v1151, %v1143
        %v1576 = vpack.c.b16 %v1152, %v1144
        %v1577 = vpack.c.b16 %v1153, %v1145
        %v1578 = vpack.c.b16 %v1154, %v1146
        %v1579 = vpack.c.b16 %v1155, %v1147
        %v1580 = vpack.c.b16 %v1156, %v1148
        %v1581 = vpack.c.b16 %v1157, %v1149
        %v1582 = vpack.c.b16 %v1158, %v1150
        %v1583 = vpack.c.b16 %v1167, %v1159
        %v1584 = vpack.c.b16 %v1168, %v1160
        %v1585 = vpack.c.b16 %v1169, %v1161
        %v1586 = vpack.c.b16 %v1170, %v1162
        %v1587 = vpack.c.b16 %v1171, %v1163
        %v1588 = vpack.c.b16 %v1172, %v1164
        %v1589 = vpack.c.b16 %v1173, %v1165
        %v1590 = vpack.c.b16 %v1174, %v1166
        %v1591 = vpack.c.b16 %v1183, %v1175
        %v1592 = vpack.c.b16 %v1184, %v1176
        %v1593 = vpack.c.b16 %v1185, %v1177
        %v1594 = vpack.c.b16 %v1186, %v1178
        %v1595 = vpack.c.b16 %v1187, %v1179
        %v1596 = vpack.c.b16 %v1188, %v1180
        %v1597 = vpack.c.b16 %v1189, %v1181
        %v1598 = vpack.c.b16 %v1190, %v1182
        %v1599 = vpack.c.b16 %v1199, %v1191
        %v1600 = vpack.c.b16 %v1200, %v1192
        %v1601 = vpack.c.b16 %v1201, %v1193
        %v1602 = vpack.c.b16 %v1202, %v1194
        %v1603 = vpack.c.b16 %v1203, %v1195
        %v1604 = vpack.c.b16 %v1204, %v1196
        %v1605 = vpack.c.b16 %v1205, %v1197
        %v1606 = vpack.c.b16 %v1206, %v1198
        %v1607 = vpack.c.b16 %v1215, %v1207
        %v1608 = vpack.c.b16 %v1216, %v1208
        %v1609 = vpack.c.b16 %v1217, %v1209
        %v1610 = vpack.c.b16 %v1218, %v1210
        %v1611 = vpack.c.b16 %v1219, %v1211
        %v1612 = vpack.c.b16 %v1220, %v1212
        %v1613 = vpack.c.b16 %v1221, %v1213
        %v1614 = vpack.c.b16 %v1222, %v1214
        %v1615 = vpack.c.b16 %v1231, %v1223
        %v1616 = vpack.c.b16 %v1232, %v1224
        %v1617 = vpack.c.b16 %v1233, %v1225
        %v1618 = vpack.c.b16 %v1234, %v1226
        %v1619 = vpack.c.b16 %v1235, %v1227
        %v1620 = vpack.c.b16 %v1236, %v1228
        %v1621 = vpack.c.b16 %v1237, %v1229
        %v1622 = vpack.c.b16 %v1238, %v1230
        %v1623 = vpack.c.b16 %v1247, %v1239
        %v1624 = vpack.c.b16 %v1248, %v1240
        %v1625 = vpack.c.b16 %v1249, %v1241
        %v1626 = vpack.c.b16 %v1250, %v1242
        %v1627 = vpack.c.b16 %v1251, %v1243
        %v1628 = vpack.c.b16 %v1252, %v1244
        %v1629 = vpack.c.b16 %v1253, %v1245
        %v1630 = vpack.c.b16 %v1254, %v1246
        %v1631 = vpack.c.b16 %v1263, %v1255
        %v1632 = vpack.c.b16 %v1264, %v1256
        %v1633 = vpack.c.b16 %v1265, %v1257
        %v1634 = vpack.c.b16 %v1266, %v1258
        %v1635 = vpack.c.b16 %v1267, %v1259
        %v1636 = vpack.c.b16 %v1268, %v1260
        %v1637 = vpack.c.b16 %v1269, %v1261
        %v1638 = vpack.c.b16 %v1270, %v1262
        %v1639 = vpack.c.b16 %v1279, %v1271
        %v1640 = vpack.c.b16 %v1280, %v1272
        %v1641 = vpack.c.b16 %v1281, %v1273
        %v1642 = vpack.c.b16 %v1282, %v1274
        %v1643 = vpack.c.b16 %v1283, %v1275
        %v1644 = vpack.c.b16 %v1284, %v1276
        %v1645 = vpack.c.b16 %v1285, %v1277
        %v1646 = vpack.c.b16 %v1286, %v1278
        %v1647 = vpack.c.b16 %v1295, %v1287
        %v1648 = vpack.c.b16 %v1296, %v1288
        %v1649 = vpack.c.b16 %v1297, %v1289
        %v1650 = vpack.c.b16 %v1298, %v1290
        %v1651 = vpack.c.b16 %v1299, %v1291
        %v1652 = vpack.c.b16 %v1300, %v1292
        %v1653 = vpack.c.b16 %v1301, %v1293
        %v1654 = vpack.c.b16 %v1302, %v1294
        %v1655 = vpack.c.b16 %v1311, %v1303
        %v1656 = vpack.c.b16 %v1312, %v1304
        %v1657 = vpack.c.b16 %v1313, %v1305
        %v1658 = vpack.c.b16 %v1314, %v1306
        %v1659 = vpack.c.b16 %v1315, %v1307
        %v1660 = vpack.c.b16 %v1316, %v1308
        %v1661 = vpack.c.b16 %v1317, %v1309
        %v1662 = vpack.c.b16 %v1318, %v1310
        %v1663 = vpack.c.b16 %v1327, %v1319
        %v1664 = vpack.c.b16 %v1328, %v1320
        %v1665 = vpack.c.b16 %v1329, %v1321
        %v1666 = vpack.c.b16 %v1330, %v1322
        %v1667 = vpack.c.b16 %v1331, %v1323
        %v1668 = vpack.c.b16 %v1332, %v1324
        %v1669 = vpack.c.b16 %v1333, %v1325
        %v1670 = vpack.c.b16 %v1334, %v1326
        %v1671 = vpack.c.b16 %v1343, %v1335
        %v1672 = vpack.c.b16 %v1344, %v1336
        %v1673 = vpack.c.b16 %v1345, %v1337
        %v1674 = vpack.c.b16 %v1346, %v1338
        %v1675 = vpack.c.b16 %v1347, %v1339
        %v1676 = vpack.c.b16 %v1348, %v1340
        %v1677 = vpack.c.b16 %v1349, %v1341
        %v1678 = vpack.c.b16 %v1350, %v1342
        %v1679 = vpack.c.b16 %v1359, %v1351
        %v1680 = vpack.c.b16 %v1360, %v1352
        %v1681 = vpack.c.b16 %v1361, %v1353
        %v1682 = vpack.c.b16 %v1362, %v1354
        %v1683 = vpack.c.b16 %v1363, %v1355
        %v1684 = vpack.c.b16 %v1364, %v1356
        %v1685 = vpack.c.b16 %v1365, %v1357
        %v1686 = vpack.c.b16 %v1366, %v1358
        %v1687 = vpack.c.b16 %v1375, %v1367
        %v1688 = vpack.c.b16 %v1376, %v1368
        %v1689 = vpack.c.b16 %v1377, %v1369
        %v1690 = vpack.c.b16 %v1378, %v1370
        %v1691 = vpack.c.b16 %v1379, %v1371
        %v1692 = vpack.c.b16 %v1380, %v1372
        %v1693 = vpack.c.b16 %v1381, %v1373
        %v1694 = vpack.c.b16 %v1382, %v1374
        %v1695 = vpack.c.b16 %v1391, %v1383
        %v1696 = vpack.c.b16 %v1392, %v1384
        %v1697 = vpack.c.b16 %v1393, %v1385
        %v1698 = vpack.c.b16 %v1394, %v1386
        %v1699 = vpack.c.b16 %v1395, %v1387
        %v1700 = vpack.c.b16 %v1396, %v1388
        %v1701 = vpack.c.b16 %v1397, %v1389
        %v1702 = vpack.c.b16 %v1398, %v1390
        %v1703 = vpack.c.b16 %v1407, %v1399
        %v1704 = vpack.c.b16 %v1408, %v1400
        %v1705 = vpack.c.b16 %v1409, %v1401
        %v1706 = vpack.c.b16 %v1410, %v1402
        %v1707 = vpack.c.b16 %v1411, %v1403
        %v1708 = vpack.c.b16 %v1412, %v1404
        %v1709 = vpack.c.b16 %v1413, %v1405
        %v1710 = vpack.c.b16 %v1414, %v1406
        %v1711 = vpack.c.b16 %v1423, %v1415
        %v1712 = vpack.c.b16 %v1424, %v1416
        %v1713 = vpack.c.b16 %v1425, %v1417
        %v1714 = vpack.c.b16 %v1426, %v1418
        %v1715 = vpack.c.b16 %v1427, %v1419
        %v1716 = vpack.c.b16 %v1428, %v1420
        %v1717 = vpack.c.b16 %v1429, %v1421
        %v1718 = vpack.c.b16 %v1430, %v1422
        %v1719 = vpack.c.b16 %v1439, %v1431
        %v1720 = vpack.c.b16 %v1440, %v1432
        %v1721 = vpack.c.b16 %v1441, %v1433
        %v1722 = vpack.c.b16 %v1442, %v1434
        %v1723 = vpack.c.b16 %v1443, %v1435
        %v1724 = vpack.c.b16 %v1444, %v1436
        %v1725 = vpack.c.b16 %v1445, %v1437
        %v1726 = vpack.c.b16 %v1446, %v1438
        %v1727 = vpack.c.b16 %v1455, %v1447
        %v1728 = vpack.c.b16 %v1456, %v1448
        %v1729 = vpack.c.b16 %v1457, %v1449
        %v1730 = vpack.c.b16 %v1458, %v1450
        %v1731 = vpack.c.b16 %v1459, %v1451
        %v1732 = vpack.c.b16 %v1460, %v1452
        %v1733 = vpack.c.b16 %v1461, %v1453
        %v1734 = vpack.c.b16 %v1462, %v1454
        %v1735 = vpack.c.b16 %v1471, %v1463
        %v1736 = vpack.c.b16 %v1472, %v1464
        %v1737 = vpack.c.b16 %v1473, %v1465
        %v1738 = vpack.c.b16 %v1474, %v1466
        %v1739 = vpack.c.b16 %v1475, %v1467
        %v1740 = vpack.c.b16 %v1476, %v1468
        %v1741 = vpack.c.b16 %v1477, %v1469
        %v1742 = vpack.c.b16 %v1478, %v1470
        %v1743 = vpack.c.b16 %v1487, %v1479
        %v1744 = vpack.c.b16 %v1488, %v1480
        %v1745 = vpack.c.b16 %v1489, %v1481
        %v1746 = vpack.c.b16 %v1490, %v1482
        %v1747 = vpack.c.b16 %v1491, %v1483
        %v1748 = vpack.c.b16 %v1492, %v1484
        %v1749 = vpack.c.b16 %v1493, %v1485
        %v1750 = vpack.c.b16 %v1494, %v1486
        %2007 = vmatprep.subr.bf16.mxu0 %v1496
        %2008 = vmatpush1.bf16.msra.mxu0 %v1495
        %2009 = vmatprep.subr.bf16.mxu0 %v1504
        %2010 = vmatpush1.bf16.msra.mxu0 %v1503
        %2011 = vmatprep.subr.bf16.mxu0 %v1512
        %2012 = vmatpush1.bf16.msra.mxu0 %v1511
        %2013 = vmatprep.subr.bf16.mxu0 %v1520
        %2014 = vmatpush1.bf16.msra.mxu0 %v1519
        %2015 = vmatprep.subr.bf16.mxu0 %v1528
        %2016 = vmatpush1.bf16.msra.mxu0 %v1527
        %2017 = vmatprep.subr.bf16.mxu0 %v1536
        %2018 = vmatpush1.bf16.msra.mxu0 %v1535
        %2019 = vmatprep.subr.bf16.mxu0 %v1544
        %2020 = vmatpush1.bf16.msra.mxu0 %v1543
        %2021 = vmatprep.subr.bf16.mxu0 %v1552
        %2022 = vmatpush1.bf16.msra.mxu0 %v1551
        %2023 = vmatprep.subr.bf16.mxu0 %v1560
        %2024 = vmatpush1.bf16.msra.mxu0 %v1559
        %2025 = vmatprep.subr.bf16.mxu0 %v1568
        %2026 = vmatpush1.bf16.msra.mxu0 %v1567
        %2027 = vmatprep.subr.bf16.mxu0 %v1576
        %2028 = vmatpush1.bf16.msra.mxu0 %v1575
        %2029 = vmatprep.subr.bf16.mxu0 %v1584
        %2030 = vmatpush1.bf16.msra.mxu0 %v1583
        %2031 = vmatprep.subr.bf16.mxu0 %v1592
        %2032 = vmatpush1.bf16.msra.mxu0 %v1591
        %2033 = vmatprep.subr.bf16.mxu0 %v1600
        %2034 = vmatpush1.bf16.msra.mxu0 %v1599
        %2035 = vmatprep.subr.bf16.mxu0 %v1608
        %2036 = vmatpush1.bf16.msra.mxu0 %v1607
        %2037 = vmatprep.subr.bf16.mxu0 %v1616
        %2038 = vmatpush1.bf16.msra.mxu0 %v1615
        %2039 = vmatprep.mubr.bf16.mxu0 %v468
        %2040 = vmatmul.mubr.bf16.gmra.mrb[0].mxu0 %v467
        %v2041 = vpop.f32.mrb[0].mxu0
        %v2042 = vadd.f32 0.0, %v2041
        %v2043 = vpop.f32.mrb[0].mxu0
        %v2044 = vadd.f32 0.0, %v2043
        %v2045 = vpop.f32.mrb[0].mxu0
        %v2046 = vpop.f32.mrb[0].mxu0
        %2047 = vdwg.mxu0
        %2048 = vmatprep.subr.bf16.mxu0 %v1624
        %2049 = vmatpush1.bf16.msra.mxu0 %v1623
        %2050 = vmatprep.subr.bf16.mxu0 %v1632
        %2051 = vmatpush1.bf16.msra.mxu0 %v1631
        %2052 = vmatprep.subr.bf16.mxu0 %v1640
        %2053 = vmatpush1.bf16.msra.mxu0 %v1639
        %2054 = vmatprep.subr.bf16.mxu0 %v1648
        %2055 = vmatpush1.bf16.msra.mxu0 %v1647
        %2056 = vmatprep.subr.bf16.mxu0 %v1656
        %2057 = vmatpush1.bf16.msra.mxu0 %v1655
        %2058 = vmatprep.subr.bf16.mxu0 %v1664
        %2059 = vmatpush1.bf16.msra.mxu0 %v1663
        %2060 = vmatprep.subr.bf16.mxu0 %v1672
        %2061 = vmatpush1.bf16.msra.mxu0 %v1671
        %2062 = vmatprep.subr.bf16.mxu0 %v1680
        %2063 = vmatpush1.bf16.msra.mxu0 %v1679
        %2064 = vmatprep.subr.bf16.mxu0 %v1688
        %2065 = vmatpush1.bf16.msra.mxu0 %v1687
        %2066 = vmatprep.subr.bf16.mxu0 %v1696
        %2067 = vmatpush1.bf16.msra.mxu0 %v1695
        %2068 = vmatprep.subr.bf16.mxu0 %v1704
        %2069 = vmatpush1.bf16.msra.mxu0 %v1703
        %2070 = vmatprep.subr.bf16.mxu0 %v1712
        %2071 = vmatpush1.bf16.msra.mxu0 %v1711
        %2072 = vmatprep.subr.bf16.mxu0 %v1720
        %2073 = vmatpush1.bf16.msra.mxu0 %v1719
        %2074 = vmatprep.subr.bf16.mxu0 %v1728
        %2075 = vmatpush1.bf16.msra.mxu0 %v1727
        %2076 = vmatprep.subr.bf16.mxu0 %v1736
        %2077 = vmatpush1.bf16.msra.mxu0 %v1735
        %2078 = vmatprep.subr.bf16.mxu0 %v1744
        %2079 = vmatpush1.bf16.msra.mxu0 %v1743
        %2080 = vmatprep.mubr.bf16.mxu0 %v470
        %2081 = vmatmul.mubr.bf16.gmra.mrb[0].mxu0 %v469
        %v2082 = vpop.f32.mrb[0].mxu0
        %v2083 = vadd.f32 %v2042, %v2082
        %v2084 = vpop.f32.mrb[0].mxu0
        %v2085 = vadd.f32 %v2044, %v2084
        %v2086 = vpop.f32.mrb[0].mxu0
        %v2087 = vpop.f32.mrb[0].mxu0
        %2088 = vdwg.mxu0
        %2089 = vmatprep.subr.bf16.mxu0 %v1498
        %2090 = vmatpush1.bf16.msra.mxu0 %v1497
        %2091 = vmatprep.subr.bf16.mxu0 %v1506
        %2092 = vmatpush1.bf16.msra.mxu0 %v1505
        %2093 = vmatprep.subr.bf16.mxu0 %v1514
        %2094 = vmatpush1.bf16.msra.mxu0 %v1513
        %2095 = vmatprep.subr.bf16.mxu0 %v1522
        %2096 = vmatpush1.bf16.msra.mxu0 %v1521
        %2097 = vmatprep.subr.bf16.mxu0 %v1530
        %2098 = vmatpush1.bf16.msra.mxu0 %v1529
        %2099 = vmatprep.subr.bf16.mxu0 %v1538
        %2100 = vmatpush1.bf16.msra.mxu0 %v1537
        %2101 = vmatprep.subr.bf16.mxu0 %v1546
        %2102 = vmatpush1.bf16.msra.mxu0 %v1545
        %2103 = vmatprep.subr.bf16.mxu0 %v1554
        %2104 = vmatpush1.bf16.msra.mxu0 %v1553
        %2105 = vmatprep.subr.bf16.mxu0 %v1562
        %2106 = vmatpush1.bf16.msra.mxu0 %v1561
        %2107 = vmatprep.subr.bf16.mxu0 %v1570
        %2108 = vmatpush1.bf16.msra.mxu0 %v1569
        %2109 = vmatprep.subr.bf16.mxu0 %v1578
        %2110 = vmatpush1.bf16.msra.mxu0 %v1577
        %2111 = vmatprep.subr.bf16.mxu0 %v1586
        %2112 = vmatpush1.bf16.msra.mxu0 %v1585
        %2113 = vmatprep.subr.bf16.mxu0 %v1594
        %2114 = vmatpush1.bf16.msra.mxu0 %v1593
        %2115 = vmatprep.subr.bf16.mxu0 %v1602
        %2116 = vmatpush1.bf16.msra.mxu0 %v1601
        %2117 = vmatprep.subr.bf16.mxu0 %v1610
        %2118 = vmatpush1.bf16.msra.mxu0 %v1609
        %2119 = vmatprep.subr.bf16.mxu0 %v1618
        %2120 = vmatpush1.bf16.msra.mxu0 %v1617
        %2121 = vmatprep.mubr.bf16.mxu0 %v468
        %2122 = vmatmul.mubr.bf16.gmra.mrb[0].mxu0 %v467
        %v2123 = vpop.f32.mrb[0].mxu0
        %v2124 = vadd.f32 0.0, %v2123
        %v2125 = vpop.f32.mrb[0].mxu0
        %v2126 = vadd.f32 0.0, %v2125
        %v2127 = vpop.f32.mrb[0].mxu0
        %v2128 = vpop.f32.mrb[0].mxu0
        %2129 = vdwg.mxu0
        %2130 = vmatprep.subr.bf16.mxu0 %v1626
        %2131 = vmatpush1.bf16.msra.mxu0 %v1625
        %2132 = vmatprep.subr.bf16.mxu0 %v1634
        %2133 = vmatpush1.bf16.msra.mxu0 %v1633
        %2134 = vmatprep.subr.bf16.mxu0 %v1642
        %2135 = vmatpush1.bf16.msra.mxu0 %v1641
        %2136 = vmatprep.subr.bf16.mxu0 %v1650
        %2137 = vmatpush1.bf16.msra.mxu0 %v1649
        %2138 = vmatprep.subr.bf16.mxu0 %v1658
        %2139 = vmatpush1.bf16.msra.mxu0 %v1657
        %2140 = vmatprep.subr.bf16.mxu0 %v1666
        %2141 = vmatpush1.bf16.msra.mxu0 %v1665
        %2142 = vmatprep.subr.bf16.mxu0 %v1674
        %2143 = vmatpush1.bf16.msra.mxu0 %v1673
        %2144 = vmatprep.subr.bf16.mxu0 %v1682
        %2145 = vmatpush1.bf16.msra.mxu0 %v1681
        %2146 = vmatprep.subr.bf16.mxu0 %v1690
        %2147 = vmatpush1.bf16.msra.mxu0 %v1689
        %2148 = vmatprep.subr.bf16.mxu0 %v1698
        %2149 = vmatpush1.bf16.msra.mxu0 %v1697
        %2150 = vmatprep.subr.bf16.mxu0 %v1706
        %2151 = vmatpush1.bf16.msra.mxu0 %v1705
        %2152 = vmatprep.subr.bf16.mxu0 %v1714
        %2153 = vmatpush1.bf16.msra.mxu0 %v1713
        %2154 = vmatprep.subr.bf16.mxu0 %v1722
        %2155 = vmatpush1.bf16.msra.mxu0 %v1721
        %2156 = vmatprep.subr.bf16.mxu0 %v1730
        %2157 = vmatpush1.bf16.msra.mxu0 %v1729
        %2158 = vmatprep.subr.bf16.mxu0 %v1738
        %2159 = vmatpush1.bf16.msra.mxu0 %v1737
        %2160 = vmatprep.subr.bf16.mxu0 %v1746
        %2161 = vmatpush1.bf16.msra.mxu0 %v1745
        %2162 = vmatprep.mubr.bf16.mxu0 %v470
        %2163 = vmatmul.mubr.bf16.gmra.mrb[0].mxu0 %v469
        %v2164 = vpop.f32.mrb[0].mxu0
        %v2165 = vadd.f32 %v2124, %v2164
        %v2166 = vpop.f32.mrb[0].mxu0
        %v2167 = vadd.f32 %v2126, %v2166
        %v2168 = vpop.f32.mrb[0].mxu0
        %v2169 = vpop.f32.mrb[0].mxu0
        %2170 = vdwg.mxu0
        %2171 = vmatprep.subr.bf16.mxu0 %v1500
        %2172 = vmatpush1.bf16.msra.mxu0 %v1499
        %2173 = vmatprep.subr.bf16.mxu0 %v1508
        %2174 = vmatpush1.bf16.msra.mxu0 %v1507
        %2175 = vmatprep.subr.bf16.mxu0 %v1516
        %2176 = vmatpush1.bf16.msra.mxu0 %v1515
        %2177 = vmatprep.subr.bf16.mxu0 %v1524
        %2178 = vmatpush1.bf16.msra.mxu0 %v1523
        %2179 = vmatprep.subr.bf16.mxu0 %v1532
        %2180 = vmatpush1.bf16.msra.mxu0 %v1531
        %2181 = vmatprep.subr.bf16.mxu0 %v1540
        %2182 = vmatpush1.bf16.msra.mxu0 %v1539
        %2183 = vmatprep.subr.bf16.mxu0 %v1548
        %2184 = vmatpush1.bf16.msra.mxu0 %v1547
        %2185 = vmatprep.subr.bf16.mxu0 %v1556
        %2186 = vmatpush1.bf16.msra.mxu0 %v1555
        %2187 = vmatprep.subr.bf16.mxu0 %v1564
        %2188 = vmatpush1.bf16.msra.mxu0 %v1563
        %2189 = vmatprep.subr.bf16.mxu0 %v1572
        %2190 = vmatpush1.bf16.msra.mxu0 %v1571
        %2191 = vmatprep.subr.bf16.mxu0 %v1580
        %2192 = vmatpush1.bf16.msra.mxu0 %v1579
        %2193 = vmatprep.subr.bf16.mxu0 %v1588
        %2194 = vmatpush1.bf16.msra.mxu0 %v1587
        %2195 = vmatprep.subr.bf16.mxu0 %v1596
        %2196 = vmatpush1.bf16.msra.mxu0 %v1595
        %2197 = vmatprep.subr.bf16.mxu0 %v1604
        %2198 = vmatpush1.bf16.msra.mxu0 %v1603
        %2199 = vmatprep.subr.bf16.mxu0 %v1612
        %2200 = vmatpush1.bf16.msra.mxu0 %v1611
        %2201 = vmatprep.subr.bf16.mxu0 %v1620
        %2202 = vmatpush1.bf16.msra.mxu0 %v1619
        %2203 = vmatprep.mubr.bf16.mxu0 %v468
        %2204 = vmatmul.mubr.bf16.gmra.mrb[0].mxu0 %v467
        %v2205 = vpop.f32.mrb[0].mxu0
        %v2206 = vadd.f32 0.0, %v2205
        %v2207 = vpop.f32.mrb[0].mxu0
        %v2208 = vadd.f32 0.0, %v2207
        %v2209 = vpop.f32.mrb[0].mxu0
        %v2210 = vpop.f32.mrb[0].mxu0
        %2211 = vdwg.mxu0
        %2212 = vmatprep.subr.bf16.mxu0 %v1628
        %2213 = vmatpush1.bf16.msra.mxu0 %v1627
        %2214 = vmatprep.subr.bf16.mxu0 %v1636
        %2215 = vmatpush1.bf16.msra.mxu0 %v1635
        %2216 = vmatprep.subr.bf16.mxu0 %v1644
        %2217 = vmatpush1.bf16.msra.mxu0 %v1643
        %2218 = vmatprep.subr.bf16.mxu0 %v1652
        %2219 = vmatpush1.bf16.msra.mxu0 %v1651
        %2220 = vmatprep.subr.bf16.mxu0 %v1660
        %2221 = vmatpush1.bf16.msra.mxu0 %v1659
        %2222 = vmatprep.subr.bf16.mxu0 %v1668
        %2223 = vmatpush1.bf16.msra.mxu0 %v1667
        %2224 = vmatprep.subr.bf16.mxu0 %v1676
        %2225 = vmatpush1.bf16.msra.mxu0 %v1675
        %2226 = vmatprep.subr.bf16.mxu0 %v1684
        %2227 = vmatpush1.bf16.msra.mxu0 %v1683
        %2228 = vmatprep.subr.bf16.mxu0 %v1692
        %2229 = vmatpush1.bf16.msra.mxu0 %v1691
        %2230 = vmatprep.subr.bf16.mxu0 %v1700
        %2231 = vmatpush1.bf16.msra.mxu0 %v1699
        %2232 = vmatprep.subr.bf16.mxu0 %v1708
        %2233 = vmatpush1.bf16.msra.mxu0 %v1707
        %2234 = vmatprep.subr.bf16.mxu0 %v1716
        %2235 = vmatpush1.bf16.msra.mxu0 %v1715
        %2236 = vmatprep.subr.bf16.mxu0 %v1724
        %2237 = vmatpush1.bf16.msra.mxu0 %v1723
        %2238 = vmatprep.subr.bf16.mxu0 %v1732
        %2239 = vmatpush1.bf16.msra.mxu0 %v1731
        %2240 = vmatprep.subr.bf16.mxu0 %v1740
        %2241 = vmatpush1.bf16.msra.mxu0 %v1739
        %2242 = vmatprep.subr.bf16.mxu0 %v1748
        %2243 = vmatpush1.bf16.msra.mxu0 %v1747
        %2244 = vmatprep.mubr.bf16.mxu0 %v470
        %2245 = vmatmul.mubr.bf16.gmra.mrb[0].mxu0 %v469
        %v2246 = vpop.f32.mrb[0].mxu0
        %v2247 = vadd.f32 %v2206, %v2246
        %v2248 = vpop.f32.mrb[0].mxu0
        %v2249 = vadd.f32 %v2208, %v2248
        %v2250 = vpop.f32.mrb[0].mxu0
        %v2251 = vpop.f32.mrb[0].mxu0
        %2252 = vdwg.mxu0
        %2253 = vmatprep.subr.bf16.mxu0 %v1502
        %2254 = vmatpush1.bf16.msra.mxu0 %v1501
        %2255 = vmatprep.subr.bf16.mxu0 %v1510
        %2256 = vmatpush1.bf16.msra.mxu0 %v1509
        %2257 = vmatprep.subr.bf16.mxu0 %v1518
        %2258 = vmatpush1.bf16.msra.mxu0 %v1517
        %2259 = vmatprep.subr.bf16.mxu0 %v1526
        %2260 = vmatpush1.bf16.msra.mxu0 %v1525
        %2261 = vmatprep.subr.bf16.mxu0 %v1534
        %2262 = vmatpush1.bf16.msra.mxu0 %v1533
        %2263 = vmatprep.subr.bf16.mxu0 %v1542
        %2264 = vmatpush1.bf16.msra.mxu0 %v1541
        %2265 = vmatprep.subr.bf16.mxu0 %v1550
        %2266 = vmatpush1.bf16.msra.mxu0 %v1549
        %2267 = vmatprep.subr.bf16.mxu0 %v1558
        %2268 = vmatpush1.bf16.msra.mxu0 %v1557
        %2269 = vmatprep.subr.bf16.mxu0 %v1566
        %2270 = vmatpush1.bf16.msra.mxu0 %v1565
        %2271 = vmatprep.subr.bf16.mxu0 %v1574
        %2272 = vmatpush1.bf16.msra.mxu0 %v1573
        %2273 = vmatprep.subr.bf16.mxu0 %v1582
        %2274 = vmatpush1.bf16.msra.mxu0 %v1581
        %2275 = vmatprep.subr.bf16.mxu0 %v1590
        %2276 = vmatpush1.bf16.msra.mxu0 %v1589
        %2277 = vmatprep.subr.bf16.mxu0 %v1598
        %2278 = vmatpush1.bf16.msra.mxu0 %v1597
        %2279 = vmatprep.subr.bf16.mxu0 %v1606
        %2280 = vmatpush1.bf16.msra.mxu0 %v1605
        %2281 = vmatprep.subr.bf16.mxu0 %v1614
        %2282 = vmatpush1.bf16.msra.mxu0 %v1613
        %2283 = vmatprep.subr.bf16.mxu0 %v1622
        %2284 = vmatpush1.bf16.msra.mxu0 %v1621
        %2285 = vmatprep.mubr.bf16.mxu0 %v468
        %2286 = vmatmul.mubr.bf16.gmra.mrb[0].mxu0 %v467
        %v2287 = vpop.f32.mrb[0].mxu0
        %v2288 = vadd.f32 0.0, %v2287
        %v2289 = vpop.f32.mrb[0].mxu0
        %v2290 = vadd.f32 0.0, %v2289
        %v2291 = vpop.f32.mrb[0].mxu0
        %v2292 = vpop.f32.mrb[0].mxu0
        %2293 = vdwg.mxu0
        %2294 = vmatprep.subr.bf16.mxu0 %v1630
        %2295 = vmatpush1.bf16.msra.mxu0 %v1629
        %2296 = vmatprep.subr.bf16.mxu0 %v1638
        %2297 = vmatpush1.bf16.msra.mxu0 %v1637
        %2298 = vmatprep.subr.bf16.mxu0 %v1646
        %2299 = vmatpush1.bf16.msra.mxu0 %v1645
        %2300 = vmatprep.subr.bf16.mxu0 %v1654
        %2301 = vmatpush1.bf16.msra.mxu0 %v1653
        %2302 = vmatprep.subr.bf16.mxu0 %v1662
        %2303 = vmatpush1.bf16.msra.mxu0 %v1661
        %2304 = vmatprep.subr.bf16.mxu0 %v1670
        %2305 = vmatpush1.bf16.msra.mxu0 %v1669
        %2306 = vmatprep.subr.bf16.mxu0 %v1678
        %2307 = vmatpush1.bf16.msra.mxu0 %v1677
        %2308 = vmatprep.subr.bf16.mxu0 %v1686
        %2309 = vmatpush1.bf16.msra.mxu0 %v1685
        %2310 = vmatprep.subr.bf16.mxu0 %v1694
        %2311 = vmatpush1.bf16.msra.mxu0 %v1693
        %2312 = vmatprep.subr.bf16.mxu0 %v1702
        %2313 = vmatpush1.bf16.msra.mxu0 %v1701
        %2314 = vmatprep.subr.bf16.mxu0 %v1710
        %2315 = vmatpush1.bf16.msra.mxu0 %v1709
        %2316 = vmatprep.subr.bf16.mxu0 %v1718
        %2317 = vmatpush1.bf16.msra.mxu0 %v1717
        %2318 = vmatprep.subr.bf16.mxu0 %v1726
        %2319 = vmatpush1.bf16.msra.mxu0 %v1725
        %2320 = vmatprep.subr.bf16.mxu0 %v1734
        %2321 = vmatpush1.bf16.msra.mxu0 %v1733
        %2322 = vmatprep.subr.bf16.mxu0 %v1742
        %2323 = vmatpush1.bf16.msra.mxu0 %v1741
        %2324 = vmatprep.subr.bf16.mxu0 %v1750
        %2325 = vmatpush1.bf16.msra.mxu0 %v1749
        %2326 = vmatprep.mubr.bf16.mxu0 %v470
        %2327 = vmatmul.mubr.bf16.gmra.mrb[0].mxu0 %v469
        %v2328 = vpop.f32.mrb[0].mxu0
        %v2329 = vadd.f32 %v2288, %v2328
        %v2330 = vpop.f32.mrb[0].mxu0
        %v2331 = vadd.f32 %v2290, %v2330
        %v2332 = vpop.f32.mrb[0].mxu0
        %v2333 = vpop.f32.mrb[0].mxu0
        %2334 = vdwg.mxu0
        %v2335 = vadd.f32 %v455, %v2083
        %v2336 = vadd.f32 %v456, %v2085
        %v2337 = vadd.f32 %v457, %v2165
        %v2338 = vadd.f32 %v458, %v2167
        %v2339 = vadd.f32 %v459, %v2247
        %v2340 = vadd.f32 %v460, %v2249
        %v2341 = vadd.f32 %v461, %v2329
        %v2342 = vadd.f32 %v462, %v2331
        %2343 = vst [vmem:[#allocation2] sm:$0xff] %v2335
        %2344 = vst [vmem:[#allocation2 + $0x8] sm:$0xff] %v2336
        %2345 = vst [vmem:[#allocation2 + $0x10] sm:$0xff] %v2337
        %2346 = vst [vmem:[#allocation2 + $0x18] sm:$0xff] %v2338
        %2347 = vst [vmem:[#allocation2 + $0x20] sm:$0xff] %v2339
        %2348 = vst [vmem:[#allocation2 + $0x28] sm:$0xff] %v2340
        %2349 = vst [vmem:[#allocation2 + $0x30] sm:$0xff] %v2341
        %2350 = vst [vmem:[#allocation2 + $0x38] sm:$0xff] %v2342
        %p2351 = scmp.eq.s32.totalorder %s30, 1
        // Predicated region
        $region85: #{tpu_custom_call.1} parent=51 // pred_check
          %p2352 = pneg %p2351
        $region86: #{tpu_custom_call.1} parent=51 // pred_check_branch
          %2354 = sbr.rel (%p2352) target = $region88
        $region87: #{tpu_custom_call.1} parent=51 // pred_region
          %v2355 = vld [vmem:[#allocation2] sm:$0xff]
          %v2356 = vld [vmem:[#allocation2 + $0x8] sm:$0xff]
          %v2357 = vld [vmem:[#allocation2 + $0x10] sm:$0xff]
          %v2358 = vld [vmem:[#allocation2 + $0x18] sm:$0xff]
          %v2359 = vld [vmem:[#allocation2 + $0x20] sm:$0xff]
          %v2360 = vld [vmem:[#allocation2 + $0x28] sm:$0xff]
          %v2361 = vld [vmem:[#allocation2 + $0x30] sm:$0xff]
          %v2362 = vld [vmem:[#allocation2 + $0x38] sm:$0xff]
          %v2363 = vld [vmem:[#allocation8] sm:$0xff]
          %v2365 = vlaneseq
          %v2366 = vshrl.u32 %v2365, 7
          %v2367 = vsub.s32 0, %v2366
          %v2368 = vrot.slane %v2363, %v2367
          %v2369 = vlaneseq
          %v2370 = vshrl.u32 %v2369, 7
          %v2371 = vsub.s32 1, %v2370
          %v2372 = vrot.slane %v2363, %v2371
          %v2373 = vlaneseq
          %v2374 = vshrl.u32 %v2373, 7
          %v2375 = vsub.s32 2, %v2374
          %v2376 = vrot.slane %v2363, %v2375
          %v2377 = vlaneseq
          %v2378 = vshrl.u32 %v2377, 7
          %v2379 = vsub.s32 3, %v2378
          %v2380 = vrot.slane %v2363, %v2379
          %v2381 = vlaneseq
          %v2382 = vshrl.u32 %v2381, 7
          %v2383 = vsub.s32 4, %v2382
          %v2384 = vrot.slane %v2363, %v2383
          %v2385 = vlaneseq
          %v2386 = vshrl.u32 %v2385, 7
          %v2387 = vsub.s32 5, %v2386
          %v2388 = vrot.slane %v2363, %v2387
          %v2389 = vlaneseq
          %v2390 = vshrl.u32 %v2389, 7
          %v2391 = vsub.s32 6, %v2390
          %v2392 = vrot.slane %v2363, %v2391
          %v2393 = vlaneseq
          %v2394 = vshrl.u32 %v2393, 7
          %v2395 = vsub.s32 7, %v2394
          %v2396 = vrot.slane %v2363, %v2395
          %v2405 = vadd.f32 %v2355, %v2368
          %v2406 = vadd.f32 %v2356, %v2372
          %v2407 = vadd.f32 %v2357, %v2376
          %v2408 = vadd.f32 %v2358, %v2380
          %v2409 = vadd.f32 %v2359, %v2384
          %v2410 = vadd.f32 %v2360, %v2388
          %v2411 = vadd.f32 %v2361, %v2392
          %v2412 = vadd.f32 %v2362, %v2396
          %v2413 = vmax.f32 %v2405, 0.0
          %v2414 = vmax.f32 %v2406, 0.0
          %v2415 = vmax.f32 %v2407, 0.0
          %v2416 = vmax.f32 %v2408, 0.0
          %v2417 = vmax.f32 %v2409, 0.0
          %v2418 = vmax.f32 %v2410, 0.0
          %v2419 = vmax.f32 %v2411, 0.0
          %v2420 = vmax.f32 %v2412, 0.0
          %v2421 = vpack.c.bf16 %v2413, %v2413
          %v2422 = vpack.c.bf16 %v2414, %v2414
          %v2423 = vpack.c.bf16 %v2415, %v2415
          %v2424 = vpack.c.bf16 %v2416, %v2416
          %v2425 = vpack.c.bf16 %v2417, %v2417
          %v2426 = vpack.c.bf16 %v2418, %v2418
          %v2427 = vpack.c.bf16 %v2419, %v2419
          %v2428 = vpack.c.bf16 %v2420, %v2420
          %v2429 = vld [vmem:[#allocation9] sm:$0xf]
          %v2430 = vld [vmem:[#allocation9 + $0x4] sm:$0xf]
          %v2431 = vld [vmem:[#allocation9 + $0x8] sm:$0xf]
          %v2432 = vld [vmem:[#allocation9 + $0xc] sm:$0xf]
          %v2433 = vld [vmem:[#allocation9 + $0x10] sm:$0xf]
          %v2434 = vld [vmem:[#allocation9 + $0x14] sm:$0xf]
          %v2435 = vld [vmem:[#allocation9 + $0x18] sm:$0xf]
          %v2436 = vld [vmem:[#allocation9 + $0x1c] sm:$0xf]
          %v2437 = vld [vmem:[#allocation9 + $0x20] sm:$0xf]
          %v2438 = vld [vmem:[#allocation9 + $0x24] sm:$0xf]
          %v2439 = vld [vmem:[#allocation9 + $0x28] sm:$0xf]
          %v2440 = vld [vmem:[#allocation9 + $0x2c] sm:$0xf]
          %v2441 = vld [vmem:[#allocation9 + $0x30] sm:$0xf]
          %v2442 = vld [vmem:[#allocation9 + $0x34] sm:$0xf]
          %v2443 = vld [vmem:[#allocation9 + $0x38] sm:$0xf]
          %v2444 = vld [vmem:[#allocation9 + $0x3c] sm:$0xf]
          %v2445 = vld [vmem:[#allocation9 + $0x40] sm:$0xf]
          %v2446 = vld [vmem:[#allocation9 + $0x44] sm:$0xf]
          %v2447 = vld [vmem:[#allocation9 + $0x48] sm:$0xf]
          %v2448 = vld [vmem:[#allocation9 + $0x4c] sm:$0xf]
          %v2449 = vld [vmem:[#allocation9 + $0x50] sm:$0xf]
          %v2450 = vld [vmem:[#allocation9 + $0x54] sm:$0xf]
          %v2451 = vld [vmem:[#allocation9 + $0x58] sm:$0xf]
          %v2452 = vld [vmem:[#allocation9 + $0x5c] sm:$0xf]
          %v2453 = vld [vmem:[#allocation9 + $0x60] sm:$0xf]
          %v2454 = vld [vmem:[#allocation9 + $0x64] sm:$0xf]
          %v2455 = vld [vmem:[#allocation9 + $0x68] sm:$0xf]
          %v2456 = vld [vmem:[#allocation9 + $0x6c] sm:$0xf]
          %v2457 = vld [vmem:[#allocation9 + $0x70] sm:$0xf]
          %v2458 = vld [vmem:[#allocation9 + $0x74] sm:$0xf]
          %v2459 = vld [vmem:[#allocation9 + $0x78] sm:$0xf]
          %v2460 = vld [vmem:[#allocation9 + $0x7c] sm:$0xf]
          %v2461 = vld [vmem:[#allocation9 + $0x80] sm:$0xf]
          %v2462 = vld [vmem:[#allocation9 + $0x84] sm:$0xf]
          %v2463 = vld [vmem:[#allocation9 + $0x88] sm:$0xf]
          %v2464 = vld [vmem:[#allocation9 + $0x8c] sm:$0xf]
          %v2465 = vld [vmem:[#allocation9 + $0x90] sm:$0xf]
          %v2466 = vld [vmem:[#allocation9 + $0x94] sm:$0xf]
          %v2467 = vld [vmem:[#allocation9 + $0x98] sm:$0xf]
          %v2468 = vld [vmem:[#allocation9 + $0x9c] sm:$0xf]
          %v2469 = vld [vmem:[#allocation9 + $0xa0] sm:$0xf]
          %v2470 = vld [vmem:[#allocation9 + $0xa4] sm:$0xf]
          %v2471 = vld [vmem:[#allocation9 + $0xa8] sm:$0xf]
          %v2472 = vld [vmem:[#allocation9 + $0xac] sm:$0xf]
          %v2473 = vld [vmem:[#allocation9 + $0xb0] sm:$0xf]
          %v2474 = vld [vmem:[#allocation9 + $0xb4] sm:$0xf]
          %v2475 = vld [vmem:[#allocation9 + $0xb8] sm:$0xf]
          %v2476 = vld [vmem:[#allocation9 + $0xbc] sm:$0xf]
          %v2477 = vld [vmem:[#allocation9 + $0xc0] sm:$0xf]
          %v2478 = vld [vmem:[#allocation9 + $0xc4] sm:$0xf]
          %v2479 = vld [vmem:[#allocation9 + $0xc8] sm:$0xf]
          %v2480 = vld [vmem:[#allocation9 + $0xcc] sm:$0xf]
          %v2481 = vld [vmem:[#allocation9 + $0xd0] sm:$0xf]
          %v2482 = vld [vmem:[#allocation9 + $0xd4] sm:$0xf]
          %v2483 = vld [vmem:[#allocation9 + $0xd8] sm:$0xf]
          %v2484 = vld [vmem:[#allocation9 + $0xdc] sm:$0xf]
          %v2485 = vld [vmem:[#allocation9 + $0xe0] sm:$0xf]
          %v2486 = vld [vmem:[#allocation9 + $0xe4] sm:$0xf]
          %v2487 = vld [vmem:[#allocation9 + $0xe8] sm:$0xf]
          %v2488 = vld [vmem:[#allocation9 + $0xec] sm:$0xf]
          %v2489 = vld [vmem:[#allocation9 + $0xf0] sm:$0xf]
          %v2490 = vld [vmem:[#allocation9 + $0xf4] sm:$0xf]
          %v2491 = vld [vmem:[#allocation9 + $0xf8] sm:$0xf]
          %v2492 = vld [vmem:[#allocation9 + $0xfc] sm:$0xf]
          %v2493 = vld [vmem:[#allocation9 + $0x100] sm:$0xf]
          %v2494 = vld [vmem:[#allocation9 + $0x104] sm:$0xf]
          %v2495 = vld [vmem:[#allocation9 + $0x108] sm:$0xf]
          %v2496 = vld [vmem:[#allocation9 + $0x10c] sm:$0xf]
          %v2497 = vld [vmem:[#allocation9 + $0x110] sm:$0xf]
          %v2498 = vld [vmem:[#allocation9 + $0x114] sm:$0xf]
          %v2499 = vld [vmem:[#allocation9 + $0x118] sm:$0xf]
          %v2500 = vld [vmem:[#allocation9 + $0x11c] sm:$0xf]
          %v2501 = vld [vmem:[#allocation9 + $0x120] sm:$0xf]
          %v2502 = vld [vmem:[#allocation9 + $0x124] sm:$0xf]
          %v2503 = vld [vmem:[#allocation9 + $0x128] sm:$0xf]
          %v2504 = vld [vmem:[#allocation9 + $0x12c] sm:$0xf]
          %v2505 = vld [vmem:[#allocation9 + $0x130] sm:$0xf]
          %v2506 = vld [vmem:[#allocation9 + $0x134] sm:$0xf]
          %v2507 = vld [vmem:[#allocation9 + $0x138] sm:$0xf]
          %v2508 = vld [vmem:[#allocation9 + $0x13c] sm:$0xf]
          %v2509 = vld [vmem:[#allocation9 + $0x140] sm:$0xf]
          %v2510 = vld [vmem:[#allocation9 + $0x144] sm:$0xf]
          %v2511 = vld [vmem:[#allocation9 + $0x148] sm:$0xf]
          %v2512 = vld [vmem:[#allocation9 + $0x14c] sm:$0xf]
          %v2513 = vld [vmem:[#allocation9 + $0x150] sm:$0xf]
          %v2514 = vld [vmem:[#allocation9 + $0x154] sm:$0xf]
          %v2515 = vld [vmem:[#allocation9 + $0x158] sm:$0xf]
          %v2516 = vld [vmem:[#allocation9 + $0x15c] sm:$0xf]
          %v2517 = vld [vmem:[#allocation9 + $0x160] sm:$0xf]
          %v2518 = vld [vmem:[#allocation9 + $0x164] sm:$0xf]
          %v2519 = vld [vmem:[#allocation9 + $0x168] sm:$0xf]
          %v2520 = vld [vmem:[#allocation9 + $0x16c] sm:$0xf]
          %v2521 = vld [vmem:[#allocation9 + $0x170] sm:$0xf]
          %v2522 = vld [vmem:[#allocation9 + $0x174] sm:$0xf]
          %v2523 = vld [vmem:[#allocation9 + $0x178] sm:$0xf]
          %v2524 = vld [vmem:[#allocation9 + $0x17c] sm:$0xf]
          %v2525 = vld [vmem:[#allocation9 + $0x180] sm:$0xf]
          %v2526 = vld [vmem:[#allocation9 + $0x184] sm:$0xf]
          %v2527 = vld [vmem:[#allocation9 + $0x188] sm:$0xf]
          %v2528 = vld [vmem:[#allocation9 + $0x18c] sm:$0xf]
          %v2529 = vld [vmem:[#allocation9 + $0x190] sm:$0xf]
          %v2530 = vld [vmem:[#allocation9 + $0x194] sm:$0xf]
          %v2531 = vld [vmem:[#allocation9 + $0x198] sm:$0xf]
          %v2532 = vld [vmem:[#allocation9 + $0x19c] sm:$0xf]
          %v2533 = vld [vmem:[#allocation9 + $0x1a0] sm:$0xf]
          %v2534 = vld [vmem:[#allocation9 + $0x1a4] sm:$0xf]
          %v2535 = vld [vmem:[#allocation9 + $0x1a8] sm:$0xf]
          %v2536 = vld [vmem:[#allocation9 + $0x1ac] sm:$0xf]
          %v2537 = vld [vmem:[#allocation9 + $0x1b0] sm:$0xf]
          %v2538 = vld [vmem:[#allocation9 + $0x1b4] sm:$0xf]
          %v2539 = vld [vmem:[#allocation9 + $0x1b8] sm:$0xf]
          %v2540 = vld [vmem:[#allocation9 + $0x1bc] sm:$0xf]
          %v2541 = vld [vmem:[#allocation9 + $0x1c0] sm:$0xf]
          %v2542 = vld [vmem:[#allocation9 + $0x1c4] sm:$0xf]
          %v2543 = vld [vmem:[#allocation9 + $0x1c8] sm:$0xf]
          %v2544 = vld [vmem:[#allocation9 + $0x1cc] sm:$0xf]
          %v2545 = vld [vmem:[#allocation9 + $0x1d0] sm:$0xf]
          %v2546 = vld [vmem:[#allocation9 + $0x1d4] sm:$0xf]
          %v2547 = vld [vmem:[#allocation9 + $0x1d8] sm:$0xf]
          %v2548 = vld [vmem:[#allocation9 + $0x1dc] sm:$0xf]
          %v2549 = vld [vmem:[#allocation9 + $0x1e0] sm:$0xf]
          %v2550 = vld [vmem:[#allocation9 + $0x1e4] sm:$0xf]
          %v2551 = vld [vmem:[#allocation9 + $0x1e8] sm:$0xf]
          %v2552 = vld [vmem:[#allocation9 + $0x1ec] sm:$0xf]
          %v2553 = vld [vmem:[#allocation9 + $0x1f0] sm:$0xf]
          %v2554 = vld [vmem:[#allocation9 + $0x1f4] sm:$0xf]
          %v2555 = vld [vmem:[#allocation9 + $0x1f8] sm:$0xf]
          %v2556 = vld [vmem:[#allocation9 + $0x1fc] sm:$0xf]
          %v2557 = vld [vmem:[#allocation11] sm:$0x1]
          %v2559 = vlaneseq
          %v2560 = vshrl.u32 %v2559, 7
          %v2561 = vsub.s32 0, %v2560
          %v2562 = vrot.slane %v2557, %v2561
          %v2692 = vunpack.c.l.b16 %v2429
          %v2693 = vunpack.c.l.b16 %v2430
          %v2694 = vunpack.c.l.b16 %v2431
          %v2695 = vunpack.c.l.b16 %v2432
          %v2696 = vunpack.c.l.b16 %v2433
          %v2697 = vunpack.c.l.b16 %v2434
          %v2698 = vunpack.c.l.b16 %v2435
          %v2699 = vunpack.c.l.b16 %v2436
          %v2700 = vunpack.c.l.b16 %v2437
          %v2701 = vunpack.c.l.b16 %v2438
          %v2702 = vunpack.c.l.b16 %v2439
          %v2703 = vunpack.c.l.b16 %v2440
          %v2704 = vunpack.c.l.b16 %v2441
          %v2705 = vunpack.c.l.b16 %v2442
          %v2706 = vunpack.c.l.b16 %v2443
          %v2707 = vunpack.c.l.b16 %v2444
          %v2708 = vunpack.c.l.b16 %v2445
          %v2709 = vunpack.c.l.b16 %v2446
          %v2710 = vunpack.c.l.b16 %v2447
          %v2711 = vunpack.c.l.b16 %v2448
          %v2712 = vunpack.c.l.b16 %v2449
          %v2713 = vunpack.c.l.b16 %v2450
          %v2714 = vunpack.c.l.b16 %v2451
          %v2715 = vunpack.c.l.b16 %v2452
          %v2716 = vunpack.c.l.b16 %v2453
          %v2717 = vunpack.c.l.b16 %v2454
          %v2718 = vunpack.c.l.b16 %v2455
          %v2719 = vunpack.c.l.b16 %v2456
          %v2720 = vunpack.c.l.b16 %v2457
          %v2721 = vunpack.c.l.b16 %v2458
          %v2722 = vunpack.c.l.b16 %v2459
          %v2723 = vunpack.c.l.b16 %v2460
          %v2724 = vunpack.c.l.b16 %v2461
          %v2725 = vunpack.c.l.b16 %v2462
          %v2726 = vunpack.c.l.b16 %v2463
          %v2727 = vunpack.c.l.b16 %v2464
          %v2728 = vunpack.c.l.b16 %v2465
          %v2729 = vunpack.c.l.b16 %v2466
          %v2730 = vunpack.c.l.b16 %v2467
          %v2731 = vunpack.c.l.b16 %v2468
          %v2732 = vunpack.c.l.b16 %v2469
          %v2733 = vunpack.c.l.b16 %v2470
          %v2734 = vunpack.c.l.b16 %v2471
          %v2735 = vunpack.c.l.b16 %v2472
          %v2736 = vunpack.c.l.b16 %v2473
          %v2737 = vunpack.c.l.b16 %v2474
          %v2738 = vunpack.c.l.b16 %v2475
          %v2739 = vunpack.c.l.b16 %v2476
          %v2740 = vunpack.c.l.b16 %v2477
          %v2741 = vunpack.c.l.b16 %v2478
          %v2742 = vunpack.c.l.b16 %v2479
          %v2743 = vunpack.c.l.b16 %v2480
          %v2744 = vunpack.c.l.b16 %v2481
          %v2745 = vunpack.c.l.b16 %v2482
          %v2746 = vunpack.c.l.b16 %v2483
          %v2747 = vunpack.c.l.b16 %v2484
          %v2748 = vunpack.c.l.b16 %v2485
          %v2749 = vunpack.c.l.b16 %v2486
          %v2750 = vunpack.c.l.b16 %v2487
          %v2751 = vunpack.c.l.b16 %v2488
          %v2752 = vunpack.c.l.b16 %v2489
          %v2753 = vunpack.c.l.b16 %v2490
          %v2754 = vunpack.c.l.b16 %v2491
          %v2755 = vunpack.c.l.b16 %v2492
          %v2756 = vunpack.c.l.b16 %v2493
          %v2757 = vunpack.c.l.b16 %v2494
          %v2758 = vunpack.c.l.b16 %v2495
          %v2759 = vunpack.c.l.b16 %v2496
          %v2760 = vunpack.c.l.b16 %v2497
          %v2761 = vunpack.c.l.b16 %v2498
          %v2762 = vunpack.c.l.b16 %v2499
          %v2763 = vunpack.c.l.b16 %v2500
          %v2764 = vunpack.c.l.b16 %v2501
          %v2765 = vunpack.c.l.b16 %v2502
          %v2766 = vunpack.c.l.b16 %v2503
          %v2767 = vunpack.c.l.b16 %v2504
          %v2768 = vunpack.c.l.b16 %v2505
          %v2769 = vunpack.c.l.b16 %v2506
          %v2770 = vunpack.c.l.b16 %v2507
          %v2771 = vunpack.c.l.b16 %v2508
          %v2772 = vunpack.c.l.b16 %v2509
          %v2773 = vunpack.c.l.b16 %v2510
          %v2774 = vunpack.c.l.b16 %v2511
          %v2775 = vunpack.c.l.b16 %v2512
          %v2776 = vunpack.c.l.b16 %v2513
          %v2777 = vunpack.c.l.b16 %v2514
          %v2778 = vunpack.c.l.b16 %v2515
          %v2779 = vunpack.c.l.b16 %v2516
          %v2780 = vunpack.c.l.b16 %v2517
          %v2781 = vunpack.c.l.b16 %v2518
          %v2782 = vunpack.c.l.b16 %v2519
          %v2783 = vunpack.c.l.b16 %v2520
          %v2784 = vunpack.c.l.b16 %v2521
          %v2785 = vunpack.c.l.b16 %v2522
          %v2786 = vunpack.c.l.b16 %v2523
          %v2787 = vunpack.c.l.b16 %v2524
          %v2788 = vunpack.c.l.b16 %v2525
          %v2789 = vunpack.c.l.b16 %v2526
          %v2790 = vunpack.c.l.b16 %v2527
          %v2791 = vunpack.c.l.b16 %v2528
          %v2792 = vunpack.c.l.b16 %v2529
          %v2793 = vunpack.c.l.b16 %v2530
          %v2794 = vunpack.c.l.b16 %v2531
          %v2795 = vunpack.c.l.b16 %v2532
          %v2796 = vunpack.c.l.b16 %v2533
          %v2797 = vunpack.c.l.b16 %v2534
          %v2798 = vunpack.c.l.b16 %v2535
          %v2799 = vunpack.c.l.b16 %v2536
          %v2800 = vunpack.c.l.b16 %v2537
          %v2801 = vunpack.c.l.b16 %v2538
          %v2802 = vunpack.c.l.b16 %v2539
          %v2803 = vunpack.c.l.b16 %v2540
          %v2804 = vunpack.c.l.b16 %v2541
          %v2805 = vunpack.c.l.b16 %v2542
          %v2806 = vunpack.c.l.b16 %v2543
          %v2807 = vunpack.c.l.b16 %v2544
          %v2808 = vunpack.c.l.b16 %v2545
          %v2809 = vunpack.c.l.b16 %v2546
          %v2810 = vunpack.c.l.b16 %v2547
          %v2811 = vunpack.c.l.b16 %v2548
          %v2812 = vunpack.c.l.b16 %v2549
          %v2813 = vunpack.c.l.b16 %v2550
          %v2814 = vunpack.c.l.b16 %v2551
          %v2815 = vunpack.c.l.b16 %v2552
          %v2816 = vunpack.c.l.b16 %v2553
          %v2817 = vunpack.c.l.b16 %v2554
          %v2818 = vunpack.c.l.b16 %v2555
          %v2819 = vunpack.c.l.b16 %v2556
          %v2820 = vpack.c.b16 %v2693, %v2692
          %v2821 = vpack.c.b16 %v2695, %v2694
          %v2822 = vpack.c.b16 %v2697, %v2696
          %v2823 = vpack.c.b16 %v2699, %v2698
          %v2824 = vpack.c.b16 %v2701, %v2700
          %v2825 = vpack.c.b16 %v2703, %v2702
          %v2826 = vpack.c.b16 %v2705, %v2704
          %v2827 = vpack.c.b16 %v2707, %v2706
          %v2828 = vpack.c.b16 %v2709, %v2708
          %v2829 = vpack.c.b16 %v2711, %v2710
          %v2830 = vpack.c.b16 %v2713, %v2712
          %v2831 = vpack.c.b16 %v2715, %v2714
          %v2832 = vpack.c.b16 %v2717, %v2716
          %v2833 = vpack.c.b16 %v2719, %v2718
          %v2834 = vpack.c.b16 %v2721, %v2720
          %v2835 = vpack.c.b16 %v2723, %v2722
          %v2836 = vpack.c.b16 %v2725, %v2724
          %v2837 = vpack.c.b16 %v2727, %v2726
          %v2838 = vpack.c.b16 %v2729, %v2728
          %v2839 = vpack.c.b16 %v2731, %v2730
          %v2840 = vpack.c.b16 %v2733, %v2732
          %v2841 = vpack.c.b16 %v2735, %v2734
          %v2842 = vpack.c.b16 %v2737, %v2736
          %v2843 = vpack.c.b16 %v2739, %v2738
          %v2844 = vpack.c.b16 %v2741, %v2740
          %v2845 = vpack.c.b16 %v2743, %v2742
          %v2846 = vpack.c.b16 %v2745, %v2744
          %v2847 = vpack.c.b16 %v2747, %v2746
          %v2848 = vpack.c.b16 %v2749, %v2748
          %v2849 = vpack.c.b16 %v2751, %v2750
          %v2850 = vpack.c.b16 %v2753, %v2752
          %v2851 = vpack.c.b16 %v2755, %v2754
          %v2852 = vpack.c.b16 %v2757, %v2756
          %v2853 = vpack.c.b16 %v2759, %v2758
          %v2854 = vpack.c.b16 %v2761, %v2760
          %v2855 = vpack.c.b16 %v2763, %v2762
          %v2856 = vpack.c.b16 %v2765, %v2764
          %v2857 = vpack.c.b16 %v2767, %v2766
          %v2858 = vpack.c.b16 %v2769, %v2768
          %v2859 = vpack.c.b16 %v2771, %v2770
          %v2860 = vpack.c.b16 %v2773, %v2772
          %v2861 = vpack.c.b16 %v2775, %v2774
          %v2862 = vpack.c.b16 %v2777, %v2776
          %v2863 = vpack.c.b16 %v2779, %v2778
          %v2864 = vpack.c.b16 %v2781, %v2780
          %v2865 = vpack.c.b16 %v2783, %v2782
          %v2866 = vpack.c.b16 %v2785, %v2784
          %v2867 = vpack.c.b16 %v2787, %v2786
          %v2868 = vpack.c.b16 %v2789, %v2788
          %v2869 = vpack.c.b16 %v2791, %v2790
          %v2870 = vpack.c.b16 %v2793, %v2792
          %v2871 = vpack.c.b16 %v2795, %v2794
          %v2872 = vpack.c.b16 %v2797, %v2796
          %v2873 = vpack.c.b16 %v2799, %v2798
          %v2874 = vpack.c.b16 %v2801, %v2800
          %v2875 = vpack.c.b16 %v2803, %v2802
          %v2876 = vpack.c.b16 %v2805, %v2804
          %v2877 = vpack.c.b16 %v2807, %v2806
          %v2878 = vpack.c.b16 %v2809, %v2808
          %v2879 = vpack.c.b16 %v2811, %v2810
          %v2880 = vpack.c.b16 %v2813, %v2812
          %v2881 = vpack.c.b16 %v2815, %v2814
          %v2882 = vpack.c.b16 %v2817, %v2816
          %v2883 = vpack.c.b16 %v2819, %v2818
          %2948 = vmatprep.subr.bf16.mxu0 0
          %2949 = vmatpush1.bf16.msra.mxu0 %v2820
          %2950 = vmatprep.subr.bf16.mxu0 0
          %2951 = vmatpush1.bf16.msra.mxu0 %v2821
          %2952 = vmatprep.subr.bf16.mxu0 0
          %2953 = vmatpush1.bf16.msra.mxu0 %v2822
          %2954 = vmatprep.subr.bf16.mxu0 0
          %2955 = vmatpush1.bf16.msra.mxu0 %v2823
          %2956 = vmatprep.subr.bf16.mxu0 0
          %2957 = vmatpush1.bf16.msra.mxu0 %v2824
          %2958 = vmatprep.subr.bf16.mxu0 0
          %2959 = vmatpush1.bf16.msra.mxu0 %v2825
          %2960 = vmatprep.subr.bf16.mxu0 0
          %2961 = vmatpush1.bf16.msra.mxu0 %v2826
          %2962 = vmatprep.subr.bf16.mxu0 0
          %2963 = vmatpush1.bf16.msra.mxu0 %v2827
          %2964 = vmatprep.subr.bf16.mxu0 0
          %2965 = vmatpush1.bf16.msra.mxu0 %v2828
          %2966 = vmatprep.subr.bf16.mxu0 0
          %2967 = vmatpush1.bf16.msra.mxu0 %v2829
          %2968 = vmatprep.subr.bf16.mxu0 0
          %2969 = vmatpush1.bf16.msra.mxu0 %v2830
          %2970 = vmatprep.subr.bf16.mxu0 0
          %2971 = vmatpush1.bf16.msra.mxu0 %v2831
          %2972 = vmatprep.subr.bf16.mxu0 0
          %2973 = vmatpush1.bf16.msra.mxu0 %v2832
          %2974 = vmatprep.subr.bf16.mxu0 0
          %2975 = vmatpush1.bf16.msra.mxu0 %v2833
          %2976 = vmatprep.subr.bf16.mxu0 0
          %2977 = vmatpush1.bf16.msra.mxu0 %v2834
          %2978 = vmatprep.subr.bf16.mxu0 0
          %2979 = vmatpush1.bf16.msra.mxu0 %v2835
          %2980 = vmatprep.mubr.bf16.mxu0 %v2422
          %2981 = vmatmul.mubr.bf16.gmra.mrb[0].mxu0 %v2421
          %v2982 = vpop.f32.mrb[0].mxu0
          %v2983 = vadd.f32 %v2562, %v2982
          %v2984 = vpop.f32.mrb[0].mxu0
          %v2985 = vpop.f32.mrb[0].mxu0
          %v2986 = vpop.f32.mrb[0].mxu0
          %2987 = vdwg.mxu0
          %2988 = vmatprep.subr.bf16.mxu0 0
          %2989 = vmatpush1.bf16.msra.mxu0 %v2836
          %2990 = vmatprep.subr.bf16.mxu0 0
          %2991 = vmatpush1.bf16.msra.mxu0 %v2837
          %2992 = vmatprep.subr.bf16.mxu0 0
          %2993 = vmatpush1.bf16.msra.mxu0 %v2838
          %2994 = vmatprep.subr.bf16.mxu0 0
          %2995 = vmatpush1.bf16.msra.mxu0 %v2839
          %2996 = vmatprep.subr.bf16.mxu0 0
          %2997 = vmatpush1.bf16.msra.mxu0 %v2840
          %2998 = vmatprep.subr.bf16.mxu0 0
          %2999 = vmatpush1.bf16.msra.mxu0 %v2841
          %3000 = vmatprep.subr.bf16.mxu0 0
          %3001 = vmatpush1.bf16.msra.mxu0 %v2842
          %3002 = vmatprep.subr.bf16.mxu0 0
          %3003 = vmatpush1.bf16.msra.mxu0 %v2843
          %3004 = vmatprep.subr.bf16.mxu0 0
          %3005 = vmatpush1.bf16.msra.mxu0 %v2844
          %3006 = vmatprep.subr.bf16.mxu0 0
          %3007 = vmatpush1.bf16.msra.mxu0 %v2845
          %3008 = vmatprep.subr.bf16.mxu0 0
          %3009 = vmatpush1.bf16.msra.mxu0 %v2846
          %3010 = vmatprep.subr.bf16.mxu0 0
          %3011 = vmatpush1.bf16.msra.mxu0 %v2847
          %3012 = vmatprep.subr.bf16.mxu0 0
          %3013 = vmatpush1.bf16.msra.mxu0 %v2848
          %3014 = vmatprep.subr.bf16.mxu0 0
          %3015 = vmatpush1.bf16.msra.mxu0 %v2849
          %3016 = vmatprep.subr.bf16.mxu0 0
          %3017 = vmatpush1.bf16.msra.mxu0 %v2850
          %3018 = vmatprep.subr.bf16.mxu0 0
          %3019 = vmatpush1.bf16.msra.mxu0 %v2851
          %3020 = vmatprep.mubr.bf16.mxu0 %v2424
          %3021 = vmatmul.mubr.bf16.gmra.mrb[0].mxu0 %v2423
          %v3022 = vpop.f32.mrb[0].mxu0
          %v3023 = vadd.f32 %v2983, %v3022
          %v3024 = vpop.f32.mrb[0].mxu0
          %v3025 = vpop.f32.mrb[0].mxu0
          %v3026 = vpop.f32.mrb[0].mxu0
          %3027 = vdwg.mxu0
          %3028 = vmatprep.subr.bf16.mxu0 0
          %3029 = vmatpush1.bf16.msra.mxu0 %v2852
          %3030 = vmatprep.subr.bf16.mxu0 0
          %3031 = vmatpush1.bf16.msra.mxu0 %v2853
          %3032 = vmatprep.subr.bf16.mxu0 0
          %3033 = vmatpush1.bf16.msra.mxu0 %v2854
          %3034 = vmatprep.subr.bf16.mxu0 0
          %3035 = vmatpush1.bf16.msra.mxu0 %v2855
          %3036 = vmatprep.subr.bf16.mxu0 0
          %3037 = vmatpush1.bf16.msra.mxu0 %v2856
          %3038 = vmatprep.subr.bf16.mxu0 0
          %3039 = vmatpush1.bf16.msra.mxu0 %v2857
          %3040 = vmatprep.subr.bf16.mxu0 0
          %3041 = vmatpush1.bf16.msra.mxu0 %v2858
          %3042 = vmatprep.subr.bf16.mxu0 0
          %3043 = vmatpush1.bf16.msra.mxu0 %v2859
          %3044 = vmatprep.subr.bf16.mxu0 0
          %3045 = vmatpush1.bf16.msra.mxu0 %v2860
          %3046 = vmatprep.subr.bf16.mxu0 0
          %3047 = vmatpush1.bf16.msra.mxu0 %v2861
          %3048 = vmatprep.subr.bf16.mxu0 0
          %3049 = vmatpush1.bf16.msra.mxu0 %v2862
          %3050 = vmatprep.subr.bf16.mxu0 0
          %3051 = vmatpush1.bf16.msra.mxu0 %v2863
          %3052 = vmatprep.subr.bf16.mxu0 0
          %3053 = vmatpush1.bf16.msra.mxu0 %v2864
          %3054 = vmatprep.subr.bf16.mxu0 0
          %3055 = vmatpush1.bf16.msra.mxu0 %v2865
          %3056 = vmatprep.subr.bf16.mxu0 0
          %3057 = vmatpush1.bf16.msra.mxu0 %v2866
          %3058 = vmatprep.subr.bf16.mxu0 0
          %3059 = vmatpush1.bf16.msra.mxu0 %v2867
          %3060 = vmatprep.mubr.bf16.mxu0 %v2426
          %3061 = vmatmul.mubr.bf16.gmra.mrb[0].mxu0 %v2425
          %v3062 = vpop.f32.mrb[0].mxu0
          %v3063 = vadd.f32 %v3023, %v3062
          %v3064 = vpop.f32.mrb[0].mxu0
          %v3065 = vpop.f32.mrb[0].mxu0
          %v3066 = vpop.f32.mrb[0].mxu0
          %3067 = vdwg.mxu0
          %3068 = vmatprep.subr.bf16.mxu0 0
          %3069 = vmatpush1.bf16.msra.mxu0 %v2868
          %3070 = vmatprep.subr.bf16.mxu0 0
          %3071 = vmatpush1.bf16.msra.mxu0 %v2869
          %3072 = vmatprep.subr.bf16.mxu0 0
          %3073 = vmatpush1.bf16.msra.mxu0 %v2870
          %3074 = vmatprep.subr.bf16.mxu0 0
          %3075 = vmatpush1.bf16.msra.mxu0 %v2871
          %3076 = vmatprep.subr.bf16.mxu0 0
          %3077 = vmatpush1.bf16.msra.mxu0 %v2872
          %3078 = vmatprep.subr.bf16.mxu0 0
          %3079 = vmatpush1.bf16.msra.mxu0 %v2873
          %3080 = vmatprep.subr.bf16.mxu0 0
          %3081 = vmatpush1.bf16.msra.mxu0 %v2874
          %3082 = vmatprep.subr.bf16.mxu0 0
          %3083 = vmatpush1.bf16.msra.mxu0 %v2875
          %3084 = vmatprep.subr.bf16.mxu0 0
          %3085 = vmatpush1.bf16.msra.mxu0 %v2876
          %3086 = vmatprep.subr.bf16.mxu0 0
          %3087 = vmatpush1.bf16.msra.mxu0 %v2877
          %3088 = vmatprep.subr.bf16.mxu0 0
          %3089 = vmatpush1.bf16.msra.mxu0 %v2878
          %3090 = vmatprep.subr.bf16.mxu0 0
          %3091 = vmatpush1.bf16.msra.mxu0 %v2879
          %3092 = vmatprep.subr.bf16.mxu0 0
          %3093 = vmatpush1.bf16.msra.mxu0 %v2880
          %3094 = vmatprep.subr.bf16.mxu0 0
          %3095 = vmatpush1.bf16.msra.mxu0 %v2881
          %3096 = vmatprep.subr.bf16.mxu0 0
          %3097 = vmatpush1.bf16.msra.mxu0 %v2882
          %3098 = vmatprep.subr.bf16.mxu0 0
          %3099 = vmatpush1.bf16.msra.mxu0 %v2883
          %3100 = vmatprep.mubr.bf16.mxu0 %v2428
          %3101 = vmatmul.mubr.bf16.gmra.mrb[0].mxu0 %v2427
          %v3102 = vpop.f32.mrb[0].mxu0
          %v3103 = vadd.f32 %v3063, %v3102
          %v3104 = vpop.f32.mrb[0].mxu0
          %v3105 = vpop.f32.mrb[0].mxu0
          %v3106 = vpop.f32.mrb[0].mxu0
          %3107 = vdwg.mxu0
          %v3108 = vld [vmem:[%s5] sm:$0x3]
          %v3109 = vld [vmem:[#allocation12] sm:$0x1]
          %3110 = vset.pattern.permute.xlu0 0
          %3111 = vperm.xlu0 %3110, %v3108
          %v3112 = vpop.permute.xlu0 %3111
          %v3113 = vlaneseq
          %v3114 = vshrl.u32 %v3113, 7
          %v3115 = vsub.s32 0, %v3114
          %v3116 = vrot.slane %v3109, %v3115
          %vm3117 = vcmp.eq.s32.totalorder %v3112, %v3116
          %v3118 = vsel %vm3117, 1, 0
          %v3119 = vcvt.s32.f32 %v3118
          %vm3120 = vcmask 25600
          %v3121 = vsel %vm3120, %v3119, 0.0
          %3122 = vadd.xlane.f32.xlu0 %v3121
          %v3123 = vpop.xlane.xlu0 %3122
          %v3124 = vmax.f32 %v3123, 1.0
          %vm3125 = vcmask 31744
          %v3127 = vsel %vm3125, %v3119, 0
          %vm3129 = vcmask 1043456
          %v3131 = vsel %vm3129, %v3103, 0
          %3133 = vmatprep.subr.mxu0 0.0
          %3134 = vmatpush1.msra.mxu0 %v3131
          %3135 = vmatprep.subr.mxu0 0.0
          %3136 = vmatpush1.msra.mxu0 0.0
          %3137 = vmatprep.subr.mxu0 0.0
          %3138 = vmatpush1.msra.mxu0 0.0
          %3139 = vmatprep.subr.mxu0 0.0
          %3140 = vmatpush1.msra.mxu0 0.0
          %3141 = vmatprep.subr.mxu0 0.0
          %3142 = vmatpush1.msra.mxu0 0.0
          %3143 = vmatprep.subr.mxu0 0.0
          %3144 = vmatpush1.msra.mxu0 0.0
          %3145 = vmatprep.subr.mxu0 0.0
          %3146 = vmatpush1.msra.mxu0 0.0
          %3147 = vmatprep.subr.mxu0 0.0
          %3148 = vmatpush1.msra.mxu0 0.0
          %3149 = vmatprep.subr.mxu0 0.0
          %3150 = vmatpush1.msra.mxu0 0.0
          %3151 = vmatprep.subr.mxu0 0.0
          %3152 = vmatpush1.msra.mxu0 0.0
          %3153 = vmatprep.subr.mxu0 0.0
          %3154 = vmatpush1.msra.mxu0 0.0
          %3155 = vmatprep.subr.mxu0 0.0
          %3156 = vmatpush1.msra.mxu0 0.0
          %3157 = vmatprep.subr.mxu0 0.0
          %3158 = vmatpush1.msra.mxu0 0.0
          %3159 = vmatprep.subr.mxu0 0.0
          %3160 = vmatpush1.msra.mxu0 0.0
          %3161 = vmatprep.subr.mxu0 0.0
          %3162 = vmatpush1.msra.mxu0 0.0
          %3163 = vmatprep.subr.mxu0 0.0
          %3164 = vmatpush1.msra.mxu0 0.0
          %3165 = vmatprep.subr.mxu0 0.0
          %3166 = vmatpush1.msra.mxu0 0.0
          %3167 = vmatprep.subr.mxu0 0.0
          %3168 = vmatpush1.msra.mxu0 0.0
          %3169 = vmatprep.subr.mxu0 0.0
          %3170 = vmatpush1.msra.mxu0 0.0
          %3171 = vmatprep.subr.mxu0 0.0
          %3172 = vmatpush1.msra.mxu0 0.0
          %3173 = vmatprep.subr.mxu0 0.0
          %3174 = vmatpush1.msra.mxu0 0.0
          %3175 = vmatprep.subr.mxu0 0.0
          %3176 = vmatpush1.msra.mxu0 0.0
          %3177 = vmatprep.subr.mxu0 0.0
          %3178 = vmatpush1.msra.mxu0 0.0
          %3179 = vmatprep.subr.mxu0 0.0
          %3180 = vmatpush1.msra.mxu0 0.0
          %3181 = vmatprep.subr.mxu0 0.0
          %3182 = vmatpush1.msra.mxu0 0.0
          %3183 = vmatprep.subr.mxu0 0.0
          %3184 = vmatpush1.msra.mxu0 0.0
          %3185 = vmatprep.subr.mxu0 0.0
          %3186 = vmatpush1.msra.mxu0 0.0
          %3187 = vmatprep.subr.mxu0 0.0
          %3188 = vmatpush1.msra.mxu0 0.0
          %3189 = vmatprep.subr.mxu0 0.0
          %3190 = vmatpush1.msra.mxu0 0.0
          %3191 = vmatprep.subr.mxu0 0.0
          %3192 = vmatpush1.msra.mxu0 0.0
          %3193 = vmatprep.subr.mxu0 0.0
          %3194 = vmatpush1.msra.mxu0 0.0
          %3195 = vmatprep.subr.mxu0 0.0
          %3196 = vmatpush1.msra.mxu0 0.0
          %3197 = vmatprep.mubr.f32.mxu0 0.0
          %3198 = vmatmul.mubr.f32.gmra.mrb[0].mxu0 %v3127
          %v3199 = vpop.f32.mrb[0].mxu0
          %v3200 = vadd.f32 0.0, %v3199
          %v3201 = vpop.f32.mrb[0].mxu0
          %3202 = vdwg.mxu0
          %v3203 = vrcp.pop %v3124
          %v3204 = vmul.f32 %v3200, %v3203
          %v3205 = vrot.slane %v3103, 4
          %3207 = vmatprep.subr.mxu0 0.0
          %3208 = vmatpush1.xpose.msra.mxu0 %v3204
          %3209 = vmatprep.subr.mxu0 0.0
          %3210 = vmatpush1.xpose.msra.mxu0 0.0
          %3211 = vmatprep.subr.mxu0 0.0
          %3212 = vmatpush1.xpose.msra.mxu0 0.0
          %3213 = vmatprep.subr.mxu0 0.0
          %3214 = vmatpush1.xpose.msra.mxu0 0.0
          %3215 = vmatprep.subr.mxu0 0.0
          %3216 = vmatpush1.xpose.msra.mxu0 0.0
          %3217 = vmatprep.subr.mxu0 0.0
          %3218 = vmatpush1.xpose.msra.mxu0 0.0
          %3219 = vmatprep.subr.mxu0 0.0
          %3220 = vmatpush1.xpose.msra.mxu0 0.0
          %3221 = vmatprep.subr.mxu0 0.0
          %3222 = vmatpush1.xpose.msra.mxu0 0.0
          %3223 = vmatprep.subr.mxu0 0.0
          %3224 = vmatpush1.xpose.msra.mxu0 0.0
          %3225 = vmatprep.subr.mxu0 0.0
          %3226 = vmatpush1.xpose.msra.mxu0 0.0
          %3227 = vmatprep.subr.mxu0 0.0
          %3228 = vmatpush1.xpose.msra.mxu0 0.0
          %3229 = vmatprep.subr.mxu0 0.0
          %3230 = vmatpush1.xpose.msra.mxu0 0.0
          %3231 = vmatprep.subr.mxu0 0.0
          %3232 = vmatpush1.xpose.msra.mxu0 0.0
          %3233 = vmatprep.subr.mxu0 0.0
          %3234 = vmatpush1.xpose.msra.mxu0 0.0
          %3235 = vmatprep.subr.mxu0 0.0
          %3236 = vmatpush1.xpose.msra.mxu0 0.0
          %3237 = vmatprep.subr.mxu0 0.0
          %3238 = vmatpush1.xpose.msra.mxu0 0.0
          %3239 = vmatprep.subr.mxu0 0.0
          %3240 = vmatpush1.xpose.msra.mxu0 0.0
          %3241 = vmatprep.subr.mxu0 0.0
          %3242 = vmatpush1.xpose.msra.mxu0 0.0
          %3243 = vmatprep.subr.mxu0 0.0
          %3244 = vmatpush1.xpose.msra.mxu0 0.0
          %3245 = vmatprep.subr.mxu0 0.0
          %3246 = vmatpush1.xpose.msra.mxu0 0.0
          %3247 = vmatprep.subr.mxu0 0.0
          %3248 = vmatpush1.xpose.msra.mxu0 0.0
          %3249 = vmatprep.subr.mxu0 0.0
          %3250 = vmatpush1.xpose.msra.mxu0 0.0
          %3251 = vmatprep.subr.mxu0 0.0
          %3252 = vmatpush1.xpose.msra.mxu0 0.0
          %3253 = vmatprep.subr.mxu0 0.0
          %3254 = vmatpush1.xpose.msra.mxu0 0.0
          %3255 = vmatprep.subr.mxu0 0.0
          %3256 = vmatpush1.xpose.msra.mxu0 0.0
          %3257 = vmatprep.subr.mxu0 0.0
          %3258 = vmatpush1.xpose.msra.mxu0 0.0
          %3259 = vmatprep.subr.mxu0 0.0
          %3260 = vmatpush1.xpose.msra.mxu0 0.0
          %3261 = vmatprep.subr.mxu0 0.0
          %3262 = vmatpush1.xpose.msra.mxu0 0.0
          %3263 = vmatprep.subr.mxu0 0.0
          %3264 = vmatpush1.xpose.msra.mxu0 0.0
          %3265 = vmatprep.subr.mxu0 0.0
          %3266 = vmatpush1.xpose.msra.mxu0 0.0
          %3267 = vmatprep.subr.mxu0 0.0
          %3268 = vmatpush1.xpose.msra.mxu0 0.0
          %3269 = vmatprep.subr.mxu0 0.0
          %3270 = vmatpush1.xpose.msra.mxu0 0.0
          %3271 = vmatprep.mubr.f32.mxu0 0.0
          %3272 = vmatmul.mubr.f32.gmra.mrb[0].mxu0 %v3205
          %v3273 = vpop.f32.mrb[0].mxu0
          %v3274 = vadd.f32 0.0, %v3273
          %v3275 = vpop.f32.mrb[0].mxu0
          %3276 = vdwg.mxu0
          %v3277 = vmul.f32 %v3103, %v3103
          %vm3278 = vcmask 1047556
          %v3279 = vsel %vm3278, %v3277, 0.0
          %3280 = vadd.xlane.f32.xlu0 %v3279
          %v3281 = vpop.xlane.xlu0 %3280
          %v3282 = vmul.f32 %v3204, %v3204
          %3283 = vmatprep.subr.mxu0 0.0
          %3284 = vmatpush1.xpose.msra.mxu0 %v3282
          %3285 = vmatprep.subr.mxu0 0.0
          %3286 = vmatpush1.xpose.msra.mxu0 0.0
          %3287 = vmatprep.subr.mxu0 0.0
          %3288 = vmatpush1.xpose.msra.mxu0 0.0
          %3289 = vmatprep.subr.mxu0 0.0
          %3290 = vmatpush1.xpose.msra.mxu0 0.0
          %3291 = vmatprep.subr.mxu0 0.0
          %3292 = vmatpush1.xpose.msra.mxu0 0.0
          %3293 = vmatprep.subr.mxu0 0.0
          %3294 = vmatpush1.xpose.msra.mxu0 0.0
          %3295 = vmatprep.subr.mxu0 0.0
          %3296 = vmatpush1.xpose.msra.mxu0 0.0
          %3297 = vmatprep.subr.mxu0 0.0
          %3298 = vmatpush1.xpose.msra.mxu0 0.0
          %3299 = vmatprep.subr.mxu0 0.0
          %3300 = vmatpush1.xpose.msra.mxu0 0.0
          %3301 = vmatprep.subr.mxu0 0.0
          %3302 = vmatpush1.xpose.msra.mxu0 0.0
          %3303 = vmatprep.subr.mxu0 0.0
          %3304 = vmatpush1.xpose.msra.mxu0 0.0
          %3305 = vmatprep.subr.mxu0 0.0
          %3306 = vmatpush1.xpose.msra.mxu0 0.0
          %3307 = vmatprep.subr.mxu0 0.0
          %3308 = vmatpush1.xpose.msra.mxu0 0.0
          %3309 = vmatprep.subr.mxu0 0.0
          %3310 = vmatpush1.xpose.msra.mxu0 0.0
          %3311 = vmatprep.subr.mxu0 0.0
          %3312 = vmatpush1.xpose.msra.mxu0 0.0
          %3313 = vmatprep.subr.mxu0 0.0
          %3314 = vmatpush1.xpose.msra.mxu0 0.0
          %3315 = vmatprep.subr.mxu0 0.0
          %3316 = vmatpush1.xpose.msra.mxu0 0.0
          %3317 = vmatprep.subr.mxu0 0.0
          %3318 = vmatpush1.xpose.msra.mxu0 0.0
          %3319 = vmatprep.subr.mxu0 0.0
          %3320 = vmatpush1.xpose.msra.mxu0 0.0
          %3321 = vmatprep.subr.mxu0 0.0
          %3322 = vmatpush1.xpose.msra.mxu0 0.0
          %3323 = vmatprep.subr.mxu0 0.0
          %3324 = vmatpush1.xpose.msra.mxu0 0.0
          %3325 = vmatprep.subr.mxu0 0.0
          %3326 = vmatpush1.xpose.msra.mxu0 0.0
          %3327 = vmatprep.subr.mxu0 0.0
          %3328 = vmatpush1.xpose.msra.mxu0 0.0
          %3329 = vmatprep.subr.mxu0 0.0
          %3330 = vmatpush1.xpose.msra.mxu0 0.0
          %3331 = vmatprep.subr.mxu0 0.0
          %3332 = vmatpush1.xpose.msra.mxu0 0.0
          %3333 = vmatprep.subr.mxu0 0.0
          %3334 = vmatpush1.xpose.msra.mxu0 0.0
          %3335 = vmatprep.subr.mxu0 0.0
          %3336 = vmatpush1.xpose.msra.mxu0 0.0
          %3337 = vmatprep.subr.mxu0 0.0
          %3338 = vmatpush1.xpose.msra.mxu0 0.0
          %3339 = vmatprep.subr.mxu0 0.0
          %3340 = vmatpush1.xpose.msra.mxu0 0.0
          %3341 = vmatprep.subr.mxu0 0.0
          %3342 = vmatpush1.xpose.msra.mxu0 0.0
          %3343 = vmatprep.subr.mxu0 0.0
          %3344 = vmatpush1.xpose.msra.mxu0 0.0
          %3345 = vmatprep.subr.mxu0 0.0
          %3346 = vmatpush1.xpose.msra.mxu0 0.0
          %3347 = vmatprep.mubr.f32.mxu0 0.0
          %3348 = vmatmul.mubr.f32.gmra.mrb[0].mxu0 1.0
          %v3349 = vpop.f32.mrb[0].mxu0
          %v3350 = vadd.f32 0.0, %v3349
          %v3351 = vpop.f32.mrb[0].mxu0
          %3352 = vdwg.mxu0
          %v3353 = vlaneseq
          %v3354 = vshrl.u32 %v3353, 7
          %v3355 = vsub.s32 0, %v3354
          %v3356 = vrot.slane %v3350, %v3355
          %v3357 = vadd.f32 %v3281, %v3356
          %v3358 = vmul.f32 %v3274, 2.0
          %v3360 = vrot.slane %v3358, 4
          %v3362 = vsub.f32 %v3357, %v3360
          %v3363 = vsub.f32 0.0, %v3362
          %vm3364 = vcmask 15364
          %v3365 = vsel %vm3364, %v3363, -inf
          %3366 = vmax.xlane.f32.xlu0 %v3365
          %v3367 = vpop.xlane.xlu0 %3366
          %v3368 = vsub.f32 %v3363, %v3367
          %v3369 = vmul.f32 %v3368, 1.442695
          %v3370 = vpow.pop %v3369
          %v3371 = vsel %vm3364, %v3370, 0.0
          %3372 = vadd.xlane.f32.xlu0 %v3371
          %v3373 = vpop.xlane.xlu0 %3372
          %v3374 = vlog2.pop %v3373
          %v3375 = vmul.f32 %v3374, 0.6931472
          %v3376 = vadd.f32 %v3367, %v3375
          %v3377 = vsub.f32 %v3363, %v3376
          %3378 = vst.msk [vmem:[%s8 - $0x4] sm:$0xf0] %vm3364, %v3377
          %v3379 = vld [vmem:[%s5] sm:$0x3]
          %v3380 = vld [vmem:[#allocation14] sm:$0x1]
          %3381 = vset.pattern.permute.xlu0 0
          %3382 = vperm.xlu0 %3381, %v3379
          %v3383 = vpop.permute.xlu0 %3382
          %v3384 = vlaneseq
          %v3385 = vshrl.u32 %v3384, 7
          %v3386 = vsub.s32 0, %v3385
          %v3387 = vrot.slane %v3380, %v3386
          %vm3388 = vcmp.eq.s32.totalorder %v3383, %v3387
          %v3389 = vlaneseq
          %v3390 = vshrl.u32 %v3389, 7
          %v3391 = vsel %vm3388, %v3390, 0
          %v3392 = vsel %vm3120, %v3391, 0
          %v3393 = vrot.slane %v3392, 4
          %v3394 = vadd.s32 %v3392, %v3393
          %v3395 = vrot.slane %v3394, 2
          %v3396 = vadd.s32 %v3394, %v3395
          %v3397 = vrot.slane %v3396, 1
          %v3398 = vadd.s32 %v3396, %v3397
          %vm3399 = vcmask 24576
          %3400 = vst.msk [vmem:[#allocation15] sm:$0x1] %vm3399, %v3398
        $region88: #{tpu_custom_call.1} parent=51 // pred_fallthru
          _
        // Predicated region
        $region89: #{tpu_custom_call.1} parent=51 // pred_check
          %p3401 = pneg %p221
        $region90: #{tpu_custom_call.1} parent=51 // pred_check_branch
          %3403 = sbr.rel (%p3401) target = $region92
        $region91: #{tpu_custom_call.1} parent=51 // pred_region
          _
        $region92: #{tpu_custom_call.1} parent=51 // pred_fallthru
          _
        // Predicated region
        $region93: #{tpu_custom_call.1} parent=51 // pred_check
          %p3404 = pneg %p242
        $region94: #{tpu_custom_call.1} parent=51 // pred_check_branch
          %3406 = sbr.rel (%p3404) target = $region96
        $region95: #{tpu_custom_call.1} parent=51 // pred_region
          %s3408 = ssub.s32 16, 16
          %3409 = vsyncadd [#allocation5], %s3408
          %s3411 = sshll.u32 [#allocation15], 4
          %s3412 = int_to_ptr.vmem [resolvable:$true] %s3411
          %3414 = dma.vmem_to_hbm [thread:$0]  %s3412, 16, %s9, [#allocation5]
        $region96: #{tpu_custom_call.1} parent=51 // pred_fallthru
          _
        // Predicated region
        $region97: #{tpu_custom_call.1} parent=51 // pred_check
          %p3415 = pneg %p221
        $region98: #{tpu_custom_call.1} parent=51 // pred_check_branch
          %3417 = sbr.rel (%p3415) target = $region100
        $region99: #{tpu_custom_call.1} parent=51 // pred_region
          _
        $region100: #{tpu_custom_call.1} parent=51 // pred_fallthru
          _
        // Predicated region
        $region101: #{tpu_custom_call.1} parent=51 // pred_check
          %p3418 = pneg %p242
        $region102: #{tpu_custom_call.1} parent=51 // pred_check_branch
          %3420 = sbr.rel (%p3418) target = $region104
        $region103: #{tpu_custom_call.1} parent=51 // pred_region
          %3421 = dma.done [#allocation5], 16
        $region104: #{tpu_custom_call.1} parent=51 // pred_fallthru
          _
      $region52: #{tpu_custom_call.1} parent=5 // pred_fallthru
        _
      %p3422 = scmp.le.s32.totalorder 2, %s25
      // Predicated region
      $region105: #{tpu_custom_call.1} parent=5 // pred_check
        %p3423 = pneg %p3422
      $region106: #{tpu_custom_call.1} parent=5 // pred_check_branch
        %3425 = sbr.rel (%p3423) target = $region108
      $region107: #{tpu_custom_call.1} parent=5 // pred_region
        %s3426 = ssub.s32 %s25, 2
      $region108: #{tpu_custom_call.1} parent=5 // pred_fallthru
        _
    $region6: #{tpu_custom_call.1} parent=1 // loop_footer
      %s29 = sadd.s32 1, %s25
    $region7: #{tpu_custom_call.1} parent=1 // loop_footer_branch
      %24 = sbr.rel target = $region3
    $region8: #{tpu_custom_call.1} parent=1 // loop_exit
      _
    %3427 = vsyncpa [#allocation4], 1
    %s3428 = scalar_lea.sflag [#allocation4], 1
    %3429 = vsyncpa %s3428, 1
    %3430 = vsyncpa [#allocation7], 1
    %s3431 = scalar_lea.sflag [#allocation7], 1
    %3432 = vsyncpa %s3431, 1
    %3433 = vsyncpa [#allocation10], 1
    %3434 = vsyncpa [#allocation13], 1
    %3435 = vsyncpa [#allocation5], 1
    %s3436 = scalar_lea.sflag [#allocation5], 1
    %3437 = vsyncpa %s3436, 1

</llo_original>
